<compile_context>
chip_gen: v7x
topology: tpu7x:2x2x1
jax: 0.10.0
libtpu: 0.0.40
codegen_flags: <defaults>
</compile_context>

<pallas_src>
import functools
from itertools import accumulate

import jax
import jax.numpy as jnp
from jax.experimental import pallas as pl
from jax.experimental.pallas import tpu as pltpu


# ----------------------------------------------------------------------------
# Pallas kernel: y_tile = relu?(x @ W[:, tile] + b[tile])   (whole-K per step)
# ----------------------------------------------------------------------------
def _linear_kernel(x_ref, w_ref, b_ref, o_ref, *, apply_relu):
    acc = jnp.dot(x_ref[...], w_ref[...], preferred_element_type=jnp.float32)
    acc = acc + b_ref[...].astype(jnp.float32)
    if apply_relu:
        acc = jnp.maximum(acc, 0.0)
    o_ref[...] = acc.astype(o_ref.dtype)


def pallas_linear(x, w, b, *, apply_relu, out_dtype=None, tn=512):
    """y = relu?(x @ w + b) with x:(M,K), w:(K,N), b:(N,).

    M must be a multiple of 8 (caller pads).  K is taken whole per grid step;
    the grid is 1-D over N tiles of width tn (lane-dense, multiple of 128).
    """
    M, K = x.shape
    K2, N = w.shape
    assert K == K2 and b.shape == (N,)
    assert M % 8 == 0, "caller must pad token count to a multiple of 8"
    if out_dtype is None:
        out_dtype = x.dtype

    # tn must divide N and stay a multiple of 128 (lane tiling).
    while N % tn != 0:
        tn //= 2
    tn = max(tn, 128)

    b2 = b.reshape(1, N).astype(jnp.float32)

    bytes_accessed = (
        x.size * x.dtype.itemsize
        + w.size * w.dtype.itemsize
        + b2.size * 4
        + M * N * jnp.dtype(out_dtype).itemsize
    )

    kernel = functools.partial(_linear_kernel, apply_relu=apply_relu)
    return pl.pallas_call(
        kernel,
        out_shape=jax.ShapeDtypeStruct((M, N), out_dtype),
        grid_spec=pltpu.PrefetchScalarGridSpec(
            num_scalar_prefetch=0,
            grid=(N // tn,),
            in_specs=[
                pl.BlockSpec((M, K), lambda j: (0, 0)),    # x: resident, whole K
                pl.BlockSpec((K, tn), lambda j: (0, j)),   # W: streamed N tiles
                pl.BlockSpec((1, tn), lambda j: (0, j)),   # bias tile
            ],
            out_specs=pl.BlockSpec((M, tn), lambda j: (0, j)),
        ),
        compiler_params=pltpu.CompilerParams(
            dimension_semantics=("parallel",),
            # ~10.5 MiB actually needed with tn=512 bf16; 32 MiB is safe on
            # v5e/v6e (128 MiB physical) and v7x (64 MiB physical).
            vmem_limit_bytes=32 * 1024 * 1024,
        ),
        cost_estimate=pl.CostEstimate(
            flops=2 * M * K * N,
            transcendentals=0,
            bytes_accessed=bytes_accessed,
        ),
    )(x, w, b2)


# ----------------------------------------------------------------------------
# UniTower wrapper (parameters initialized deterministically in-script)
# ----------------------------------------------------------------------------
class UniTowerPallas:
    IN_DIM = 2816
    HID_DIM = 5120
    OUT_DIM = 1024  # == hidden_size property of the PyTorch module

    def __init__(self, key, param_dtype=jnp.bfloat16):
        dims = [(self.IN_DIM, self.HID_DIM),
                (self.HID_DIM, self.HID_DIM),
                (self.HID_DIM, self.OUT_DIM)]
        self.params = []
        for fan_in, fan_out in dims:
            key, kw, kb = jax.random.split(key, 3)
            # kaiming_uniform_(a=0, mode='fan_in', nonlinearity='relu'):
            #   bound = sqrt(2) * sqrt(3 / fan_in) = sqrt(6 / fan_in)
            w_bound = (6.0 / fan_in) ** 0.5
            # nn.Linear default bias init: U(-1/sqrt(fan_in), 1/sqrt(fan_in))
            b_bound = 1.0 / (fan_in ** 0.5)
            # stored as (in, out) == W_torch.T, streamed as bf16 (BW-bound)
            w = jax.random.uniform(kw, (fan_in, fan_out), jnp.float32,
                                   minval=-w_bound, maxval=w_bound)
            b = jax.random.uniform(kb, (fan_out,), jnp.float32,
                                   minval=-b_bound, maxval=b_bound)
            self.params.append((w.astype(param_dtype), b))

    def video_tower(self, videos):
        x = jnp.asarray(videos)
        m = x.shape[0]
        m_pad = -(-m // 8) * 8          # pad tokens to a multiple of 8 (sublanes)
        if m_pad != m:
            x = jnp.pad(x, ((0, m_pad - m), (0, 0)))
        x = x.astype(jnp.bfloat16)

        (w0, b0), (w1, b1), (w2, b2) = self.params
        h = pallas_linear(x, w0, b0, apply_relu=True, out_dtype=jnp.bfloat16)
        h = pallas_linear(h, w1, b1, apply_relu=True, out_dtype=jnp.bfloat16)
        out = pallas_linear(h, w2, b2, apply_relu=False, out_dtype=jnp.float32)
        return out[:m]

    def forward(self, data, mode):
        if mode == "video":
            if isinstance(data, list):
                # Batch all videos into ONE pass so the ~92 MB bf16 weight
                # stream is read from HBM once, not once per video.
                lens = [int(v.shape[0]) for v in data]
                batched = jnp.concatenate([jnp.asarray(v) for v in data], axis=0)
                out = self.video_tower(batched)
                offsets = list(accumulate(lens))[:-1]
                return jnp.split(out, offsets, axis=0) if offsets else [out]
            return self.video_tower(data)
        elif mode == "image":
            # TODO(synk): 'image' mode requires a pretrained CLIPVisionModel
            # checkpoint (image_tower); no synthetic Pallas equivalent.
            raise NotImplementedError("image mode needs pretrained CLIP weights")
        elif mode == "ptcd":
            return 0

    @property
    def hidden_size(self):
        return self.OUT_DIM


# ----------------------------------------------------------------------------
# Reference (pure jnp, mirrors the kernel's dtype path) for validation
# ----------------------------------------------------------------------------
def _reference_video_tower(tower, videos):
    (w0, b0), (w1, b1), (w2, b2) = tower.params
    x = jnp.asarray(videos).astype(jnp.bfloat16)
    h = jnp.maximum(
        jnp.dot(x, w0, preferred_element_type=jnp.float32) + b0, 0.0
    ).astype(jnp.bfloat16)
    h = jnp.maximum(
        jnp.dot(h, w1, preferred_element_type=jnp.float32) + b1, 0.0
    ).astype(jnp.bfloat16)
    return jnp.dot(h, w2, preferred_element_type=jnp.float32) + b2


if __name__ == "__main__":
    key = jax.random.PRNGKey(0)
    k_param, k_d0, k_d1 = jax.random.split(key, 3)

    tower = UniTowerPallas(k_param)

    # small batches of video tokens; feature dim fixed by the module (2816)
    v0 = jax.random.normal(k_d0, (16, UniTowerPallas.IN_DIM), dtype=jnp.float32)
    v1 = jax.random.normal(k_d1, (12, UniTowerPallas.IN_DIM), dtype=jnp.float32)

    # single-array path
    out0 = jax.block_until_ready(tower.forward(v0, mode="video"))
    assert out0.shape == (16, tower.hidden_size), out0.shape
    ref0 = _reference_video_tower(tower, v0)
    err0 = float(jnp.max(jnp.abs(out0 - ref0)))
    assert jnp.allclose(out0, ref0, atol=2e-2, rtol=2e-2), err0

    # list path (batched internally, also exercises M padding: 16+12 -> pad 32)
    outs = tower.forward([v0, v1], mode="video")
    outs = jax.block_until_ready(outs)
    assert len(outs) == 2
    assert outs[0].shape == (16, tower.hidden_size)
    assert outs[1].shape == (12, tower.hidden_size)
    ref1 = _reference_video_tower(tower, v1)
    err_list = max(float(jnp.max(jnp.abs(outs[0] - ref0))),
                   float(jnp.max(jnp.abs(outs[1] - ref1))))
    assert jnp.allclose(outs[0], ref0, atol=2e-2, rtol=2e-2), err_list
    assert jnp.allclose(outs[1], ref1, atol=2e-2, rtol=2e-2), err_list

    # 'ptcd' mode
    assert tower.forward(v0, mode="ptcd") == 0

    print("KERNEL_OK")
</pallas_src>

<mosaic_0001>
module attributes {stable_mosaic.version = 11 : i64} {
  func.func @_linear_kernel(%arg0: i32, %arg1: memref<16x2816xbf16, #tpu.memory_space<vmem>>, %arg2: memref<2816x512xbf16, #tpu.memory_space<vmem>>, %arg3: memref<1x512xf32, #tpu.memory_space<vmem>>, %arg4: memref<16x512xbf16, #tpu.memory_space<vmem>>) attributes {dimension_semantics = [#tpu.dimension_semantics<parallel>], iteration_bounds = array<i64: 10>, scalar_prefetch = 0 : i64, scratch_operands = 0 : i64, tpu.core_type = #tpu.core_type<tc>, window_params = [{pipeline_mode = #tpu.pipeline_mode<synchronous>, transform_indices = @transform_0, window_bounds = array<i64: 16, 2816>}, {transform_indices = @transform_1, window_bounds = array<i64: 2816, 512>}, {transform_indices = @transform_2, window_bounds = array<i64: 1, 512>}, {transform_indices = @transform_3, window_bounds = array<i64: 16, 512>}]} {
    %c0 = arith.constant 0 : index
    %c0_0 = arith.constant 0 : index
    %0 = vector.load %arg1[%c0, %c0_0] : memref<16x2816xbf16, #tpu.memory_space<vmem>>, vector<16x2816xbf16>
    %c0_1 = arith.constant 0 : index
    %c0_2 = arith.constant 0 : index
    %1 = vector.load %arg2[%c0_1, %c0_2] : memref<2816x512xbf16, #tpu.memory_space<vmem>>, vector<2816x512xbf16>
    %cst = arith.constant dense<0.000000e+00> : vector<16x512xf32>
    %2 = tpu.matmul %0, %1, %cst {dimension_numbers = #tpu.dot_dimension_numbers<[1], [0], [0], [1], [0, 0, 1, 1], [], []>} : vector<16x2816xbf16>, vector<2816x512xbf16>, vector<16x512xf32> -> vector<16x512xf32>
    %c0_3 = arith.constant 0 : index
    %c0_4 = arith.constant 0 : index
    %3 = vector.load %arg3[%c0_3, %c0_4] : memref<1x512xf32, #tpu.memory_space<vmem>>, vector<1x512xf32>
    %4 = vector.broadcast %3 : vector<1x512xf32> to vector<16x512xf32>
    %5 = arith.addf %2, %4 : vector<16x512xf32>
    %cst_5 = arith.constant 0.000000e+00 : f32
    %6 = vector.broadcast %cst_5 : f32 to vector<16x512xf32>
    %7 = arith.maximumf %5, %6 : vector<16x512xf32>
    %8 = arith.truncf %7 : vector<16x512xf32> to vector<16x512xbf16>
    %c0_6 = arith.constant 0 : index
    %c0_7 = arith.constant 0 : index
    %9 = vector.load %arg4[%c0_6, %c0_7] : memref<16x512xbf16, #tpu.memory_space<vmem>>, vector<16x512xbf16>
    tpu.vector_store %arg4[%c0_6, %c0_7], %8 {strides = array<i32>} : memref<16x512xbf16, #tpu.memory_space<vmem>>, vector<16x512xbf16>,
    return
  }
  func.func @transform_0(%arg0: i32) -> (i32, i32) {
    %c0_i32 = arith.constant 0 : i32
    %c0_i32_0 = arith.constant 0 : i32
    %c0_i32_1 = arith.constant 0 : i32
    return %c0_i32, %c0_i32_0 : i32, i32
  }
  func.func @transform_1(%arg0: i32) -> (i32, i32) {
    %c0_i32 = arith.constant 0 : i32
    %c0_i32_0 = arith.constant 0 : i32
    return %c0_i32, %arg0 : i32, i32
  }
  func.func @transform_2(%arg0: i32) -> (i32, i32) {
    %c0_i32 = arith.constant 0 : i32
    %c0_i32_0 = arith.constant 0 : i32
    return %c0_i32, %arg0 : i32, i32
  }
  func.func @transform_3(%arg0: i32) -> (i32, i32) {
    %c0_i32 = arith.constant 0 : i32
    %c0_i32_0 = arith.constant 0 : i32
    return %c0_i32, %arg0 : i32, i32
  }
}

</mosaic_0001>

<llo_original>
// kernel: tpu_custom_call.1
$region0: #{tpu_custom_call.1}
  #allocation0 [shape = 'u32[]', space=smem, size = 0x4, offset = 0x4, fixed_abs, tag = 'smem constant byte address 0x4 - core index']
  #allocation1 [shape = 'u32[144,128]{1,0:T(1,128)}', space=vmem, size = 0x12000, scoped, tag = 'internal scratch']
  %s0 = inlined_call_operand.hbm [shape: bf16[16,2816], index: 0, kind: input, shape index: {}]
  %s1 = inlined_call_operand.hbm [shape: bf16[2816,5120], index: 1, kind: input, shape index: {}]
  %s2 = inlined_call_operand.hbm [shape: f32[1,5120], index: 2, kind: input, shape index: {}]
  %s3 = inlined_call_operand.hbm [shape: bf16[16,5120], index: 3, kind: output, shape index: {}]
  %s4 = sld [smem:[#allocation0]]
  $region57: #{tpu_custom_call.1} parent=0
    _
  %s6 = ssub.s32 1, %s4
  %s7 = scalar_select 0, %s6, %s4
  $region1: #{tpu_custom_call.1} parent=0
    #allocation2 [shape = 'u8[90112]{0}', space=vmem, size = 0x16000, scoped, tag = 'input window, operand 0, single buffered']
    #allocation3 [shape = 's32[2]{0}', space=sflag, size = 0x8, scoped, tag = 'scoped memory for tpu_custom_call.1']
    #allocation4 [shape = 's32[2]{0}', space=sflag, size = 0x8, scoped, tag = 'scoped memory for tpu_custom_call.1']
    #allocation5 [shape = 'u8[5767168]{0}', space=vmem, size = 0x580000, scoped, tag = 'input window, operand 1']
    #allocation6 [shape = 's32[2]{0}', space=sflag, size = 0x8, scoped, tag = 'scoped memory for tpu_custom_call.1']
    #allocation7 [shape = 'u8[4096]{0}', space=vmem, size = 0x1000, scoped, tag = 'input window, operand 2']
    #allocation8 [shape = 'u8[32768]{0}', space=vmem, size = 0x8000, scoped, tag = 'output window, operand 0']
    %8 = vsyncpa [#allocation3], 0
    %9 = vsyncpa [#allocation6], 0
    %s10 = scalar_lea.sflag [#allocation6], 1
    %11 = vsyncpa %s10, 0
    %12 = vsyncpa [#allocation4], 0
    %s13 = scalar_lea.sflag [#allocation4], 1
    %14 = vsyncpa %s13, 0
    loop: start=0, step=1, limit=12
    $region2: #{tpu_custom_call.1} parent=1 // loop_pre_header
      _
    $region3: #{tpu_custom_call.1} parent=1 // loop_header
      %s16 = sphi 0, %s20
      %p17 = scmp.ge.s32.totalorder %s16, 12
      %s24 = sphi 0, %s24
      %s26 = sphi 0, %s24
      %s27 = sphi 0, %s26
      %s41 = sphi 0, %s27
      %s47 = sphi 0, %s49
      %s50 = sphi 0, %s47
      %s51 = sphi 0, %s50
      %s67 = sphi 0, %s51
      %s73 = sphi 0, %s75
      %s76 = sphi 0, %s73
      %s77 = sphi 0, %s76
      %s93 = sphi 0, %s77
      %s99 = sphi 0, %s101
      %s102 = sphi 0, %s99
      %s103 = sphi 0, %s102
      %s119 = sphi 0, %s103
    $region4: #{tpu_custom_call.1} parent=1 // loop_header_branch
      %19 = sbr.rel (%p17) target = $region8
    $region5: #{tpu_custom_call.1} parent=1 // loop_body
      %s21 = ssub.s32 %s16, 1
      %s22 = ssub.s32 %s16, 2
      %s23 = sadd.s32 %s16, 1
      %s25 = sadd.s32 %s24, 1
      %p28 = scmp.eq.s32.totalorder %s16, 9
      %p29 = scmp.ne.s32.totalorder %s24, %s26
      %p30 = scmp.eq.s32.totalorder %s16, 0
      %p31 = por %p29, %p30
      %p32 = scmp.ne.s32.totalorder %s24, %s26
      %p33 = scmp.eq.s32.totalorder %s21, 9
      %p34 = por %p32, %p33
      %p35 = scmp.ne.s32.totalorder %s26, %s27
      %p36 = scmp.eq.s32.totalorder %s21, 0
      %p37 = por %p35, %p36
      %p38 = scmp.ne.s32.totalorder %s26, %s27
      %p39 = scmp.eq.s32.totalorder %s22, 9
      %p40 = por %p38, %p39
      %p42 = scmp.ne.s32.totalorder %s27, %s41
      %p43 = scmp.eq.s32.totalorder %s22, 0
      %p44 = por %p42, %p43
      %s45 = ssub.s32 %s16, %s23
      %p46 = scmp.eq.s32.totalorder %s45, 0
      %s48 = sadd.s32 %s47, 1
      %s49 = scalar_select %p46, %s47, %s48
      %p52 = pneg %p46
      %p53 = scmp.eq.s32.totalorder %s16, 9
      %p54 = por %p52, %p53
      %p55 = scmp.ne.s32.totalorder %s47, %s50
      %p56 = scmp.eq.s32.totalorder %s16, 0
      %p57 = por %p55, %p56
      %p58 = scmp.ne.s32.totalorder %s47, %s50
      %p59 = scmp.eq.s32.totalorder %s21, 9
      %p60 = por %p58, %p59
      %p61 = scmp.ne.s32.totalorder %s50, %s51
      %p62 = scmp.eq.s32.totalorder %s21, 0
      %p63 = por %p61, %p62
      %p64 = scmp.ne.s32.totalorder %s50, %s51
      %p65 = scmp.eq.s32.totalorder %s22, 9
      %p66 = por %p64, %p65
      %p68 = scmp.ne.s32.totalorder %s51, %s67
      %p69 = scmp.eq.s32.totalorder %s22, 0
      %p70 = por %p68, %p69
      %s71 = ssub.s32 %s16, %s23
      %p72 = scmp.eq.s32.totalorder %s71, 0
      %s74 = sadd.s32 %s73, 1
      %s75 = scalar_select %p72, %s73, %s74
      %p78 = pneg %p72
      %p79 = scmp.eq.s32.totalorder %s16, 9
      %p80 = por %p78, %p79
      %p81 = scmp.ne.s32.totalorder %s73, %s76
      %p82 = scmp.eq.s32.totalorder %s16, 0
      %p83 = por %p81, %p82
      %p84 = scmp.ne.s32.totalorder %s73, %s76
      %p85 = scmp.eq.s32.totalorder %s21, 9
      %p86 = por %p84, %p85
      %p87 = scmp.ne.s32.totalorder %s76, %s77
      %p88 = scmp.eq.s32.totalorder %s21, 0
      %p89 = por %p87, %p88
      %p90 = scmp.ne.s32.totalorder %s76, %s77
      %p91 = scmp.eq.s32.totalorder %s22, 9
      %p92 = por %p90, %p91
      %p94 = scmp.ne.s32.totalorder %s77, %s93
      %p95 = scmp.eq.s32.totalorder %s22, 0
      %p96 = por %p94, %p95
      %s97 = ssub.s32 %s16, %s23
      %p98 = scmp.eq.s32.totalorder %s97, 0
      %s100 = sadd.s32 %s99, 1
      %s101 = scalar_select %p98, %s99, %s100
      %p104 = pneg %p98
      %p105 = scmp.eq.s32.totalorder %s16, 9
      %p106 = por %p104, %p105
      %p107 = scmp.ne.s32.totalorder %s99, %s102
      %p108 = scmp.eq.s32.totalorder %s16, 0
      %p109 = por %p107, %p108
      %p110 = scmp.ne.s32.totalorder %s99, %s102
      %p111 = scmp.eq.s32.totalorder %s21, 9
      %p112 = por %p110, %p111
      %p113 = scmp.ne.s32.totalorder %s102, %s103
      %p114 = scmp.eq.s32.totalorder %s21, 0
      %p115 = por %p113, %p114
      %p116 = scmp.ne.s32.totalorder %s102, %s103
      %p117 = scmp.eq.s32.totalorder %s22, 9
      %p118 = por %p116, %p117
      %p120 = scmp.ne.s32.totalorder %s103, %s119
      %p121 = scmp.eq.s32.totalorder %s22, 0
      %p122 = por %p120, %p121
      %p123 = scmp.le.s32.totalorder 1, %s16
      %p124 = scmp.lt.s32.totalorder %s16, 11
      %p125 = pnand %p123, %p124
      %p126 = pneg %p125
      // Predicated region
      $region9: #{tpu_custom_call.1} parent=5 // pred_check
        _
      $region10: #{tpu_custom_call.1} parent=5 // pred_check_branch
        %128 = sbr.rel (%p125) target = $region12
      $region11: #{tpu_custom_call.1} parent=5 // pred_region
        %s129 = ssub.s32 %s16, 1
        // Predicated region
        $region13: #{tpu_custom_call.1} parent=11 // pred_check
          %p130 = pneg %p37
        $region14: #{tpu_custom_call.1} parent=11 // pred_check_branch
          %132 = sbr.rel (%p130) target = $region16
        $region15: #{tpu_custom_call.1} parent=11 // pred_region
          %s134 = ssub.s32 2816, 2816
          %135 = vsyncadd [#allocation3], %s134
          %s136 = sshll.u32 [#allocation2], 4
          %s137 = int_to_ptr.vmem [resolvable:$true] %s136
          %142 = dma.hbm_to_vmem [thread:$0]  %s0, 2816, %s137, [#allocation3], 1408, 1408, 88
        $region16: #{tpu_custom_call.1} parent=11 // pred_fallthru
          _
      $region12: #{tpu_custom_call.1} parent=5 // pred_fallthru
        _
      %p143 = scmp.lt.s32.totalorder %s16, 10
      // Predicated region
      $region17: #{tpu_custom_call.1} parent=5 // pred_check
        %p144 = pneg %p143
      $region18: #{tpu_custom_call.1} parent=5 // pred_check_branch
        %146 = sbr.rel (%p144) target = $region20
      $region19: #{tpu_custom_call.1} parent=5 // pred_region
        // Predicated region
        $region21: #{tpu_custom_call.1} parent=19 // pred_check
          %p147 = pneg %p57
        $region22: #{tpu_custom_call.1} parent=19 // pred_check_branch
          %149 = sbr.rel (%p147) target = $region24
        $region23: #{tpu_custom_call.1} parent=19 // pred_region
          %s150 = sand.u32 %s16, 1
          %s151 = scalar_lea.sflag [#allocation6], %s150
          %s152 = sand.u32 %s47, 1
          %s153 = smul.addr %s152, 5632
          %s154 = scalar_lea.vmem [#allocation5], %s153
          %s155 = smul.u32 4, %s16
          %s157 = ssub.s32 90112, 90112
          %158 = vsyncadd %s151, %s157
          %s159 = smul.addr %s155, 64
          %s160 = scalar_lea.hbm %s1, %s159
          %s161 = sshll.u32 %s154, 4
          %s162 = int_to_ptr.vmem [resolvable:$true] %s161
          %167 = dma.hbm_to_vmem [thread:$0]  %s160, 90112, %s162, %s151, 2560, 256, 16
        $region24: #{tpu_custom_call.1} parent=19 // pred_fallthru
          _
        // Predicated region
        $region25: #{tpu_custom_call.1} parent=19 // pred_check
          %p168 = pneg %p83
        $region26: #{tpu_custom_call.1} parent=19 // pred_check_branch
          %170 = sbr.rel (%p168) target = $region28
        $region27: #{tpu_custom_call.1} parent=19 // pred_region
          %s171 = sand.u32 %s16, 1
          %s172 = scalar_lea.sflag [#allocation6], %s171
          %s173 = sand.u32 %s73, 1
          %s174 = smul.addr %s173, 4
          %s175 = scalar_lea.vmem [#allocation7], %s174
          %s176 = smul.u32 4, %s16
          %s178 = ssub.s32 64, 64
          %179 = vsyncadd %s172, %s178
          %s180 = smul.addr %s176, 16
          %s181 = scalar_lea.hbm %s2, %s180
          %s183 = sshll.u32 %s175, 4
          %s184 = int_to_ptr.vmem [resolvable:$true] %s183
          %186 = dma.hbm_to_vmem [thread:$0]  %s181, 64, %s184, %s172
        $region28: #{tpu_custom_call.1} parent=19 // pred_fallthru
          _
      $region20: #{tpu_custom_call.1} parent=5 // pred_fallthru
        _
      %p187 = scmp.le.s32.totalorder 1, %s16
      %p188 = scmp.lt.s32.totalorder %s16, 11
      %p189 = pnand %p187, %p188
      %p190 = pneg %p189
      // Predicated region
      $region29: #{tpu_custom_call.1} parent=5 // pred_check
        _
      $region30: #{tpu_custom_call.1} parent=5 // pred_check_branch
        %192 = sbr.rel (%p189) target = $region32
      $region31: #{tpu_custom_call.1} parent=5 // pred_region
        %s193 = ssub.s32 %s16, 1
        // Predicated region
        $region33: #{tpu_custom_call.1} parent=31 // pred_check
          %p194 = pneg %p37
        $region34: #{tpu_custom_call.1} parent=31 // pred_check_branch
          %196 = sbr.rel (%p194) target = $region36
        $region35: #{tpu_custom_call.1} parent=31 // pred_region
          %197 = dma.done [#allocation3], 2816
        $region36: #{tpu_custom_call.1} parent=31 // pred_fallthru
          _
        %s198 = sand.u32 %s21, 1
        %s199 = scalar_lea.sflag [#allocation6], %s198
        %s200 = sand.u32 %s50, 1
        %s201 = smul.addr %s200, 5632
        %s202 = scalar_lea.vmem [#allocation5], %s201
        // Predicated region
        $region37: #{tpu_custom_call.1} parent=31 // pred_check
          %p203 = pneg %p63
        $region38: #{tpu_custom_call.1} parent=31 // pred_check_branch
          %205 = sbr.rel (%p203) target = $region40
        $region39: #{tpu_custom_call.1} parent=31 // pred_region
          %206 = dma.done %s199, 90112
        $region40: #{tpu_custom_call.1} parent=31 // pred_fallthru
          _
        %s207 = sand.u32 %s21, 1
        %s208 = scalar_lea.sflag [#allocation6], %s207
        %s209 = sand.u32 %s76, 1
        %s210 = smul.addr %s209, 4
        %s211 = scalar_lea.vmem [#allocation7], %s210
        // Predicated region
        $region41: #{tpu_custom_call.1} parent=31 // pred_check
          %p212 = pneg %p89
        $region42: #{tpu_custom_call.1} parent=31 // pred_check_branch
          %214 = sbr.rel (%p212) target = $region44
        $region43: #{tpu_custom_call.1} parent=31 // pred_region
          %215 = dma.done %s208, 64
        $region44: #{tpu_custom_call.1} parent=31 // pred_fallthru
          _
        %p216 = pneg %p37
        %p217 = pneg %p34
        %s218 = sand.u32 %s21, 1
        %s219 = scalar_lea.sflag [#allocation6], %s218
        %s220 = sand.u32 %s50, 1
        %s221 = smul.addr %s220, 5632
        %s222 = scalar_lea.vmem [#allocation5], %s221
        %p223 = pneg %p63
        %p224 = pneg %p60
        %s225 = sand.u32 %s21, 1
        %s226 = scalar_lea.sflag [#allocation6], %s225
        %s227 = sand.u32 %s76, 1
        %s228 = smul.addr %s227, 4
        %s229 = scalar_lea.vmem [#allocation7], %s228
        %p230 = pneg %p89
        %p231 = pneg %p86
        %p232 = pneg %p115
        %p233 = pneg %p112
        %s234 = sand.u32 %s102, 1
        %s235 = scalar_lea.sflag [#allocation4], %s234
        %s236 = sand.u32 %s102, 1
        %s237 = smul.addr %s236, 32
        %s238 = scalar_lea.vmem [#allocation8], %s237
        %s239 = smul.u32 4, %s21
        %s240 = smul.u32 4, %s21
        %s241 = smul.u32 4, %s21
        %v242 = vld [vmem:[#allocation2] sm:$0xff]
        %v243 = vld [vmem:[#allocation2 + $0x8] sm:$0xff]
        %v244 = vld [vmem:[#allocation2 + $0x10] sm:$0xff]
        %v245 = vld [vmem:[#allocation2 + $0x18] sm:$0xff]
        %v246 = vld [vmem:[#allocation2 + $0x20] sm:$0xff]
        %v247 = vld [vmem:[#allocation2 + $0x28] sm:$0xff]
        %v248 = vld [vmem:[#allocation2 + $0x30] sm:$0xff]
        %v249 = vld [vmem:[#allocation2 + $0x38] sm:$0xff]
        %v250 = vld [vmem:[#allocation2 + $0x40] sm:$0xff]
        %v251 = vld [vmem:[#allocation2 + $0x48] sm:$0xff]
        %v252 = vld [vmem:[#allocation2 + $0x50] sm:$0xff]
        %v253 = vld [vmem:[#allocation2 + $0x58] sm:$0xff]
        %v254 = vld [vmem:[#allocation2 + $0x60] sm:$0xff]
        %v255 = vld [vmem:[#allocation2 + $0x68] sm:$0xff]
        %v256 = vld [vmem:[#allocation2 + $0x70] sm:$0xff]
        %v257 = vld [vmem:[#allocation2 + $0x78] sm:$0xff]
        %v258 = vld [vmem:[#allocation2 + $0x80] sm:$0xff]
        %v259 = vld [vmem:[#allocation2 + $0x88] sm:$0xff]
        %v260 = vld [vmem:[#allocation2 + $0x90] sm:$0xff]
        %v261 = vld [vmem:[#allocation2 + $0x98] sm:$0xff]
        %v262 = vld [vmem:[#allocation2 + $0xa0] sm:$0xff]
        %v263 = vld [vmem:[#allocation2 + $0xa8] sm:$0xff]
        %v264 = vld [vmem:[%s202] sm:$0xff]
        %v265 = vld [vmem:[%s202 + $0x8] sm:$0xff]
        %v266 = vld [vmem:[%s202 + $0x10] sm:$0xff]
        %v267 = vld [vmem:[%s202 + $0x18] sm:$0xff]
        %v268 = vld [vmem:[%s202 + $0x20] sm:$0xff]
        %v269 = vld [vmem:[%s202 + $0x28] sm:$0xff]
        %v270 = vld [vmem:[%s202 + $0x30] sm:$0xff]
        %v271 = vld [vmem:[%s202 + $0x38] sm:$0xff]
        %v272 = vld [vmem:[%s202 + $0x40] sm:$0xff]
        %v273 = vld [vmem:[%s202 + $0x48] sm:$0xff]
        %v274 = vld [vmem:[%s202 + $0x50] sm:$0xff]
        %v275 = vld [vmem:[%s202 + $0x58] sm:$0xff]
        %v276 = vld [vmem:[%s202 + $0x60] sm:$0xff]
        %v277 = vld [vmem:[%s202 + $0x68] sm:$0xff]
        %v278 = vld [vmem:[%s202 + $0x70] sm:$0xff]
        %v279 = vld [vmem:[%s202 + $0x78] sm:$0xff]
        %v280 = vld [vmem:[%s202 + $0x80] sm:$0xff]
        %v281 = vld [vmem:[%s202 + $0x88] sm:$0xff]
        %v282 = vld [vmem:[%s202 + $0x90] sm:$0xff]
        %v283 = vld [vmem:[%s202 + $0x98] sm:$0xff]
        %v284 = vld [vmem:[%s202 + $0xa0] sm:$0xff]
        %v285 = vld [vmem:[%s202 + $0xa8] sm:$0xff]
        %v286 = vld [vmem:[%s202 + $0xb0] sm:$0xff]
        %v287 = vld [vmem:[%s202 + $0xb8] sm:$0xff]
        %v288 = vld [vmem:[%s202 + $0xc0] sm:$0xff]
        %v289 = vld [vmem:[%s202 + $0xc8] sm:$0xff]
        %v290 = vld [vmem:[%s202 + $0xd0] sm:$0xff]
        %v291 = vld [vmem:[%s202 + $0xd8] sm:$0xff]
        %v292 = vld [vmem:[%s202 + $0xe0] sm:$0xff]
        %v293 = vld [vmem:[%s202 + $0xe8] sm:$0xff]
        %v294 = vld [vmem:[%s202 + $0xf0] sm:$0xff]
        %v295 = vld [vmem:[%s202 + $0xf8] sm:$0xff]
        %v296 = vld [vmem:[%s202 + $0x100] sm:$0xff]
        %v297 = vld [vmem:[%s202 + $0x108] sm:$0xff]
        %v298 = vld [vmem:[%s202 + $0x110] sm:$0xff]
        %v299 = vld [vmem:[%s202 + $0x118] sm:$0xff]
        %v300 = vld [vmem:[%s202 + $0x120] sm:$0xff]
        %v301 = vld [vmem:[%s202 + $0x128] sm:$0xff]
        %v302 = vld [vmem:[%s202 + $0x130] sm:$0xff]
        %v303 = vld [vmem:[%s202 + $0x138] sm:$0xff]
        %v304 = vld [vmem:[%s202 + $0x140] sm:$0xff]
        %v305 = vld [vmem:[%s202 + $0x148] sm:$0xff]
        %v306 = vld [vmem:[%s202 + $0x150] sm:$0xff]
        %v307 = vld [vmem:[%s202 + $0x158] sm:$0xff]
        %v308 = vld [vmem:[%s202 + $0x160] sm:$0xff]
        %v309 = vld [vmem:[%s202 + $0x168] sm:$0xff]
        %v310 = vld [vmem:[%s202 + $0x170] sm:$0xff]
        %v311 = vld [vmem:[%s202 + $0x178] sm:$0xff]
        %v312 = vld [vmem:[%s202 + $0x180] sm:$0xff]
        %v313 = vld [vmem:[%s202 + $0x188] sm:$0xff]
        %v314 = vld [vmem:[%s202 + $0x190] sm:$0xff]
        %v315 = vld [vmem:[%s202 + $0x198] sm:$0xff]
        %v316 = vld [vmem:[%s202 + $0x1a0] sm:$0xff]
        %v317 = vld [vmem:[%s202 + $0x1a8] sm:$0xff]
        %v318 = vld [vmem:[%s202 + $0x1b0] sm:$0xff]
        %v319 = vld [vmem:[%s202 + $0x1b8] sm:$0xff]
        %v320 = vld [vmem:[%s202 + $0x1c0] sm:$0xff]
        %v321 = vld [vmem:[%s202 + $0x1c8] sm:$0xff]
        %v322 = vld [vmem:[%s202 + $0x1d0] sm:$0xff]
        %v323 = vld [vmem:[%s202 + $0x1d8] sm:$0xff]
        %v324 = vld [vmem:[%s202 + $0x1e0] sm:$0xff]
        %v325 = vld [vmem:[%s202 + $0x1e8] sm:$0xff]
        %v326 = vld [vmem:[%s202 + $0x1f0] sm:$0xff]
        %v327 = vld [vmem:[%s202 + $0x1f8] sm:$0xff]
        %v328 = vld [vmem:[%s202 + $0x200] sm:$0xff]
        %v329 = vld [vmem:[%s202 + $0x208] sm:$0xff]
        %v330 = vld [vmem:[%s202 + $0x210] sm:$0xff]
        %v331 = vld [vmem:[%s202 + $0x218] sm:$0xff]
        %v332 = vld [vmem:[%s202 + $0x220] sm:$0xff]
        %v333 = vld [vmem:[%s202 + $0x228] sm:$0xff]
        %v334 = vld [vmem:[%s202 + $0x230] sm:$0xff]
        %v335 = vld [vmem:[%s202 + $0x238] sm:$0xff]
        %v336 = vld [vmem:[%s202 + $0x240] sm:$0xff]
        %v337 = vld [vmem:[%s202 + $0x248] sm:$0xff]
        %v338 = vld [vmem:[%s202 + $0x250] sm:$0xff]
        %v339 = vld [vmem:[%s202 + $0x258] sm:$0xff]
        %v340 = vld [vmem:[%s202 + $0x260] sm:$0xff]
        %v341 = vld [vmem:[%s202 + $0x268] sm:$0xff]
        %v342 = vld [vmem:[%s202 + $0x270] sm:$0xff]
        %v343 = vld [vmem:[%s202 + $0x278] sm:$0xff]
        %v344 = vld [vmem:[%s202 + $0x280] sm:$0xff]
        %v345 = vld [vmem:[%s202 + $0x288] sm:$0xff]
        %v346 = vld [vmem:[%s202 + $0x290] sm:$0xff]
        %v347 = vld [vmem:[%s202 + $0x298] sm:$0xff]
        %v348 = vld [vmem:[%s202 + $0x2a0] sm:$0xff]
        %v349 = vld [vmem:[%s202 + $0x2a8] sm:$0xff]
        %v350 = vld [vmem:[%s202 + $0x2b0] sm:$0xff]
        %v351 = vld [vmem:[%s202 + $0x2b8] sm:$0xff]
        %v352 = vld [vmem:[%s202 + $0x2c0] sm:$0xff]
        %v353 = vld [vmem:[%s202 + $0x2c8] sm:$0xff]
        %v354 = vld [vmem:[%s202 + $0x2d0] sm:$0xff]
        %v355 = vld [vmem:[%s202 + $0x2d8] sm:$0xff]
        %v356 = vld [vmem:[%s202 + $0x2e0] sm:$0xff]
        %v357 = vld [vmem:[%s202 + $0x2e8] sm:$0xff]
        %v358 = vld [vmem:[%s202 + $0x2f0] sm:$0xff]
        %v359 = vld [vmem:[%s202 + $0x2f8] sm:$0xff]
        %v360 = vld [vmem:[%s202 + $0x300] sm:$0xff]
        %v361 = vld [vmem:[%s202 + $0x308] sm:$0xff]
        %v362 = vld [vmem:[%s202 + $0x310] sm:$0xff]
        %v363 = vld [vmem:[%s202 + $0x318] sm:$0xff]
        %v364 = vld [vmem:[%s202 + $0x320] sm:$0xff]
        %v365 = vld [vmem:[%s202 + $0x328] sm:$0xff]
        %v366 = vld [vmem:[%s202 + $0x330] sm:$0xff]
        %v367 = vld [vmem:[%s202 + $0x338] sm:$0xff]
        %v368 = vld [vmem:[%s202 + $0x340] sm:$0xff]
        %v369 = vld [vmem:[%s202 + $0x348] sm:$0xff]
        %v370 = vld [vmem:[%s202 + $0x350] sm:$0xff]
        %v371 = vld [vmem:[%s202 + $0x358] sm:$0xff]
        %v372 = vld [vmem:[%s202 + $0x360] sm:$0xff]
        %v373 = vld [vmem:[%s202 + $0x368] sm:$0xff]
        %v374 = vld [vmem:[%s202 + $0x370] sm:$0xff]
        %v375 = vld [vmem:[%s202 + $0x378] sm:$0xff]
        %v376 = vld [vmem:[%s202 + $0x380] sm:$0xff]
        %v377 = vld [vmem:[%s202 + $0x388] sm:$0xff]
        %v378 = vld [vmem:[%s202 + $0x390] sm:$0xff]
        %v379 = vld [vmem:[%s202 + $0x398] sm:$0xff]
        %v380 = vld [vmem:[%s202 + $0x3a0] sm:$0xff]
        %v381 = vld [vmem:[%s202 + $0x3a8] sm:$0xff]
        %v382 = vld [vmem:[%s202 + $0x3b0] sm:$0xff]
        %v383 = vld [vmem:[%s202 + $0x3b8] sm:$0xff]
        %v384 = vld [vmem:[%s202 + $0x3c0] sm:$0xff]
        %v385 = vld [vmem:[%s202 + $0x3c8] sm:$0xff]
        %v386 = vld [vmem:[%s202 + $0x3d0] sm:$0xff]
        %v387 = vld [vmem:[%s202 + $0x3d8] sm:$0xff]
        %v388 = vld [vmem:[%s202 + $0x3e0] sm:$0xff]
        %v389 = vld [vmem:[%s202 + $0x3e8] sm:$0xff]
        %v390 = vld [vmem:[%s202 + $0x3f0] sm:$0xff]
        %v391 = vld [vmem:[%s202 + $0x3f8] sm:$0xff]
        %v392 = vld [vmem:[%s202 + $0x400] sm:$0xff]
        %v393 = vld [vmem:[%s202 + $0x408] sm:$0xff]
        %v394 = vld [vmem:[%s202 + $0x410] sm:$0xff]
        %v395 = vld [vmem:[%s202 + $0x418] sm:$0xff]
        %v396 = vld [vmem:[%s202 + $0x420] sm:$0xff]
        %v397 = vld [vmem:[%s202 + $0x428] sm:$0xff]
        %v398 = vld [vmem:[%s202 + $0x430] sm:$0xff]
        %v399 = vld [vmem:[%s202 + $0x438] sm:$0xff]
        %v400 = vld [vmem:[%s202 + $0x440] sm:$0xff]
        %v401 = vld [vmem:[%s202 + $0x448] sm:$0xff]
        %v402 = vld [vmem:[%s202 + $0x450] sm:$0xff]
        %v403 = vld [vmem:[%s202 + $0x458] sm:$0xff]
        %v404 = vld [vmem:[%s202 + $0x460] sm:$0xff]
        %v405 = vld [vmem:[%s202 + $0x468] sm:$0xff]
        %v406 = vld [vmem:[%s202 + $0x470] sm:$0xff]
        %v407 = vld [vmem:[%s202 + $0x478] sm:$0xff]
        %v408 = vld [vmem:[%s202 + $0x480] sm:$0xff]
        %v409 = vld [vmem:[%s202 + $0x488] sm:$0xff]
        %v410 = vld [vmem:[%s202 + $0x490] sm:$0xff]
        %v411 = vld [vmem:[%s202 + $0x498] sm:$0xff]
        %v412 = vld [vmem:[%s202 + $0x4a0] sm:$0xff]
        %v413 = vld [vmem:[%s202 + $0x4a8] sm:$0xff]
        %v414 = vld [vmem:[%s202 + $0x4b0] sm:$0xff]
        %v415 = vld [vmem:[%s202 + $0x4b8] sm:$0xff]
        %v416 = vld [vmem:[%s202 + $0x4c0] sm:$0xff]
        %v417 = vld [vmem:[%s202 + $0x4c8] sm:$0xff]
        %v418 = vld [vmem:[%s202 + $0x4d0] sm:$0xff]
        %v419 = vld [vmem:[%s202 + $0x4d8] sm:$0xff]
        %v420 = vld [vmem:[%s202 + $0x4e0] sm:$0xff]
        %v421 = vld [vmem:[%s202 + $0x4e8] sm:$0xff]
        %v422 = vld [vmem:[%s202 + $0x4f0] sm:$0xff]
        %v423 = vld [vmem:[%s202 + $0x4f8] sm:$0xff]
        %v424 = vld [vmem:[%s202 + $0x500] sm:$0xff]
        %v425 = vld [vmem:[%s202 + $0x508] sm:$0xff]
        %v426 = vld [vmem:[%s202 + $0x510] sm:$0xff]
        %v427 = vld [vmem:[%s202 + $0x518] sm:$0xff]
        %v428 = vld [vmem:[%s202 + $0x520] sm:$0xff]
        %v429 = vld [vmem:[%s202 + $0x528] sm:$0xff]
        %v430 = vld [vmem:[%s202 + $0x530] sm:$0xff]
        %v431 = vld [vmem:[%s202 + $0x538] sm:$0xff]
        %v432 = vld [vmem:[%s202 + $0x540] sm:$0xff]
        %v433 = vld [vmem:[%s202 + $0x548] sm:$0xff]
        %v434 = vld [vmem:[%s202 + $0x550] sm:$0xff]
        %v435 = vld [vmem:[%s202 + $0x558] sm:$0xff]
        %v436 = vld [vmem:[%s202 + $0x560] sm:$0xff]
        %v437 = vld [vmem:[%s202 + $0x568] sm:$0xff]
        %v438 = vld [vmem:[%s202 + $0x570] sm:$0xff]
        %v439 = vld [vmem:[%s202 + $0x578] sm:$0xff]
        %v440 = vld [vmem:[%s202 + $0x580] sm:$0xff]
        %v441 = vld [vmem:[%s202 + $0x588] sm:$0xff]
        %v442 = vld [vmem:[%s202 + $0x590] sm:$0xff]
        %v443 = vld [vmem:[%s202 + $0x598] sm:$0xff]
        %v444 = vld [vmem:[%s202 + $0x5a0] sm:$0xff]
        %v445 = vld [vmem:[%s202 + $0x5a8] sm:$0xff]
        %v446 = vld [vmem:[%s202 + $0x5b0] sm:$0xff]
        %v447 = vld [vmem:[%s202 + $0x5b8] sm:$0xff]
        %v448 = vld [vmem:[%s202 + $0x5c0] sm:$0xff]
        %v449 = vld [vmem:[%s202 + $0x5c8] sm:$0xff]
        %v450 = vld [vmem:[%s202 + $0x5d0] sm:$0xff]
        %v451 = vld [vmem:[%s202 + $0x5d8] sm:$0xff]
        %v452 = vld [vmem:[%s202 + $0x5e0] sm:$0xff]
        %v453 = vld [vmem:[%s202 + $0x5e8] sm:$0xff]
        %v454 = vld [vmem:[%s202 + $0x5f0] sm:$0xff]
        %v455 = vld [vmem:[%s202 + $0x5f8] sm:$0xff]
        %v456 = vld [vmem:[%s202 + $0x600] sm:$0xff]
        %v457 = vld [vmem:[%s202 + $0x608] sm:$0xff]
        %v458 = vld [vmem:[%s202 + $0x610] sm:$0xff]
        %v459 = vld [vmem:[%s202 + $0x618] sm:$0xff]
        %v460 = vld [vmem:[%s202 + $0x620] sm:$0xff]
        %v461 = vld [vmem:[%s202 + $0x628] sm:$0xff]
        %v462 = vld [vmem:[%s202 + $0x630] sm:$0xff]
        %v463 = vld [vmem:[%s202 + $0x638] sm:$0xff]
        %v464 = vld [vmem:[%s202 + $0x640] sm:$0xff]
        %v465 = vld [vmem:[%s202 + $0x648] sm:$0xff]
        %v466 = vld [vmem:[%s202 + $0x650] sm:$0xff]
        %v467 = vld [vmem:[%s202 + $0x658] sm:$0xff]
        %v468 = vld [vmem:[%s202 + $0x660] sm:$0xff]
        %v469 = vld [vmem:[%s202 + $0x668] sm:$0xff]
        %v470 = vld [vmem:[%s202 + $0x670] sm:$0xff]
        %v471 = vld [vmem:[%s202 + $0x678] sm:$0xff]
        %v472 = vld [vmem:[%s202 + $0x680] sm:$0xff]
        %v473 = vld [vmem:[%s202 + $0x688] sm:$0xff]
        %v474 = vld [vmem:[%s202 + $0x690] sm:$0xff]
        %v475 = vld [vmem:[%s202 + $0x698] sm:$0xff]
        %v476 = vld [vmem:[%s202 + $0x6a0] sm:$0xff]
        %v477 = vld [vmem:[%s202 + $0x6a8] sm:$0xff]
        %v478 = vld [vmem:[%s202 + $0x6b0] sm:$0xff]
        %v479 = vld [vmem:[%s202 + $0x6b8] sm:$0xff]
        %v480 = vld [vmem:[%s202 + $0x6c0] sm:$0xff]
        %v481 = vld [vmem:[%s202 + $0x6c8] sm:$0xff]
        %v482 = vld [vmem:[%s202 + $0x6d0] sm:$0xff]
        %v483 = vld [vmem:[%s202 + $0x6d8] sm:$0xff]
        %v484 = vld [vmem:[%s202 + $0x6e0] sm:$0xff]
        %v485 = vld [vmem:[%s202 + $0x6e8] sm:$0xff]
        %v486 = vld [vmem:[%s202 + $0x6f0] sm:$0xff]
        %v487 = vld [vmem:[%s202 + $0x6f8] sm:$0xff]
        %v488 = vld [vmem:[%s202 + $0x700] sm:$0xff]
        %v489 = vld [vmem:[%s202 + $0x708] sm:$0xff]
        %v490 = vld [vmem:[%s202 + $0x710] sm:$0xff]
        %v491 = vld [vmem:[%s202 + $0x718] sm:$0xff]
        %v492 = vld [vmem:[%s202 + $0x720] sm:$0xff]
        %v493 = vld [vmem:[%s202 + $0x728] sm:$0xff]
        %v494 = vld [vmem:[%s202 + $0x730] sm:$0xff]
        %v495 = vld [vmem:[%s202 + $0x738] sm:$0xff]
        %v496 = vld [vmem:[%s202 + $0x740] sm:$0xff]
        %v497 = vld [vmem:[%s202 + $0x748] sm:$0xff]
        %v498 = vld [vmem:[%s202 + $0x750] sm:$0xff]
        %v499 = vld [vmem:[%s202 + $0x758] sm:$0xff]
        %v500 = vld [vmem:[%s202 + $0x760] sm:$0xff]
        %v501 = vld [vmem:[%s202 + $0x768] sm:$0xff]
        %v502 = vld [vmem:[%s202 + $0x770] sm:$0xff]
        %v503 = vld [vmem:[%s202 + $0x778] sm:$0xff]
        %v504 = vld [vmem:[%s202 + $0x780] sm:$0xff]
        %v505 = vld [vmem:[%s202 + $0x788] sm:$0xff]
        %v506 = vld [vmem:[%s202 + $0x790] sm:$0xff]
        %v507 = vld [vmem:[%s202 + $0x798] sm:$0xff]
        %v508 = vld [vmem:[%s202 + $0x7a0] sm:$0xff]
        %v509 = vld [vmem:[%s202 + $0x7a8] sm:$0xff]
        %v510 = vld [vmem:[%s202 + $0x7b0] sm:$0xff]
        %v511 = vld [vmem:[%s202 + $0x7b8] sm:$0xff]
        %v512 = vld [vmem:[%s202 + $0x7c0] sm:$0xff]
        %v513 = vld [vmem:[%s202 + $0x7c8] sm:$0xff]
        %v514 = vld [vmem:[%s202 + $0x7d0] sm:$0xff]
        %v515 = vld [vmem:[%s202 + $0x7d8] sm:$0xff]
        %v516 = vld [vmem:[%s202 + $0x7e0] sm:$0xff]
        %v517 = vld [vmem:[%s202 + $0x7e8] sm:$0xff]
        %v518 = vld [vmem:[%s202 + $0x7f0] sm:$0xff]
        %v519 = vld [vmem:[%s202 + $0x7f8] sm:$0xff]
        %v520 = vld [vmem:[%s202 + $0x800] sm:$0xff]
        %v521 = vld [vmem:[%s202 + $0x808] sm:$0xff]
        %v522 = vld [vmem:[%s202 + $0x810] sm:$0xff]
        %v523 = vld [vmem:[%s202 + $0x818] sm:$0xff]
        %v524 = vld [vmem:[%s202 + $0x820] sm:$0xff]
        %v525 = vld [vmem:[%s202 + $0x828] sm:$0xff]
        %v526 = vld [vmem:[%s202 + $0x830] sm:$0xff]
        %v527 = vld [vmem:[%s202 + $0x838] sm:$0xff]
        %v528 = vld [vmem:[%s202 + $0x840] sm:$0xff]
        %v529 = vld [vmem:[%s202 + $0x848] sm:$0xff]
        %v530 = vld [vmem:[%s202 + $0x850] sm:$0xff]
        %v531 = vld [vmem:[%s202 + $0x858] sm:$0xff]
        %v532 = vld [vmem:[%s202 + $0x860] sm:$0xff]
        %v533 = vld [vmem:[%s202 + $0x868] sm:$0xff]
        %v534 = vld [vmem:[%s202 + $0x870] sm:$0xff]
        %v535 = vld [vmem:[%s202 + $0x878] sm:$0xff]
        %v536 = vld [vmem:[%s202 + $0x880] sm:$0xff]
        %v537 = vld [vmem:[%s202 + $0x888] sm:$0xff]
        %v538 = vld [vmem:[%s202 + $0x890] sm:$0xff]
        %v539 = vld [vmem:[%s202 + $0x898] sm:$0xff]
        %v540 = vld [vmem:[%s202 + $0x8a0] sm:$0xff]
        %v541 = vld [vmem:[%s202 + $0x8a8] sm:$0xff]
        %v542 = vld [vmem:[%s202 + $0x8b0] sm:$0xff]
        %v543 = vld [vmem:[%s202 + $0x8b8] sm:$0xff]
        %v544 = vld [vmem:[%s202 + $0x8c0] sm:$0xff]
        %v545 = vld [vmem:[%s202 + $0x8c8] sm:$0xff]
        %v546 = vld [vmem:[%s202 + $0x8d0] sm:$0xff]
        %v547 = vld [vmem:[%s202 + $0x8d8] sm:$0xff]
        %v548 = vld [vmem:[%s202 + $0x8e0] sm:$0xff]
        %v549 = vld [vmem:[%s202 + $0x8e8] sm:$0xff]
        %v550 = vld [vmem:[%s202 + $0x8f0] sm:$0xff]
        %v551 = vld [vmem:[%s202 + $0x8f8] sm:$0xff]
        %v552 = vld [vmem:[%s202 + $0x900] sm:$0xff]
        %v553 = vld [vmem:[%s202 + $0x908] sm:$0xff]
        %v554 = vld [vmem:[%s202 + $0x910] sm:$0xff]
        %v555 = vld [vmem:[%s202 + $0x918] sm:$0xff]
        %v556 = vld [vmem:[%s202 + $0x920] sm:$0xff]
        %v557 = vld [vmem:[%s202 + $0x928] sm:$0xff]
        %v558 = vld [vmem:[%s202 + $0x930] sm:$0xff]
        %v559 = vld [vmem:[%s202 + $0x938] sm:$0xff]
        %v560 = vld [vmem:[%s202 + $0x940] sm:$0xff]
        %v561 = vld [vmem:[%s202 + $0x948] sm:$0xff]
        %v562 = vld [vmem:[%s202 + $0x950] sm:$0xff]
        %v563 = vld [vmem:[%s202 + $0x958] sm:$0xff]
        %v564 = vld [vmem:[%s202 + $0x960] sm:$0xff]
        %v565 = vld [vmem:[%s202 + $0x968] sm:$0xff]
        %v566 = vld [vmem:[%s202 + $0x970] sm:$0xff]
        %v567 = vld [vmem:[%s202 + $0x978] sm:$0xff]
        %v568 = vld [vmem:[%s202 + $0x980] sm:$0xff]
        %v569 = vld [vmem:[%s202 + $0x988] sm:$0xff]
        %v570 = vld [vmem:[%s202 + $0x990] sm:$0xff]
        %v571 = vld [vmem:[%s202 + $0x998] sm:$0xff]
        %v572 = vld [vmem:[%s202 + $0x9a0] sm:$0xff]
        %v573 = vld [vmem:[%s202 + $0x9a8] sm:$0xff]
        %v574 = vld [vmem:[%s202 + $0x9b0] sm:$0xff]
        %v575 = vld [vmem:[%s202 + $0x9b8] sm:$0xff]
        %v576 = vld [vmem:[%s202 + $0x9c0] sm:$0xff]
        %v577 = vld [vmem:[%s202 + $0x9c8] sm:$0xff]
        %v578 = vld [vmem:[%s202 + $0x9d0] sm:$0xff]
        %v579 = vld [vmem:[%s202 + $0x9d8] sm:$0xff]
        %v580 = vld [vmem:[%s202 + $0x9e0] sm:$0xff]
        %v581 = vld [vmem:[%s202 + $0x9e8] sm:$0xff]
        %v582 = vld [vmem:[%s202 + $0x9f0] sm:$0xff]
        %v583 = vld [vmem:[%s202 + $0x9f8] sm:$0xff]
        %v584 = vld [vmem:[%s202 + $0xa00] sm:$0xff]
        %v585 = vld [vmem:[%s202 + $0xa08] sm:$0xff]
        %v586 = vld [vmem:[%s202 + $0xa10] sm:$0xff]
        %v587 = vld [vmem:[%s202 + $0xa18] sm:$0xff]
        %v588 = vld [vmem:[%s202 + $0xa20] sm:$0xff]
        %v589 = vld [vmem:[%s202 + $0xa28] sm:$0xff]
        %v590 = vld [vmem:[%s202 + $0xa30] sm:$0xff]
        %v591 = vld [vmem:[%s202 + $0xa38] sm:$0xff]
        %v592 = vld [vmem:[%s202 + $0xa40] sm:$0xff]
        %v593 = vld [vmem:[%s202 + $0xa48] sm:$0xff]
        %v594 = vld [vmem:[%s202 + $0xa50] sm:$0xff]
        %v595 = vld [vmem:[%s202 + $0xa58] sm:$0xff]
        %v596 = vld [vmem:[%s202 + $0xa60] sm:$0xff]
        %v597 = vld [vmem:[%s202 + $0xa68] sm:$0xff]
        %v598 = vld [vmem:[%s202 + $0xa70] sm:$0xff]
        %v599 = vld [vmem:[%s202 + $0xa78] sm:$0xff]
        %v600 = vld [vmem:[%s202 + $0xa80] sm:$0xff]
        %v601 = vld [vmem:[%s202 + $0xa88] sm:$0xff]
        %v602 = vld [vmem:[%s202 + $0xa90] sm:$0xff]
        %v603 = vld [vmem:[%s202 + $0xa98] sm:$0xff]
        %v604 = vld [vmem:[%s202 + $0xaa0] sm:$0xff]
        %v605 = vld [vmem:[%s202 + $0xaa8] sm:$0xff]
        %v606 = vld [vmem:[%s202 + $0xab0] sm:$0xff]
        %v607 = vld [vmem:[%s202 + $0xab8] sm:$0xff]
        %v608 = vld [vmem:[%s202 + $0xac0] sm:$0xff]
        %v609 = vld [vmem:[%s202 + $0xac8] sm:$0xff]
        %v610 = vld [vmem:[%s202 + $0xad0] sm:$0xff]
        %v611 = vld [vmem:[%s202 + $0xad8] sm:$0xff]
        %v612 = vld [vmem:[%s202 + $0xae0] sm:$0xff]
        %v613 = vld [vmem:[%s202 + $0xae8] sm:$0xff]
        %v614 = vld [vmem:[%s202 + $0xaf0] sm:$0xff]
        %v615 = vld [vmem:[%s202 + $0xaf8] sm:$0xff]
        %v616 = vld [vmem:[%s202 + $0xb00] sm:$0xff]
        %v617 = vld [vmem:[%s202 + $0xb08] sm:$0xff]
        %v618 = vld [vmem:[%s202 + $0xb10] sm:$0xff]
        %v619 = vld [vmem:[%s202 + $0xb18] sm:$0xff]
        %v620 = vld [vmem:[%s202 + $0xb20] sm:$0xff]
        %v621 = vld [vmem:[%s202 + $0xb28] sm:$0xff]
        %v622 = vld [vmem:[%s202 + $0xb30] sm:$0xff]
        %v623 = vld [vmem:[%s202 + $0xb38] sm:$0xff]
        %v624 = vld [vmem:[%s202 + $0xb40] sm:$0xff]
        %v625 = vld [vmem:[%s202 + $0xb48] sm:$0xff]
        %v626 = vld [vmem:[%s202 + $0xb50] sm:$0xff]
        %v627 = vld [vmem:[%s202 + $0xb58] sm:$0xff]
        %v628 = vld [vmem:[%s202 + $0xb60] sm:$0xff]
        %v629 = vld [vmem:[%s202 + $0xb68] sm:$0xff]
        %v630 = vld [vmem:[%s202 + $0xb70] sm:$0xff]
        %v631 = vld [vmem:[%s202 + $0xb78] sm:$0xff]
        %v632 = vld [vmem:[%s202 + $0xb80] sm:$0xff]
        %v633 = vld [vmem:[%s202 + $0xb88] sm:$0xff]
        %v634 = vld [vmem:[%s202 + $0xb90] sm:$0xff]
        %v635 = vld [vmem:[%s202 + $0xb98] sm:$0xff]
        %v636 = vld [vmem:[%s202 + $0xba0] sm:$0xff]
        %v637 = vld [vmem:[%s202 + $0xba8] sm:$0xff]
        %v638 = vld [vmem:[%s202 + $0xbb0] sm:$0xff]
        %v639 = vld [vmem:[%s202 + $0xbb8] sm:$0xff]
        %v640 = vld [vmem:[%s202 + $0xbc0] sm:$0xff]
        %v641 = vld [vmem:[%s202 + $0xbc8] sm:$0xff]
        %v642 = vld [vmem:[%s202 + $0xbd0] sm:$0xff]
        %v643 = vld [vmem:[%s202 + $0xbd8] sm:$0xff]
        %v644 = vld [vmem:[%s202 + $0xbe0] sm:$0xff]
        %v645 = vld [vmem:[%s202 + $0xbe8] sm:$0xff]
        %v646 = vld [vmem:[%s202 + $0xbf0] sm:$0xff]
        %v647 = vld [vmem:[%s202 + $0xbf8] sm:$0xff]
        %v648 = vld [vmem:[%s202 + $0xc00] sm:$0xff]
        %v649 = vld [vmem:[%s202 + $0xc08] sm:$0xff]
        %v650 = vld [vmem:[%s202 + $0xc10] sm:$0xff]
        %v651 = vld [vmem:[%s202 + $0xc18] sm:$0xff]
        %v652 = vld [vmem:[%s202 + $0xc20] sm:$0xff]
        %v653 = vld [vmem:[%s202 + $0xc28] sm:$0xff]
        %v654 = vld [vmem:[%s202 + $0xc30] sm:$0xff]
        %v655 = vld [vmem:[%s202 + $0xc38] sm:$0xff]
        %v656 = vld [vmem:[%s202 + $0xc40] sm:$0xff]
        %v657 = vld [vmem:[%s202 + $0xc48] sm:$0xff]
        %v658 = vld [vmem:[%s202 + $0xc50] sm:$0xff]
        %v659 = vld [vmem:[%s202 + $0xc58] sm:$0xff]
        %v660 = vld [vmem:[%s202 + $0xc60] sm:$0xff]
        %v661 = vld [vmem:[%s202 + $0xc68] sm:$0xff]
        %v662 = vld [vmem:[%s202 + $0xc70] sm:$0xff]
        %v663 = vld [vmem:[%s202 + $0xc78] sm:$0xff]
        %v664 = vld [vmem:[%s202 + $0xc80] sm:$0xff]
        %v665 = vld [vmem:[%s202 + $0xc88] sm:$0xff]
        %v666 = vld [vmem:[%s202 + $0xc90] sm:$0xff]
        %v667 = vld [vmem:[%s202 + $0xc98] sm:$0xff]
        %v668 = vld [vmem:[%s202 + $0xca0] sm:$0xff]
        %v669 = vld [vmem:[%s202 + $0xca8] sm:$0xff]
        %v670 = vld [vmem:[%s202 + $0xcb0] sm:$0xff]
        %v671 = vld [vmem:[%s202 + $0xcb8] sm:$0xff]
        %v672 = vld [vmem:[%s202 + $0xcc0] sm:$0xff]
        %v673 = vld [vmem:[%s202 + $0xcc8] sm:$0xff]
        %v674 = vld [vmem:[%s202 + $0xcd0] sm:$0xff]
        %v675 = vld [vmem:[%s202 + $0xcd8] sm:$0xff]
        %v676 = vld [vmem:[%s202 + $0xce0] sm:$0xff]
        %v677 = vld [vmem:[%s202 + $0xce8] sm:$0xff]
        %v678 = vld [vmem:[%s202 + $0xcf0] sm:$0xff]
        %v679 = vld [vmem:[%s202 + $0xcf8] sm:$0xff]
        %v680 = vld [vmem:[%s202 + $0xd00] sm:$0xff]
        %v681 = vld [vmem:[%s202 + $0xd08] sm:$0xff]
        %v682 = vld [vmem:[%s202 + $0xd10] sm:$0xff]
        %v683 = vld [vmem:[%s202 + $0xd18] sm:$0xff]
        %v684 = vld [vmem:[%s202 + $0xd20] sm:$0xff]
        %v685 = vld [vmem:[%s202 + $0xd28] sm:$0xff]
        %v686 = vld [vmem:[%s202 + $0xd30] sm:$0xff]
        %v687 = vld [vmem:[%s202 + $0xd38] sm:$0xff]
        %v688 = vld [vmem:[%s202 + $0xd40] sm:$0xff]
        %v689 = vld [vmem:[%s202 + $0xd48] sm:$0xff]
        %v690 = vld [vmem:[%s202 + $0xd50] sm:$0xff]
        %v691 = vld [vmem:[%s202 + $0xd58] sm:$0xff]
        %v692 = vld [vmem:[%s202 + $0xd60] sm:$0xff]
        %v693 = vld [vmem:[%s202 + $0xd68] sm:$0xff]
        %v694 = vld [vmem:[%s202 + $0xd70] sm:$0xff]
        %v695 = vld [vmem:[%s202 + $0xd78] sm:$0xff]
        %v696 = vld [vmem:[%s202 + $0xd80] sm:$0xff]
        %v697 = vld [vmem:[%s202 + $0xd88] sm:$0xff]
        %v698 = vld [vmem:[%s202 + $0xd90] sm:$0xff]
        %v699 = vld [vmem:[%s202 + $0xd98] sm:$0xff]
        %v700 = vld [vmem:[%s202 + $0xda0] sm:$0xff]
        %v701 = vld [vmem:[%s202 + $0xda8] sm:$0xff]
        %v702 = vld [vmem:[%s202 + $0xdb0] sm:$0xff]
        %v703 = vld [vmem:[%s202 + $0xdb8] sm:$0xff]
        %v704 = vld [vmem:[%s202 + $0xdc0] sm:$0xff]
        %v705 = vld [vmem:[%s202 + $0xdc8] sm:$0xff]
        %v706 = vld [vmem:[%s202 + $0xdd0] sm:$0xff]
        %v707 = vld [vmem:[%s202 + $0xdd8] sm:$0xff]
        %v708 = vld [vmem:[%s202 + $0xde0] sm:$0xff]
        %v709 = vld [vmem:[%s202 + $0xde8] sm:$0xff]
        %v710 = vld [vmem:[%s202 + $0xdf0] sm:$0xff]
        %v711 = vld [vmem:[%s202 + $0xdf8] sm:$0xff]
        %v712 = vld [vmem:[%s202 + $0xe00] sm:$0xff]
        %v713 = vld [vmem:[%s202 + $0xe08] sm:$0xff]
        %v714 = vld [vmem:[%s202 + $0xe10] sm:$0xff]
        %v715 = vld [vmem:[%s202 + $0xe18] sm:$0xff]
        %v716 = vld [vmem:[%s202 + $0xe20] sm:$0xff]
        %v717 = vld [vmem:[%s202 + $0xe28] sm:$0xff]
        %v718 = vld [vmem:[%s202 + $0xe30] sm:$0xff]
        %v719 = vld [vmem:[%s202 + $0xe38] sm:$0xff]
        %v720 = vld [vmem:[%s202 + $0xe40] sm:$0xff]
        %v721 = vld [vmem:[%s202 + $0xe48] sm:$0xff]
        %v722 = vld [vmem:[%s202 + $0xe50] sm:$0xff]
        %v723 = vld [vmem:[%s202 + $0xe58] sm:$0xff]
        %v724 = vld [vmem:[%s202 + $0xe60] sm:$0xff]
        %v725 = vld [vmem:[%s202 + $0xe68] sm:$0xff]
        %v726 = vld [vmem:[%s202 + $0xe70] sm:$0xff]
        %v727 = vld [vmem:[%s202 + $0xe78] sm:$0xff]
        %v728 = vld [vmem:[%s202 + $0xe80] sm:$0xff]
        %v729 = vld [vmem:[%s202 + $0xe88] sm:$0xff]
        %v730 = vld [vmem:[%s202 + $0xe90] sm:$0xff]
        %v731 = vld [vmem:[%s202 + $0xe98] sm:$0xff]
        %v732 = vld [vmem:[%s202 + $0xea0] sm:$0xff]
        %v733 = vld [vmem:[%s202 + $0xea8] sm:$0xff]
        %v734 = vld [vmem:[%s202 + $0xeb0] sm:$0xff]
        %v735 = vld [vmem:[%s202 + $0xeb8] sm:$0xff]
        %v736 = vld [vmem:[%s202 + $0xec0] sm:$0xff]
        %v737 = vld [vmem:[%s202 + $0xec8] sm:$0xff]
        %v738 = vld [vmem:[%s202 + $0xed0] sm:$0xff]
        %v739 = vld [vmem:[%s202 + $0xed8] sm:$0xff]
        %v740 = vld [vmem:[%s202 + $0xee0] sm:$0xff]
        %v741 = vld [vmem:[%s202 + $0xee8] sm:$0xff]
        %v742 = vld [vmem:[%s202 + $0xef0] sm:$0xff]
        %v743 = vld [vmem:[%s202 + $0xef8] sm:$0xff]
        %v744 = vld [vmem:[%s202 + $0xf00] sm:$0xff]
        %v745 = vld [vmem:[%s202 + $0xf08] sm:$0xff]
        %v746 = vld [vmem:[%s202 + $0xf10] sm:$0xff]
        %v747 = vld [vmem:[%s202 + $0xf18] sm:$0xff]
        %v748 = vld [vmem:[%s202 + $0xf20] sm:$0xff]
        %v749 = vld [vmem:[%s202 + $0xf28] sm:$0xff]
        %v750 = vld [vmem:[%s202 + $0xf30] sm:$0xff]
        %v751 = vld [vmem:[%s202 + $0xf38] sm:$0xff]
        %v752 = vld [vmem:[%s202 + $0xf40] sm:$0xff]
        %v753 = vld [vmem:[%s202 + $0xf48] sm:$0xff]
        %v754 = vld [vmem:[%s202 + $0xf50] sm:$0xff]
        %v755 = vld [vmem:[%s202 + $0xf58] sm:$0xff]
        %v756 = vld [vmem:[%s202 + $0xf60] sm:$0xff]
        %v757 = vld [vmem:[%s202 + $0xf68] sm:$0xff]
        %v758 = vld [vmem:[%s202 + $0xf70] sm:$0xff]
        %v759 = vld [vmem:[%s202 + $0xf78] sm:$0xff]
        %v760 = vld [vmem:[%s202 + $0xf80] sm:$0xff]
        %v761 = vld [vmem:[%s202 + $0xf88] sm:$0xff]
        %v762 = vld [vmem:[%s202 + $0xf90] sm:$0xff]
        %v763 = vld [vmem:[%s202 + $0xf98] sm:$0xff]
        %v764 = vld [vmem:[%s202 + $0xfa0] sm:$0xff]
        %v765 = vld [vmem:[%s202 + $0xfa8] sm:$0xff]
        %v766 = vld [vmem:[%s202 + $0xfb0] sm:$0xff]
        %v767 = vld [vmem:[%s202 + $0xfb8] sm:$0xff]
        %v768 = vld [vmem:[%s202 + $0xfc0] sm:$0xff]
        %v769 = vld [vmem:[%s202 + $0xfc8] sm:$0xff]
        %v770 = vld [vmem:[%s202 + $0xfd0] sm:$0xff]
        %v771 = vld [vmem:[%s202 + $0xfd8] sm:$0xff]
        %v772 = vld [vmem:[%s202 + $0xfe0] sm:$0xff]
        %v773 = vld [vmem:[%s202 + $0xfe8] sm:$0xff]
        %v774 = vld [vmem:[%s202 + $0xff0] sm:$0xff]
        %v775 = vld [vmem:[%s202 + $0xff8] sm:$0xff]
        %v776 = vld [vmem:[%s202 + $0x1000] sm:$0xff]
        %v777 = vld [vmem:[%s202 + $0x1008] sm:$0xff]
        %v778 = vld [vmem:[%s202 + $0x1010] sm:$0xff]
        %v779 = vld [vmem:[%s202 + $0x1018] sm:$0xff]
        %v780 = vld [vmem:[%s202 + $0x1020] sm:$0xff]
        %v781 = vld [vmem:[%s202 + $0x1028] sm:$0xff]
        %v782 = vld [vmem:[%s202 + $0x1030] sm:$0xff]
        %v783 = vld [vmem:[%s202 + $0x1038] sm:$0xff]
        %v784 = vld [vmem:[%s202 + $0x1040] sm:$0xff]
        %v785 = vld [vmem:[%s202 + $0x1048] sm:$0xff]
        %v786 = vld [vmem:[%s202 + $0x1050] sm:$0xff]
        %v787 = vld [vmem:[%s202 + $0x1058] sm:$0xff]
        %v788 = vld [vmem:[%s202 + $0x1060] sm:$0xff]
        %v789 = vld [vmem:[%s202 + $0x1068] sm:$0xff]
        %v790 = vld [vmem:[%s202 + $0x1070] sm:$0xff]
        %v791 = vld [vmem:[%s202 + $0x1078] sm:$0xff]
        %v792 = vld [vmem:[%s202 + $0x1080] sm:$0xff]
        %v793 = vld [vmem:[%s202 + $0x1088] sm:$0xff]
        %v794 = vld [vmem:[%s202 + $0x1090] sm:$0xff]
        %v795 = vld [vmem:[%s202 + $0x1098] sm:$0xff]
        %v796 = vld [vmem:[%s202 + $0x10a0] sm:$0xff]
        %v797 = vld [vmem:[%s202 + $0x10a8] sm:$0xff]
        %v798 = vld [vmem:[%s202 + $0x10b0] sm:$0xff]
        %v799 = vld [vmem:[%s202 + $0x10b8] sm:$0xff]
        %v800 = vld [vmem:[%s202 + $0x10c0] sm:$0xff]
        %v801 = vld [vmem:[%s202 + $0x10c8] sm:$0xff]
        %v802 = vld [vmem:[%s202 + $0x10d0] sm:$0xff]
        %v803 = vld [vmem:[%s202 + $0x10d8] sm:$0xff]
        %v804 = vld [vmem:[%s202 + $0x10e0] sm:$0xff]
        %v805 = vld [vmem:[%s202 + $0x10e8] sm:$0xff]
        %v806 = vld [vmem:[%s202 + $0x10f0] sm:$0xff]
        %v807 = vld [vmem:[%s202 + $0x10f8] sm:$0xff]
        %v808 = vld [vmem:[%s202 + $0x1100] sm:$0xff]
        %v809 = vld [vmem:[%s202 + $0x1108] sm:$0xff]
        %v810 = vld [vmem:[%s202 + $0x1110] sm:$0xff]
        %v811 = vld [vmem:[%s202 + $0x1118] sm:$0xff]
        %v812 = vld [vmem:[%s202 + $0x1120] sm:$0xff]
        %v813 = vld [vmem:[%s202 + $0x1128] sm:$0xff]
        %v814 = vld [vmem:[%s202 + $0x1130] sm:$0xff]
        %v815 = vld [vmem:[%s202 + $0x1138] sm:$0xff]
        %v816 = vld [vmem:[%s202 + $0x1140] sm:$0xff]
        %v817 = vld [vmem:[%s202 + $0x1148] sm:$0xff]
        %v818 = vld [vmem:[%s202 + $0x1150] sm:$0xff]
        %v819 = vld [vmem:[%s202 + $0x1158] sm:$0xff]
        %v820 = vld [vmem:[%s202 + $0x1160] sm:$0xff]
        %v821 = vld [vmem:[%s202 + $0x1168] sm:$0xff]
        %v822 = vld [vmem:[%s202 + $0x1170] sm:$0xff]
        %v823 = vld [vmem:[%s202 + $0x1178] sm:$0xff]
        %v824 = vld [vmem:[%s202 + $0x1180] sm:$0xff]
        %v825 = vld [vmem:[%s202 + $0x1188] sm:$0xff]
        %v826 = vld [vmem:[%s202 + $0x1190] sm:$0xff]
        %v827 = vld [vmem:[%s202 + $0x1198] sm:$0xff]
        %v828 = vld [vmem:[%s202 + $0x11a0] sm:$0xff]
        %v829 = vld [vmem:[%s202 + $0x11a8] sm:$0xff]
        %v830 = vld [vmem:[%s202 + $0x11b0] sm:$0xff]
        %v831 = vld [vmem:[%s202 + $0x11b8] sm:$0xff]
        %v832 = vld [vmem:[%s202 + $0x11c0] sm:$0xff]
        %v833 = vld [vmem:[%s202 + $0x11c8] sm:$0xff]
        %v834 = vld [vmem:[%s202 + $0x11d0] sm:$0xff]
        %v835 = vld [vmem:[%s202 + $0x11d8] sm:$0xff]
        %v836 = vld [vmem:[%s202 + $0x11e0] sm:$0xff]
        %v837 = vld [vmem:[%s202 + $0x11e8] sm:$0xff]
        %v838 = vld [vmem:[%s202 + $0x11f0] sm:$0xff]
        %v839 = vld [vmem:[%s202 + $0x11f8] sm:$0xff]
        %v840 = vld [vmem:[%s202 + $0x1200] sm:$0xff]
        %v841 = vld [vmem:[%s202 + $0x1208] sm:$0xff]
        %v842 = vld [vmem:[%s202 + $0x1210] sm:$0xff]
        %v843 = vld [vmem:[%s202 + $0x1218] sm:$0xff]
        %v844 = vld [vmem:[%s202 + $0x1220] sm:$0xff]
        %v845 = vld [vmem:[%s202 + $0x1228] sm:$0xff]
        %v846 = vld [vmem:[%s202 + $0x1230] sm:$0xff]
        %v847 = vld [vmem:[%s202 + $0x1238] sm:$0xff]
        %v848 = vld [vmem:[%s202 + $0x1240] sm:$0xff]
        %v849 = vld [vmem:[%s202 + $0x1248] sm:$0xff]
        %v850 = vld [vmem:[%s202 + $0x1250] sm:$0xff]
        %v851 = vld [vmem:[%s202 + $0x1258] sm:$0xff]
        %v852 = vld [vmem:[%s202 + $0x1260] sm:$0xff]
        %v853 = vld [vmem:[%s202 + $0x1268] sm:$0xff]
        %v854 = vld [vmem:[%s202 + $0x1270] sm:$0xff]
        %v855 = vld [vmem:[%s202 + $0x1278] sm:$0xff]
        %v856 = vld [vmem:[%s202 + $0x1280] sm:$0xff]
        %v857 = vld [vmem:[%s202 + $0x1288] sm:$0xff]
        %v858 = vld [vmem:[%s202 + $0x1290] sm:$0xff]
        %v859 = vld [vmem:[%s202 + $0x1298] sm:$0xff]
        %v860 = vld [vmem:[%s202 + $0x12a0] sm:$0xff]
        %v861 = vld [vmem:[%s202 + $0x12a8] sm:$0xff]
        %v862 = vld [vmem:[%s202 + $0x12b0] sm:$0xff]
        %v863 = vld [vmem:[%s202 + $0x12b8] sm:$0xff]
        %v864 = vld [vmem:[%s202 + $0x12c0] sm:$0xff]
        %v865 = vld [vmem:[%s202 + $0x12c8] sm:$0xff]
        %v866 = vld [vmem:[%s202 + $0x12d0] sm:$0xff]
        %v867 = vld [vmem:[%s202 + $0x12d8] sm:$0xff]
        %v868 = vld [vmem:[%s202 + $0x12e0] sm:$0xff]
        %v869 = vld [vmem:[%s202 + $0x12e8] sm:$0xff]
        %v870 = vld [vmem:[%s202 + $0x12f0] sm:$0xff]
        %v871 = vld [vmem:[%s202 + $0x12f8] sm:$0xff]
        %v872 = vld [vmem:[%s202 + $0x1300] sm:$0xff]
        %v873 = vld [vmem:[%s202 + $0x1308] sm:$0xff]
        %v874 = vld [vmem:[%s202 + $0x1310] sm:$0xff]
        %v875 = vld [vmem:[%s202 + $0x1318] sm:$0xff]
        %v876 = vld [vmem:[%s202 + $0x1320] sm:$0xff]
        %v877 = vld [vmem:[%s202 + $0x1328] sm:$0xff]
        %v878 = vld [vmem:[%s202 + $0x1330] sm:$0xff]
        %v879 = vld [vmem:[%s202 + $0x1338] sm:$0xff]
        %v880 = vld [vmem:[%s202 + $0x1340] sm:$0xff]
        %v881 = vld [vmem:[%s202 + $0x1348] sm:$0xff]
        %v882 = vld [vmem:[%s202 + $0x1350] sm:$0xff]
        %v883 = vld [vmem:[%s202 + $0x1358] sm:$0xff]
        %v884 = vld [vmem:[%s202 + $0x1360] sm:$0xff]
        %v885 = vld [vmem:[%s202 + $0x1368] sm:$0xff]
        %v886 = vld [vmem:[%s202 + $0x1370] sm:$0xff]
        %v887 = vld [vmem:[%s202 + $0x1378] sm:$0xff]
        %v888 = vld [vmem:[%s202 + $0x1380] sm:$0xff]
        %v889 = vld [vmem:[%s202 + $0x1388] sm:$0xff]
        %v890 = vld [vmem:[%s202 + $0x1390] sm:$0xff]
        %v891 = vld [vmem:[%s202 + $0x1398] sm:$0xff]
        %v892 = vld [vmem:[%s202 + $0x13a0] sm:$0xff]
        %v893 = vld [vmem:[%s202 + $0x13a8] sm:$0xff]
        %v894 = vld [vmem:[%s202 + $0x13b0] sm:$0xff]
        %v895 = vld [vmem:[%s202 + $0x13b8] sm:$0xff]
        %v896 = vld [vmem:[%s202 + $0x13c0] sm:$0xff]
        %v897 = vld [vmem:[%s202 + $0x13c8] sm:$0xff]
        %v898 = vld [vmem:[%s202 + $0x13d0] sm:$0xff]
        %v899 = vld [vmem:[%s202 + $0x13d8] sm:$0xff]
        %v900 = vld [vmem:[%s202 + $0x13e0] sm:$0xff]
        %v901 = vld [vmem:[%s202 + $0x13e8] sm:$0xff]
        %v902 = vld [vmem:[%s202 + $0x13f0] sm:$0xff]
        %v903 = vld [vmem:[%s202 + $0x13f8] sm:$0xff]
        %v904 = vld [vmem:[%s202 + $0x1400] sm:$0xff]
        %v905 = vld [vmem:[%s202 + $0x1408] sm:$0xff]
        %v906 = vld [vmem:[%s202 + $0x1410] sm:$0xff]
        %v907 = vld [vmem:[%s202 + $0x1418] sm:$0xff]
        %v908 = vld [vmem:[%s202 + $0x1420] sm:$0xff]
        %v909 = vld [vmem:[%s202 + $0x1428] sm:$0xff]
        %v910 = vld [vmem:[%s202 + $0x1430] sm:$0xff]
        %v911 = vld [vmem:[%s202 + $0x1438] sm:$0xff]
        %v912 = vld [vmem:[%s202 + $0x1440] sm:$0xff]
        %v913 = vld [vmem:[%s202 + $0x1448] sm:$0xff]
        %v914 = vld [vmem:[%s202 + $0x1450] sm:$0xff]
        %v915 = vld [vmem:[%s202 + $0x1458] sm:$0xff]
        %v916 = vld [vmem:[%s202 + $0x1460] sm:$0xff]
        %v917 = vld [vmem:[%s202 + $0x1468] sm:$0xff]
        %v918 = vld [vmem:[%s202 + $0x1470] sm:$0xff]
        %v919 = vld [vmem:[%s202 + $0x1478] sm:$0xff]
        %v920 = vld [vmem:[%s202 + $0x1480] sm:$0xff]
        %v921 = vld [vmem:[%s202 + $0x1488] sm:$0xff]
        %v922 = vld [vmem:[%s202 + $0x1490] sm:$0xff]
        %v923 = vld [vmem:[%s202 + $0x1498] sm:$0xff]
        %v924 = vld [vmem:[%s202 + $0x14a0] sm:$0xff]
        %v925 = vld [vmem:[%s202 + $0x14a8] sm:$0xff]
        %v926 = vld [vmem:[%s202 + $0x14b0] sm:$0xff]
        %v927 = vld [vmem:[%s202 + $0x14b8] sm:$0xff]
        %v928 = vld [vmem:[%s202 + $0x14c0] sm:$0xff]
        %v929 = vld [vmem:[%s202 + $0x14c8] sm:$0xff]
        %v930 = vld [vmem:[%s202 + $0x14d0] sm:$0xff]
        %v931 = vld [vmem:[%s202 + $0x14d8] sm:$0xff]
        %v932 = vld [vmem:[%s202 + $0x14e0] sm:$0xff]
        %v933 = vld [vmem:[%s202 + $0x14e8] sm:$0xff]
        %v934 = vld [vmem:[%s202 + $0x14f0] sm:$0xff]
        %v935 = vld [vmem:[%s202 + $0x14f8] sm:$0xff]
        %v936 = vld [vmem:[%s202 + $0x1500] sm:$0xff]
        %v937 = vld [vmem:[%s202 + $0x1508] sm:$0xff]
        %v938 = vld [vmem:[%s202 + $0x1510] sm:$0xff]
        %v939 = vld [vmem:[%s202 + $0x1518] sm:$0xff]
        %v940 = vld [vmem:[%s202 + $0x1520] sm:$0xff]
        %v941 = vld [vmem:[%s202 + $0x1528] sm:$0xff]
        %v942 = vld [vmem:[%s202 + $0x1530] sm:$0xff]
        %v943 = vld [vmem:[%s202 + $0x1538] sm:$0xff]
        %v944 = vld [vmem:[%s202 + $0x1540] sm:$0xff]
        %v945 = vld [vmem:[%s202 + $0x1548] sm:$0xff]
        %v946 = vld [vmem:[%s202 + $0x1550] sm:$0xff]
        %v947 = vld [vmem:[%s202 + $0x1558] sm:$0xff]
        %v948 = vld [vmem:[%s202 + $0x1560] sm:$0xff]
        %v949 = vld [vmem:[%s202 + $0x1568] sm:$0xff]
        %v950 = vld [vmem:[%s202 + $0x1570] sm:$0xff]
        %v951 = vld [vmem:[%s202 + $0x1578] sm:$0xff]
        %v952 = vld [vmem:[%s202 + $0x1580] sm:$0xff]
        %v953 = vld [vmem:[%s202 + $0x1588] sm:$0xff]
        %v954 = vld [vmem:[%s202 + $0x1590] sm:$0xff]
        %v955 = vld [vmem:[%s202 + $0x1598] sm:$0xff]
        %v956 = vld [vmem:[%s202 + $0x15a0] sm:$0xff]
        %v957 = vld [vmem:[%s202 + $0x15a8] sm:$0xff]
        %v958 = vld [vmem:[%s202 + $0x15b0] sm:$0xff]
        %v959 = vld [vmem:[%s202 + $0x15b8] sm:$0xff]
        %v960 = vld [vmem:[%s202 + $0x15c0] sm:$0xff]
        %v961 = vld [vmem:[%s202 + $0x15c8] sm:$0xff]
        %v962 = vld [vmem:[%s202 + $0x15d0] sm:$0xff]
        %v963 = vld [vmem:[%s202 + $0x15d8] sm:$0xff]
        %v964 = vld [vmem:[%s202 + $0x15e0] sm:$0xff]
        %v965 = vld [vmem:[%s202 + $0x15e8] sm:$0xff]
        %v966 = vld [vmem:[%s202 + $0x15f0] sm:$0xff]
        %v967 = vld [vmem:[%s202 + $0x15f8] sm:$0xff]
        %v968 = vld [vmem:[%s211] sm:$0xf]
        %v970 = vlaneseq
        %v971 = vshrl.u32 %v970, 7
        %v972 = vsub.s32 0, %v971
        %v973 = vrot.slane %v968, %v972
        %v974 = vlaneseq
        %v975 = vshrl.u32 %v974, 7
        %v976 = vsub.s32 1, %v975
        %v977 = vrot.slane %v968, %v976
        %v978 = vlaneseq
        %v979 = vshrl.u32 %v978, 7
        %v980 = vsub.s32 2, %v979
        %v981 = vrot.slane %v968, %v980
        %v982 = vlaneseq
        %v983 = vshrl.u32 %v982, 7
        %v984 = vsub.s32 3, %v983
        %v985 = vrot.slane %v968, %v984
        %v1012 = vunpack.c.l.b16 %v242
        %v1013 = vunpack.c.h.b16 %v242
        %v1014 = vunpack.c.l.b16 %v243
        %v1015 = vunpack.c.h.b16 %v243
        %v1016 = vunpack.c.l.b16 %v244
        %v1017 = vunpack.c.h.b16 %v244
        %v1018 = vunpack.c.l.b16 %v245
        %v1019 = vunpack.c.h.b16 %v245
        %v1020 = vunpack.c.l.b16 %v246
        %v1021 = vunpack.c.h.b16 %v246
        %v1022 = vunpack.c.l.b16 %v247
        %v1023 = vunpack.c.h.b16 %v247
        %v1024 = vunpack.c.l.b16 %v248
        %v1025 = vunpack.c.h.b16 %v248
        %v1026 = vunpack.c.l.b16 %v249
        %v1027 = vunpack.c.h.b16 %v249
        %v1028 = vunpack.c.l.b16 %v250
        %v1029 = vunpack.c.h.b16 %v250
        %v1030 = vunpack.c.l.b16 %v251
        %v1031 = vunpack.c.h.b16 %v251
        %v1032 = vunpack.c.l.b16 %v252
        %v1033 = vunpack.c.h.b16 %v252
        %v1034 = vunpack.c.l.b16 %v253
        %v1035 = vunpack.c.h.b16 %v253
        %v1036 = vunpack.c.l.b16 %v254
        %v1037 = vunpack.c.h.b16 %v254
        %v1038 = vunpack.c.l.b16 %v255
        %v1039 = vunpack.c.h.b16 %v255
        %v1040 = vunpack.c.l.b16 %v256
        %v1041 = vunpack.c.h.b16 %v256
        %v1042 = vunpack.c.l.b16 %v257
        %v1043 = vunpack.c.h.b16 %v257
        %v1044 = vunpack.c.l.b16 %v258
        %v1045 = vunpack.c.h.b16 %v258
        %v1046 = vunpack.c.l.b16 %v259
        %v1047 = vunpack.c.h.b16 %v259
        %v1048 = vunpack.c.l.b16 %v260
        %v1049 = vunpack.c.h.b16 %v260
        %v1050 = vunpack.c.l.b16 %v261
        %v1051 = vunpack.c.h.b16 %v261
        %v1052 = vunpack.c.l.b16 %v262
        %v1053 = vunpack.c.h.b16 %v262
        %v1054 = vunpack.c.l.b16 %v263
        %v1055 = vunpack.c.h.b16 %v263
        %v1056 = vpack.c.b16 %v1034, %v1012
        %v1057 = vpack.c.b16 %v1035, %v1013
        %v1058 = vpack.c.b16 %v1036, %v1014
        %v1059 = vpack.c.b16 %v1037, %v1015
        %v1060 = vpack.c.b16 %v1038, %v1016
        %v1061 = vpack.c.b16 %v1039, %v1017
        %v1062 = vpack.c.b16 %v1040, %v1018
        %v1063 = vpack.c.b16 %v1041, %v1019
        %v1064 = vpack.c.b16 %v1042, %v1020
        %v1065 = vpack.c.b16 %v1043, %v1021
        %v1066 = vpack.c.b16 %v1044, %v1022
        %v1067 = vpack.c.b16 %v1045, %v1023
        %v1068 = vpack.c.b16 %v1046, %v1024
        %v1069 = vpack.c.b16 %v1047, %v1025
        %v1070 = vpack.c.b16 %v1048, %v1026
        %v1071 = vpack.c.b16 %v1049, %v1027
        %v1072 = vpack.c.b16 %v1050, %v1028
        %v1073 = vpack.c.b16 %v1051, %v1029
        %v1074 = vpack.c.b16 %v1052, %v1030
        %v1075 = vpack.c.b16 %v1053, %v1031
        %v1076 = vpack.c.b16 %v1054, %v1032
        %v1077 = vpack.c.b16 %v1055, %v1033
        %v1804 = vunpack.c.l.b16 %v264
        %v1805 = vunpack.c.h.b16 %v264
        %v1806 = vunpack.c.l.b16 %v265
        %v1807 = vunpack.c.h.b16 %v265
        %v1808 = vunpack.c.l.b16 %v266
        %v1809 = vunpack.c.h.b16 %v266
        %v1810 = vunpack.c.l.b16 %v267
        %v1811 = vunpack.c.h.b16 %v267
        %v1812 = vunpack.c.l.b16 %v268
        %v1813 = vunpack.c.h.b16 %v268
        %v1814 = vunpack.c.l.b16 %v269
        %v1815 = vunpack.c.h.b16 %v269
        %v1816 = vunpack.c.l.b16 %v270
        %v1817 = vunpack.c.h.b16 %v270
        %v1818 = vunpack.c.l.b16 %v271
        %v1819 = vunpack.c.h.b16 %v271
        %v1820 = vunpack.c.l.b16 %v272
        %v1821 = vunpack.c.h.b16 %v272
        %v1822 = vunpack.c.l.b16 %v273
        %v1823 = vunpack.c.h.b16 %v273
        %v1824 = vunpack.c.l.b16 %v274
        %v1825 = vunpack.c.h.b16 %v274
        %v1826 = vunpack.c.l.b16 %v275
        %v1827 = vunpack.c.h.b16 %v275
        %v1828 = vunpack.c.l.b16 %v276
        %v1829 = vunpack.c.h.b16 %v276
        %v1830 = vunpack.c.l.b16 %v277
        %v1831 = vunpack.c.h.b16 %v277
        %v1832 = vunpack.c.l.b16 %v278
        %v1833 = vunpack.c.h.b16 %v278
        %v1834 = vunpack.c.l.b16 %v279
        %v1835 = vunpack.c.h.b16 %v279
        %v1836 = vunpack.c.l.b16 %v280
        %v1837 = vunpack.c.h.b16 %v280
        %v1838 = vunpack.c.l.b16 %v281
        %v1839 = vunpack.c.h.b16 %v281
        %v1840 = vunpack.c.l.b16 %v282
        %v1841 = vunpack.c.h.b16 %v282
        %v1842 = vunpack.c.l.b16 %v283
        %v1843 = vunpack.c.h.b16 %v283
        %v1844 = vunpack.c.l.b16 %v284
        %v1845 = vunpack.c.h.b16 %v284
        %v1846 = vunpack.c.l.b16 %v285
        %v1847 = vunpack.c.h.b16 %v285
        %v1848 = vunpack.c.l.b16 %v286
        %v1849 = vunpack.c.h.b16 %v286
        %v1850 = vunpack.c.l.b16 %v287
        %v1851 = vunpack.c.h.b16 %v287
        %v1852 = vunpack.c.l.b16 %v288
        %v1853 = vunpack.c.h.b16 %v288
        %v1854 = vunpack.c.l.b16 %v289
        %v1855 = vunpack.c.h.b16 %v289
        %v1856 = vunpack.c.l.b16 %v290
        %v1857 = vunpack.c.h.b16 %v290
        %v1858 = vunpack.c.l.b16 %v291
        %v1859 = vunpack.c.h.b16 %v291
        %v1860 = vunpack.c.l.b16 %v292
        %v1861 = vunpack.c.h.b16 %v292
        %v1862 = vunpack.c.l.b16 %v293
        %v1863 = vunpack.c.h.b16 %v293
        %v1864 = vunpack.c.l.b16 %v294
        %v1865 = vunpack.c.h.b16 %v294
        %v1866 = vunpack.c.l.b16 %v295
        %v1867 = vunpack.c.h.b16 %v295
        %v1868 = vunpack.c.l.b16 %v296
        %v1869 = vunpack.c.h.b16 %v296
        %v1870 = vunpack.c.l.b16 %v297
        %v1871 = vunpack.c.h.b16 %v297
        %v1872 = vunpack.c.l.b16 %v298
        %v1873 = vunpack.c.h.b16 %v298
        %v1874 = vunpack.c.l.b16 %v299
        %v1875 = vunpack.c.h.b16 %v299
        %v1876 = vunpack.c.l.b16 %v300
        %v1877 = vunpack.c.h.b16 %v300
        %v1878 = vunpack.c.l.b16 %v301
        %v1879 = vunpack.c.h.b16 %v301
        %v1880 = vunpack.c.l.b16 %v302
        %v1881 = vunpack.c.h.b16 %v302
        %v1882 = vunpack.c.l.b16 %v303
        %v1883 = vunpack.c.h.b16 %v303
        %v1884 = vunpack.c.l.b16 %v304
        %v1885 = vunpack.c.h.b16 %v304
        %v1886 = vunpack.c.l.b16 %v305
        %v1887 = vunpack.c.h.b16 %v305
        %v1888 = vunpack.c.l.b16 %v306
        %v1889 = vunpack.c.h.b16 %v306
        %v1890 = vunpack.c.l.b16 %v307
        %v1891 = vunpack.c.h.b16 %v307
        %v1892 = vunpack.c.l.b16 %v308
        %v1893 = vunpack.c.h.b16 %v308
        %v1894 = vunpack.c.l.b16 %v309
        %v1895 = vunpack.c.h.b16 %v309
        %v1896 = vunpack.c.l.b16 %v310
        %v1897 = vunpack.c.h.b16 %v310
        %v1898 = vunpack.c.l.b16 %v311
        %v1899 = vunpack.c.h.b16 %v311
        %v1900 = vunpack.c.l.b16 %v312
        %v1901 = vunpack.c.h.b16 %v312
        %v1902 = vunpack.c.l.b16 %v313
        %v1903 = vunpack.c.h.b16 %v313
        %v1904 = vunpack.c.l.b16 %v314
        %v1905 = vunpack.c.h.b16 %v314
        %v1906 = vunpack.c.l.b16 %v315
        %v1907 = vunpack.c.h.b16 %v315
        %v1908 = vunpack.c.l.b16 %v316
        %v1909 = vunpack.c.h.b16 %v316
        %v1910 = vunpack.c.l.b16 %v317
        %v1911 = vunpack.c.h.b16 %v317
        %v1912 = vunpack.c.l.b16 %v318
        %v1913 = vunpack.c.h.b16 %v318
        %v1914 = vunpack.c.l.b16 %v319
        %v1915 = vunpack.c.h.b16 %v319
        %v1916 = vunpack.c.l.b16 %v320
        %v1917 = vunpack.c.h.b16 %v320
        %v1918 = vunpack.c.l.b16 %v321
        %v1919 = vunpack.c.h.b16 %v321
        %v1920 = vunpack.c.l.b16 %v322
        %v1921 = vunpack.c.h.b16 %v322
        %v1922 = vunpack.c.l.b16 %v323
        %v1923 = vunpack.c.h.b16 %v323
        %v1924 = vunpack.c.l.b16 %v324
        %v1925 = vunpack.c.h.b16 %v324
        %v1926 = vunpack.c.l.b16 %v325
        %v1927 = vunpack.c.h.b16 %v325
        %v1928 = vunpack.c.l.b16 %v326
        %v1929 = vunpack.c.h.b16 %v326
        %v1930 = vunpack.c.l.b16 %v327
        %v1931 = vunpack.c.h.b16 %v327
        %v1932 = vunpack.c.l.b16 %v328
        %v1933 = vunpack.c.h.b16 %v328
        %v1934 = vunpack.c.l.b16 %v329
        %v1935 = vunpack.c.h.b16 %v329
        %v1936 = vunpack.c.l.b16 %v330
        %v1937 = vunpack.c.h.b16 %v330
        %v1938 = vunpack.c.l.b16 %v331
        %v1939 = vunpack.c.h.b16 %v331
        %v1940 = vunpack.c.l.b16 %v332
        %v1941 = vunpack.c.h.b16 %v332
        %v1942 = vunpack.c.l.b16 %v333
        %v1943 = vunpack.c.h.b16 %v333
        %v1944 = vunpack.c.l.b16 %v334
        %v1945 = vunpack.c.h.b16 %v334
        %v1946 = vunpack.c.l.b16 %v335
        %v1947 = vunpack.c.h.b16 %v335
        %v1948 = vunpack.c.l.b16 %v336
        %v1949 = vunpack.c.h.b16 %v336
        %v1950 = vunpack.c.l.b16 %v337
        %v1951 = vunpack.c.h.b16 %v337
        %v1952 = vunpack.c.l.b16 %v338
        %v1953 = vunpack.c.h.b16 %v338
        %v1954 = vunpack.c.l.b16 %v339
        %v1955 = vunpack.c.h.b16 %v339
        %v1956 = vunpack.c.l.b16 %v340
        %v1957 = vunpack.c.h.b16 %v340
        %v1958 = vunpack.c.l.b16 %v341
        %v1959 = vunpack.c.h.b16 %v341
        %v1960 = vunpack.c.l.b16 %v342
        %v1961 = vunpack.c.h.b16 %v342
        %v1962 = vunpack.c.l.b16 %v343
        %v1963 = vunpack.c.h.b16 %v343
        %v1964 = vunpack.c.l.b16 %v344
        %v1965 = vunpack.c.h.b16 %v344
        %v1966 = vunpack.c.l.b16 %v345
        %v1967 = vunpack.c.h.b16 %v345
        %v1968 = vunpack.c.l.b16 %v346
        %v1969 = vunpack.c.h.b16 %v346
        %v1970 = vunpack.c.l.b16 %v347
        %v1971 = vunpack.c.h.b16 %v347
        %v1972 = vunpack.c.l.b16 %v348
        %v1973 = vunpack.c.h.b16 %v348
        %v1974 = vunpack.c.l.b16 %v349
        %v1975 = vunpack.c.h.b16 %v349
        %v1976 = vunpack.c.l.b16 %v350
        %v1977 = vunpack.c.h.b16 %v350
        %v1978 = vunpack.c.l.b16 %v351
        %v1979 = vunpack.c.h.b16 %v351
        %v1980 = vunpack.c.l.b16 %v352
        %v1981 = vunpack.c.h.b16 %v352
        %v1982 = vunpack.c.l.b16 %v353
        %v1983 = vunpack.c.h.b16 %v353
        %v1984 = vunpack.c.l.b16 %v354
        %v1985 = vunpack.c.h.b16 %v354
        %v1986 = vunpack.c.l.b16 %v355
        %v1987 = vunpack.c.h.b16 %v355
        %v1988 = vunpack.c.l.b16 %v356
        %v1989 = vunpack.c.h.b16 %v356
        %v1990 = vunpack.c.l.b16 %v357
        %v1991 = vunpack.c.h.b16 %v357
        %v1992 = vunpack.c.l.b16 %v358
        %v1993 = vunpack.c.h.b16 %v358
        %v1994 = vunpack.c.l.b16 %v359
        %v1995 = vunpack.c.h.b16 %v359
        %v1996 = vunpack.c.l.b16 %v360
        %v1997 = vunpack.c.h.b16 %v360
        %v1998 = vunpack.c.l.b16 %v361
        %v1999 = vunpack.c.h.b16 %v361
        %v2000 = vunpack.c.l.b16 %v362
        %v2001 = vunpack.c.h.b16 %v362
        %v2002 = vunpack.c.l.b16 %v363
        %v2003 = vunpack.c.h.b16 %v363
        %v2004 = vunpack.c.l.b16 %v364
        %v2005 = vunpack.c.h.b16 %v364
        %v2006 = vunpack.c.l.b16 %v365
        %v2007 = vunpack.c.h.b16 %v365
        %v2008 = vunpack.c.l.b16 %v366
        %v2009 = vunpack.c.h.b16 %v366
        %v2010 = vunpack.c.l.b16 %v367
        %v2011 = vunpack.c.h.b16 %v367
        %v2012 = vunpack.c.l.b16 %v368
        %v2013 = vunpack.c.h.b16 %v368
        %v2014 = vunpack.c.l.b16 %v369
        %v2015 = vunpack.c.h.b16 %v369
        %v2016 = vunpack.c.l.b16 %v370
        %v2017 = vunpack.c.h.b16 %v370
        %v2018 = vunpack.c.l.b16 %v371
        %v2019 = vunpack.c.h.b16 %v371
        %v2020 = vunpack.c.l.b16 %v372
        %v2021 = vunpack.c.h.b16 %v372
        %v2022 = vunpack.c.l.b16 %v373
        %v2023 = vunpack.c.h.b16 %v373
        %v2024 = vunpack.c.l.b16 %v374
        %v2025 = vunpack.c.h.b16 %v374
        %v2026 = vunpack.c.l.b16 %v375
        %v2027 = vunpack.c.h.b16 %v375
        %v2028 = vunpack.c.l.b16 %v376
        %v2029 = vunpack.c.h.b16 %v376
        %v2030 = vunpack.c.l.b16 %v377
        %v2031 = vunpack.c.h.b16 %v377
        %v2032 = vunpack.c.l.b16 %v378
        %v2033 = vunpack.c.h.b16 %v378
        %v2034 = vunpack.c.l.b16 %v379
        %v2035 = vunpack.c.h.b16 %v379
        %v2036 = vunpack.c.l.b16 %v380
        %v2037 = vunpack.c.h.b16 %v380
        %v2038 = vunpack.c.l.b16 %v381
        %v2039 = vunpack.c.h.b16 %v381
        %v2040 = vunpack.c.l.b16 %v382
        %v2041 = vunpack.c.h.b16 %v382
        %v2042 = vunpack.c.l.b16 %v383
        %v2043 = vunpack.c.h.b16 %v383
        %v2044 = vunpack.c.l.b16 %v384
        %v2045 = vunpack.c.h.b16 %v384
        %v2046 = vunpack.c.l.b16 %v385
        %v2047 = vunpack.c.h.b16 %v385
        %v2048 = vunpack.c.l.b16 %v386
        %v2049 = vunpack.c.h.b16 %v386
        %v2050 = vunpack.c.l.b16 %v387
        %v2051 = vunpack.c.h.b16 %v387
        %v2052 = vunpack.c.l.b16 %v388
        %v2053 = vunpack.c.h.b16 %v388
        %v2054 = vunpack.c.l.b16 %v389
        %v2055 = vunpack.c.h.b16 %v389
        %v2056 = vunpack.c.l.b16 %v390
        %v2057 = vunpack.c.h.b16 %v390
        %v2058 = vunpack.c.l.b16 %v391
        %v2059 = vunpack.c.h.b16 %v391
        %v2060 = vunpack.c.l.b16 %v392
        %v2061 = vunpack.c.h.b16 %v392
        %v2062 = vunpack.c.l.b16 %v393
        %v2063 = vunpack.c.h.b16 %v393
        %v2064 = vunpack.c.l.b16 %v394
        %v2065 = vunpack.c.h.b16 %v394
        %v2066 = vunpack.c.l.b16 %v395
        %v2067 = vunpack.c.h.b16 %v395
        %v2068 = vunpack.c.l.b16 %v396
        %v2069 = vunpack.c.h.b16 %v396
        %v2070 = vunpack.c.l.b16 %v397
        %v2071 = vunpack.c.h.b16 %v397
        %v2072 = vunpack.c.l.b16 %v398
        %v2073 = vunpack.c.h.b16 %v398
        %v2074 = vunpack.c.l.b16 %v399
        %v2075 = vunpack.c.h.b16 %v399
        %v2076 = vunpack.c.l.b16 %v400
        %v2077 = vunpack.c.h.b16 %v400
        %v2078 = vunpack.c.l.b16 %v401
        %v2079 = vunpack.c.h.b16 %v401
        %v2080 = vunpack.c.l.b16 %v402
        %v2081 = vunpack.c.h.b16 %v402
        %v2082 = vunpack.c.l.b16 %v403
        %v2083 = vunpack.c.h.b16 %v403
        %v2084 = vunpack.c.l.b16 %v404
        %v2085 = vunpack.c.h.b16 %v404
        %v2086 = vunpack.c.l.b16 %v405
        %v2087 = vunpack.c.h.b16 %v405
        %v2088 = vunpack.c.l.b16 %v406
        %v2089 = vunpack.c.h.b16 %v406
        %v2090 = vunpack.c.l.b16 %v407
        %v2091 = vunpack.c.h.b16 %v407
        %v2092 = vunpack.c.l.b16 %v408
        %v2093 = vunpack.c.h.b16 %v408
        %v2094 = vunpack.c.l.b16 %v409
        %v2095 = vunpack.c.h.b16 %v409
        %v2096 = vunpack.c.l.b16 %v410
        %v2097 = vunpack.c.h.b16 %v410
        %v2098 = vunpack.c.l.b16 %v411
        %v2099 = vunpack.c.h.b16 %v411
        %v2100 = vunpack.c.l.b16 %v412
        %v2101 = vunpack.c.h.b16 %v412
        %v2102 = vunpack.c.l.b16 %v413
        %v2103 = vunpack.c.h.b16 %v413
        %v2104 = vunpack.c.l.b16 %v414
        %v2105 = vunpack.c.h.b16 %v414
        %v2106 = vunpack.c.l.b16 %v415
        %v2107 = vunpack.c.h.b16 %v415
        %v2108 = vunpack.c.l.b16 %v416
        %v2109 = vunpack.c.h.b16 %v416
        %v2110 = vunpack.c.l.b16 %v417
        %v2111 = vunpack.c.h.b16 %v417
        %v2112 = vunpack.c.l.b16 %v418
        %v2113 = vunpack.c.h.b16 %v418
        %v2114 = vunpack.c.l.b16 %v419
        %v2115 = vunpack.c.h.b16 %v419
        %v2116 = vunpack.c.l.b16 %v420
        %v2117 = vunpack.c.h.b16 %v420
        %v2118 = vunpack.c.l.b16 %v421
        %v2119 = vunpack.c.h.b16 %v421
        %v2120 = vunpack.c.l.b16 %v422
        %v2121 = vunpack.c.h.b16 %v422
        %v2122 = vunpack.c.l.b16 %v423
        %v2123 = vunpack.c.h.b16 %v423
        %v2124 = vunpack.c.l.b16 %v424
        %v2125 = vunpack.c.h.b16 %v424
        %v2126 = vunpack.c.l.b16 %v425
        %v2127 = vunpack.c.h.b16 %v425
        %v2128 = vunpack.c.l.b16 %v426
        %v2129 = vunpack.c.h.b16 %v426
        %v2130 = vunpack.c.l.b16 %v427
        %v2131 = vunpack.c.h.b16 %v427
        %v2132 = vunpack.c.l.b16 %v428
        %v2133 = vunpack.c.h.b16 %v428
        %v2134 = vunpack.c.l.b16 %v429
        %v2135 = vunpack.c.h.b16 %v429
        %v2136 = vunpack.c.l.b16 %v430
        %v2137 = vunpack.c.h.b16 %v430
        %v2138 = vunpack.c.l.b16 %v431
        %v2139 = vunpack.c.h.b16 %v431
        %v2140 = vunpack.c.l.b16 %v432
        %v2141 = vunpack.c.h.b16 %v432
        %v2142 = vunpack.c.l.b16 %v433
        %v2143 = vunpack.c.h.b16 %v433
        %v2144 = vunpack.c.l.b16 %v434
        %v2145 = vunpack.c.h.b16 %v434
        %v2146 = vunpack.c.l.b16 %v435
        %v2147 = vunpack.c.h.b16 %v435
        %v2148 = vunpack.c.l.b16 %v436
        %v2149 = vunpack.c.h.b16 %v436
        %v2150 = vunpack.c.l.b16 %v437
        %v2151 = vunpack.c.h.b16 %v437
        %v2152 = vunpack.c.l.b16 %v438
        %v2153 = vunpack.c.h.b16 %v438
        %v2154 = vunpack.c.l.b16 %v439
        %v2155 = vunpack.c.h.b16 %v439
        %v2156 = vunpack.c.l.b16 %v440
        %v2157 = vunpack.c.h.b16 %v440
        %v2158 = vunpack.c.l.b16 %v441
        %v2159 = vunpack.c.h.b16 %v441
        %v2160 = vunpack.c.l.b16 %v442
        %v2161 = vunpack.c.h.b16 %v442
        %v2162 = vunpack.c.l.b16 %v443
        %v2163 = vunpack.c.h.b16 %v443
        %v2164 = vunpack.c.l.b16 %v444
        %v2165 = vunpack.c.h.b16 %v444
        %v2166 = vunpack.c.l.b16 %v445
        %v2167 = vunpack.c.h.b16 %v445
        %v2168 = vunpack.c.l.b16 %v446
        %v2169 = vunpack.c.h.b16 %v446
        %v2170 = vunpack.c.l.b16 %v447
        %v2171 = vunpack.c.h.b16 %v447
        %v2172 = vunpack.c.l.b16 %v448
        %v2173 = vunpack.c.h.b16 %v448
        %v2174 = vunpack.c.l.b16 %v449
        %v2175 = vunpack.c.h.b16 %v449
        %v2176 = vunpack.c.l.b16 %v450
        %v2177 = vunpack.c.h.b16 %v450
        %v2178 = vunpack.c.l.b16 %v451
        %v2179 = vunpack.c.h.b16 %v451
        %v2180 = vunpack.c.l.b16 %v452
        %v2181 = vunpack.c.h.b16 %v452
        %v2182 = vunpack.c.l.b16 %v453
        %v2183 = vunpack.c.h.b16 %v453
        %v2184 = vunpack.c.l.b16 %v454
        %v2185 = vunpack.c.h.b16 %v454
        %v2186 = vunpack.c.l.b16 %v455
        %v2187 = vunpack.c.h.b16 %v455
        %v2188 = vunpack.c.l.b16 %v456
        %v2189 = vunpack.c.h.b16 %v456
        %v2190 = vunpack.c.l.b16 %v457
        %v2191 = vunpack.c.h.b16 %v457
        %v2192 = vunpack.c.l.b16 %v458
        %v2193 = vunpack.c.h.b16 %v458
        %v2194 = vunpack.c.l.b16 %v459
        %v2195 = vunpack.c.h.b16 %v459
        %v2196 = vunpack.c.l.b16 %v460
        %v2197 = vunpack.c.h.b16 %v460
        %v2198 = vunpack.c.l.b16 %v461
        %v2199 = vunpack.c.h.b16 %v461
        %v2200 = vunpack.c.l.b16 %v462
        %v2201 = vunpack.c.h.b16 %v462
        %v2202 = vunpack.c.l.b16 %v463
        %v2203 = vunpack.c.h.b16 %v463
        %v2204 = vunpack.c.l.b16 %v464
        %v2205 = vunpack.c.h.b16 %v464
        %v2206 = vunpack.c.l.b16 %v465
        %v2207 = vunpack.c.h.b16 %v465
        %v2208 = vunpack.c.l.b16 %v466
        %v2209 = vunpack.c.h.b16 %v466
        %v2210 = vunpack.c.l.b16 %v467
        %v2211 = vunpack.c.h.b16 %v467
        %v2212 = vunpack.c.l.b16 %v468
        %v2213 = vunpack.c.h.b16 %v468
        %v2214 = vunpack.c.l.b16 %v469
        %v2215 = vunpack.c.h.b16 %v469
        %v2216 = vunpack.c.l.b16 %v470
        %v2217 = vunpack.c.h.b16 %v470
        %v2218 = vunpack.c.l.b16 %v471
        %v2219 = vunpack.c.h.b16 %v471
        %v2220 = vunpack.c.l.b16 %v472
        %v2221 = vunpack.c.h.b16 %v472
        %v2222 = vunpack.c.l.b16 %v473
        %v2223 = vunpack.c.h.b16 %v473
        %v2224 = vunpack.c.l.b16 %v474
        %v2225 = vunpack.c.h.b16 %v474
        %v2226 = vunpack.c.l.b16 %v475
        %v2227 = vunpack.c.h.b16 %v475
        %v2228 = vunpack.c.l.b16 %v476
        %v2229 = vunpack.c.h.b16 %v476
        %v2230 = vunpack.c.l.b16 %v477
        %v2231 = vunpack.c.h.b16 %v477
        %v2232 = vunpack.c.l.b16 %v478
        %v2233 = vunpack.c.h.b16 %v478
        %v2234 = vunpack.c.l.b16 %v479
        %v2235 = vunpack.c.h.b16 %v479
        %v2236 = vunpack.c.l.b16 %v480
        %v2237 = vunpack.c.h.b16 %v480
        %v2238 = vunpack.c.l.b16 %v481
        %v2239 = vunpack.c.h.b16 %v481
        %v2240 = vunpack.c.l.b16 %v482
        %v2241 = vunpack.c.h.b16 %v482
        %v2242 = vunpack.c.l.b16 %v483
        %v2243 = vunpack.c.h.b16 %v483
        %v2244 = vunpack.c.l.b16 %v484
        %v2245 = vunpack.c.h.b16 %v484
        %v2246 = vunpack.c.l.b16 %v485
        %v2247 = vunpack.c.h.b16 %v485
        %v2248 = vunpack.c.l.b16 %v486
        %v2249 = vunpack.c.h.b16 %v486
        %v2250 = vunpack.c.l.b16 %v487
        %v2251 = vunpack.c.h.b16 %v487
        %v2252 = vunpack.c.l.b16 %v488
        %v2253 = vunpack.c.h.b16 %v488
        %v2254 = vunpack.c.l.b16 %v489
        %v2255 = vunpack.c.h.b16 %v489
        %v2256 = vunpack.c.l.b16 %v490
        %v2257 = vunpack.c.h.b16 %v490
        %v2258 = vunpack.c.l.b16 %v491
        %v2259 = vunpack.c.h.b16 %v491
        %v2260 = vunpack.c.l.b16 %v492
        %v2261 = vunpack.c.h.b16 %v492
        %v2262 = vunpack.c.l.b16 %v493
        %v2263 = vunpack.c.h.b16 %v493
        %v2264 = vunpack.c.l.b16 %v494
        %v2265 = vunpack.c.h.b16 %v494
        %v2266 = vunpack.c.l.b16 %v495
        %v2267 = vunpack.c.h.b16 %v495
        %v2268 = vunpack.c.l.b16 %v496
        %v2269 = vunpack.c.h.b16 %v496
        %v2270 = vunpack.c.l.b16 %v497
        %v2271 = vunpack.c.h.b16 %v497
        %v2272 = vunpack.c.l.b16 %v498
        %v2273 = vunpack.c.h.b16 %v498
        %v2274 = vunpack.c.l.b16 %v499
        %v2275 = vunpack.c.h.b16 %v499
        %v2276 = vunpack.c.l.b16 %v500
        %v2277 = vunpack.c.h.b16 %v500
        %v2278 = vunpack.c.l.b16 %v501
        %v2279 = vunpack.c.h.b16 %v501
        %v2280 = vunpack.c.l.b16 %v502
        %v2281 = vunpack.c.h.b16 %v502
        %v2282 = vunpack.c.l.b16 %v503
        %v2283 = vunpack.c.h.b16 %v503
        %v2284 = vunpack.c.l.b16 %v504
        %v2285 = vunpack.c.h.b16 %v504
        %v2286 = vunpack.c.l.b16 %v505
        %v2287 = vunpack.c.h.b16 %v505
        %v2288 = vunpack.c.l.b16 %v506
        %v2289 = vunpack.c.h.b16 %v506
        %v2290 = vunpack.c.l.b16 %v507
        %v2291 = vunpack.c.h.b16 %v507
        %v2292 = vunpack.c.l.b16 %v508
        %v2293 = vunpack.c.h.b16 %v508
        %v2294 = vunpack.c.l.b16 %v509
        %v2295 = vunpack.c.h.b16 %v509
        %v2296 = vunpack.c.l.b16 %v510
        %v2297 = vunpack.c.h.b16 %v510
        %v2298 = vunpack.c.l.b16 %v511
        %v2299 = vunpack.c.h.b16 %v511
        %v2300 = vunpack.c.l.b16 %v512
        %v2301 = vunpack.c.h.b16 %v512
        %v2302 = vunpack.c.l.b16 %v513
        %v2303 = vunpack.c.h.b16 %v513
        %v2304 = vunpack.c.l.b16 %v514
        %v2305 = vunpack.c.h.b16 %v514
        %v2306 = vunpack.c.l.b16 %v515
        %v2307 = vunpack.c.h.b16 %v515
        %v2308 = vunpack.c.l.b16 %v516
        %v2309 = vunpack.c.h.b16 %v516
        %v2310 = vunpack.c.l.b16 %v517
        %v2311 = vunpack.c.h.b16 %v517
        %v2312 = vunpack.c.l.b16 %v518
        %v2313 = vunpack.c.h.b16 %v518
        %v2314 = vunpack.c.l.b16 %v519
        %v2315 = vunpack.c.h.b16 %v519
        %v2316 = vunpack.c.l.b16 %v520
        %v2317 = vunpack.c.h.b16 %v520
        %v2318 = vunpack.c.l.b16 %v521
        %v2319 = vunpack.c.h.b16 %v521
        %v2320 = vunpack.c.l.b16 %v522
        %v2321 = vunpack.c.h.b16 %v522
        %v2322 = vunpack.c.l.b16 %v523
        %v2323 = vunpack.c.h.b16 %v523
        %v2324 = vunpack.c.l.b16 %v524
        %v2325 = vunpack.c.h.b16 %v524
        %v2326 = vunpack.c.l.b16 %v525
        %v2327 = vunpack.c.h.b16 %v525
        %v2328 = vunpack.c.l.b16 %v526
        %v2329 = vunpack.c.h.b16 %v526
        %v2330 = vunpack.c.l.b16 %v527
        %v2331 = vunpack.c.h.b16 %v527
        %v2332 = vunpack.c.l.b16 %v528
        %v2333 = vunpack.c.h.b16 %v528
        %v2334 = vunpack.c.l.b16 %v529
        %v2335 = vunpack.c.h.b16 %v529
        %v2336 = vunpack.c.l.b16 %v530
        %v2337 = vunpack.c.h.b16 %v530
        %v2338 = vunpack.c.l.b16 %v531
        %v2339 = vunpack.c.h.b16 %v531
        %v2340 = vunpack.c.l.b16 %v532
        %v2341 = vunpack.c.h.b16 %v532
        %v2342 = vunpack.c.l.b16 %v533
        %v2343 = vunpack.c.h.b16 %v533
        %v2344 = vunpack.c.l.b16 %v534
        %v2345 = vunpack.c.h.b16 %v534
        %v2346 = vunpack.c.l.b16 %v535
        %v2347 = vunpack.c.h.b16 %v535
        %v2348 = vunpack.c.l.b16 %v536
        %v2349 = vunpack.c.h.b16 %v536
        %v2350 = vunpack.c.l.b16 %v537
        %v2351 = vunpack.c.h.b16 %v537
        %v2352 = vunpack.c.l.b16 %v538
        %v2353 = vunpack.c.h.b16 %v538
        %v2354 = vunpack.c.l.b16 %v539
        %v2355 = vunpack.c.h.b16 %v539
        %v2356 = vunpack.c.l.b16 %v540
        %v2357 = vunpack.c.h.b16 %v540
        %v2358 = vunpack.c.l.b16 %v541
        %v2359 = vunpack.c.h.b16 %v541
        %v2360 = vunpack.c.l.b16 %v542
        %v2361 = vunpack.c.h.b16 %v542
        %v2362 = vunpack.c.l.b16 %v543
        %v2363 = vunpack.c.h.b16 %v543
        %v2364 = vunpack.c.l.b16 %v544
        %v2365 = vunpack.c.h.b16 %v544
        %v2366 = vunpack.c.l.b16 %v545
        %v2367 = vunpack.c.h.b16 %v545
        %v2368 = vunpack.c.l.b16 %v546
        %v2369 = vunpack.c.h.b16 %v546
        %v2370 = vunpack.c.l.b16 %v547
        %v2371 = vunpack.c.h.b16 %v547
        %v2372 = vunpack.c.l.b16 %v548
        %v2373 = vunpack.c.h.b16 %v548
        %v2374 = vunpack.c.l.b16 %v549
        %v2375 = vunpack.c.h.b16 %v549
        %v2376 = vunpack.c.l.b16 %v550
        %v2377 = vunpack.c.h.b16 %v550
        %v2378 = vunpack.c.l.b16 %v551
        %v2379 = vunpack.c.h.b16 %v551
        %v2380 = vunpack.c.l.b16 %v552
        %v2381 = vunpack.c.h.b16 %v552
        %v2382 = vunpack.c.l.b16 %v553
        %v2383 = vunpack.c.h.b16 %v553
        %v2384 = vunpack.c.l.b16 %v554
        %v2385 = vunpack.c.h.b16 %v554
        %v2386 = vunpack.c.l.b16 %v555
        %v2387 = vunpack.c.h.b16 %v555
        %v2388 = vunpack.c.l.b16 %v556
        %v2389 = vunpack.c.h.b16 %v556
        %v2390 = vunpack.c.l.b16 %v557
        %v2391 = vunpack.c.h.b16 %v557
        %v2392 = vunpack.c.l.b16 %v558
        %v2393 = vunpack.c.h.b16 %v558
        %v2394 = vunpack.c.l.b16 %v559
        %v2395 = vunpack.c.h.b16 %v559
        %v2396 = vunpack.c.l.b16 %v560
        %v2397 = vunpack.c.h.b16 %v560
        %v2398 = vunpack.c.l.b16 %v561
        %v2399 = vunpack.c.h.b16 %v561
        %v2400 = vunpack.c.l.b16 %v562
        %v2401 = vunpack.c.h.b16 %v562
        %v2402 = vunpack.c.l.b16 %v563
        %v2403 = vunpack.c.h.b16 %v563
        %v2404 = vunpack.c.l.b16 %v564
        %v2405 = vunpack.c.h.b16 %v564
        %v2406 = vunpack.c.l.b16 %v565
        %v2407 = vunpack.c.h.b16 %v565
        %v2408 = vunpack.c.l.b16 %v566
        %v2409 = vunpack.c.h.b16 %v566
        %v2410 = vunpack.c.l.b16 %v567
        %v2411 = vunpack.c.h.b16 %v567
        %v2412 = vunpack.c.l.b16 %v568
        %v2413 = vunpack.c.h.b16 %v568
        %v2414 = vunpack.c.l.b16 %v569
        %v2415 = vunpack.c.h.b16 %v569
        %v2416 = vunpack.c.l.b16 %v570
        %v2417 = vunpack.c.h.b16 %v570
        %v2418 = vunpack.c.l.b16 %v571
        %v2419 = vunpack.c.h.b16 %v571
        %v2420 = vunpack.c.l.b16 %v572
        %v2421 = vunpack.c.h.b16 %v572
        %v2422 = vunpack.c.l.b16 %v573
        %v2423 = vunpack.c.h.b16 %v573
        %v2424 = vunpack.c.l.b16 %v574
        %v2425 = vunpack.c.h.b16 %v574
        %v2426 = vunpack.c.l.b16 %v575
        %v2427 = vunpack.c.h.b16 %v575
        %v2428 = vunpack.c.l.b16 %v576
        %v2429 = vunpack.c.h.b16 %v576
        %v2430 = vunpack.c.l.b16 %v577
        %v2431 = vunpack.c.h.b16 %v577
        %v2432 = vunpack.c.l.b16 %v578
        %v2433 = vunpack.c.h.b16 %v578
        %v2434 = vunpack.c.l.b16 %v579
        %v2435 = vunpack.c.h.b16 %v579
        %v2436 = vunpack.c.l.b16 %v580
        %v2437 = vunpack.c.h.b16 %v580
        %v2438 = vunpack.c.l.b16 %v581
        %v2439 = vunpack.c.h.b16 %v581
        %v2440 = vunpack.c.l.b16 %v582
        %v2441 = vunpack.c.h.b16 %v582
        %v2442 = vunpack.c.l.b16 %v583
        %v2443 = vunpack.c.h.b16 %v583
        %v2444 = vunpack.c.l.b16 %v584
        %v2445 = vunpack.c.h.b16 %v584
        %v2446 = vunpack.c.l.b16 %v585
        %v2447 = vunpack.c.h.b16 %v585
        %v2448 = vunpack.c.l.b16 %v586
        %v2449 = vunpack.c.h.b16 %v586
        %v2450 = vunpack.c.l.b16 %v587
        %v2451 = vunpack.c.h.b16 %v587
        %v2452 = vunpack.c.l.b16 %v588
        %v2453 = vunpack.c.h.b16 %v588
        %v2454 = vunpack.c.l.b16 %v589
        %v2455 = vunpack.c.h.b16 %v589
        %v2456 = vunpack.c.l.b16 %v590
        %v2457 = vunpack.c.h.b16 %v590
        %v2458 = vunpack.c.l.b16 %v591
        %v2459 = vunpack.c.h.b16 %v591
        %v2460 = vunpack.c.l.b16 %v592
        %v2461 = vunpack.c.h.b16 %v592
        %v2462 = vunpack.c.l.b16 %v593
        %v2463 = vunpack.c.h.b16 %v593
        %v2464 = vunpack.c.l.b16 %v594
        %v2465 = vunpack.c.h.b16 %v594
        %v2466 = vunpack.c.l.b16 %v595
        %v2467 = vunpack.c.h.b16 %v595
        %v2468 = vunpack.c.l.b16 %v596
        %v2469 = vunpack.c.h.b16 %v596
        %v2470 = vunpack.c.l.b16 %v597
        %v2471 = vunpack.c.h.b16 %v597
        %v2472 = vunpack.c.l.b16 %v598
        %v2473 = vunpack.c.h.b16 %v598
        %v2474 = vunpack.c.l.b16 %v599
        %v2475 = vunpack.c.h.b16 %v599
        %v2476 = vunpack.c.l.b16 %v600
        %v2477 = vunpack.c.h.b16 %v600
        %v2478 = vunpack.c.l.b16 %v601
        %v2479 = vunpack.c.h.b16 %v601
        %v2480 = vunpack.c.l.b16 %v602
        %v2481 = vunpack.c.h.b16 %v602
        %v2482 = vunpack.c.l.b16 %v603
        %v2483 = vunpack.c.h.b16 %v603
        %v2484 = vunpack.c.l.b16 %v604
        %v2485 = vunpack.c.h.b16 %v604
        %v2486 = vunpack.c.l.b16 %v605
        %v2487 = vunpack.c.h.b16 %v605
        %v2488 = vunpack.c.l.b16 %v606
        %v2489 = vunpack.c.h.b16 %v606
        %v2490 = vunpack.c.l.b16 %v607
        %v2491 = vunpack.c.h.b16 %v607
        %v2492 = vunpack.c.l.b16 %v608
        %v2493 = vunpack.c.h.b16 %v608
        %v2494 = vunpack.c.l.b16 %v609
        %v2495 = vunpack.c.h.b16 %v609
        %v2496 = vunpack.c.l.b16 %v610
        %v2497 = vunpack.c.h.b16 %v610
        %v2498 = vunpack.c.l.b16 %v611
        %v2499 = vunpack.c.h.b16 %v611
        %v2500 = vunpack.c.l.b16 %v612
        %v2501 = vunpack.c.h.b16 %v612
        %v2502 = vunpack.c.l.b16 %v613
        %v2503 = vunpack.c.h.b16 %v613
        %v2504 = vunpack.c.l.b16 %v614
        %v2505 = vunpack.c.h.b16 %v614
        %v2506 = vunpack.c.l.b16 %v615
        %v2507 = vunpack.c.h.b16 %v615
        %v2508 = vunpack.c.l.b16 %v616
        %v2509 = vunpack.c.h.b16 %v616
        %v2510 = vunpack.c.l.b16 %v617
        %v2511 = vunpack.c.h.b16 %v617
        %v2512 = vunpack.c.l.b16 %v618
        %v2513 = vunpack.c.h.b16 %v618
        %v2514 = vunpack.c.l.b16 %v619
        %v2515 = vunpack.c.h.b16 %v619
        %v2516 = vunpack.c.l.b16 %v620
        %v2517 = vunpack.c.h.b16 %v620
        %v2518 = vunpack.c.l.b16 %v621
        %v2519 = vunpack.c.h.b16 %v621
        %v2520 = vunpack.c.l.b16 %v622
        %v2521 = vunpack.c.h.b16 %v622
        %v2522 = vunpack.c.l.b16 %v623
        %v2523 = vunpack.c.h.b16 %v623
        %v2524 = vunpack.c.l.b16 %v624
        %v2525 = vunpack.c.h.b16 %v624
        %v2526 = vunpack.c.l.b16 %v625
        %v2527 = vunpack.c.h.b16 %v625
        %v2528 = vunpack.c.l.b16 %v626
        %v2529 = vunpack.c.h.b16 %v626
        %v2530 = vunpack.c.l.b16 %v627
        %v2531 = vunpack.c.h.b16 %v627
        %v2532 = vunpack.c.l.b16 %v628
        %v2533 = vunpack.c.h.b16 %v628
        %v2534 = vunpack.c.l.b16 %v629
        %v2535 = vunpack.c.h.b16 %v629
        %v2536 = vunpack.c.l.b16 %v630
        %v2537 = vunpack.c.h.b16 %v630
        %v2538 = vunpack.c.l.b16 %v631
        %v2539 = vunpack.c.h.b16 %v631
        %v2540 = vunpack.c.l.b16 %v632
        %v2541 = vunpack.c.h.b16 %v632
        %v2542 = vunpack.c.l.b16 %v633
        %v2543 = vunpack.c.h.b16 %v633
        %v2544 = vunpack.c.l.b16 %v634
        %v2545 = vunpack.c.h.b16 %v634
        %v2546 = vunpack.c.l.b16 %v635
        %v2547 = vunpack.c.h.b16 %v635
        %v2548 = vunpack.c.l.b16 %v636
        %v2549 = vunpack.c.h.b16 %v636
        %v2550 = vunpack.c.l.b16 %v637
        %v2551 = vunpack.c.h.b16 %v637
        %v2552 = vunpack.c.l.b16 %v638
        %v2553 = vunpack.c.h.b16 %v638
        %v2554 = vunpack.c.l.b16 %v639
        %v2555 = vunpack.c.h.b16 %v639
        %v2556 = vunpack.c.l.b16 %v640
        %v2557 = vunpack.c.h.b16 %v640
        %v2558 = vunpack.c.l.b16 %v641
        %v2559 = vunpack.c.h.b16 %v641
        %v2560 = vunpack.c.l.b16 %v642
        %v2561 = vunpack.c.h.b16 %v642
        %v2562 = vunpack.c.l.b16 %v643
        %v2563 = vunpack.c.h.b16 %v643
        %v2564 = vunpack.c.l.b16 %v644
        %v2565 = vunpack.c.h.b16 %v644
        %v2566 = vunpack.c.l.b16 %v645
        %v2567 = vunpack.c.h.b16 %v645
        %v2568 = vunpack.c.l.b16 %v646
        %v2569 = vunpack.c.h.b16 %v646
        %v2570 = vunpack.c.l.b16 %v647
        %v2571 = vunpack.c.h.b16 %v647
        %v2572 = vunpack.c.l.b16 %v648
        %v2573 = vunpack.c.h.b16 %v648
        %v2574 = vunpack.c.l.b16 %v649
        %v2575 = vunpack.c.h.b16 %v649
        %v2576 = vunpack.c.l.b16 %v650
        %v2577 = vunpack.c.h.b16 %v650
        %v2578 = vunpack.c.l.b16 %v651
        %v2579 = vunpack.c.h.b16 %v651
        %v2580 = vunpack.c.l.b16 %v652
        %v2581 = vunpack.c.h.b16 %v652
        %v2582 = vunpack.c.l.b16 %v653
        %v2583 = vunpack.c.h.b16 %v653
        %v2584 = vunpack.c.l.b16 %v654
        %v2585 = vunpack.c.h.b16 %v654
        %v2586 = vunpack.c.l.b16 %v655
        %v2587 = vunpack.c.h.b16 %v655
        %v2588 = vunpack.c.l.b16 %v656
        %v2589 = vunpack.c.h.b16 %v656
        %v2590 = vunpack.c.l.b16 %v657
        %v2591 = vunpack.c.h.b16 %v657
        %v2592 = vunpack.c.l.b16 %v658
        %v2593 = vunpack.c.h.b16 %v658
        %v2594 = vunpack.c.l.b16 %v659
        %v2595 = vunpack.c.h.b16 %v659
        %v2596 = vunpack.c.l.b16 %v660
        %v2597 = vunpack.c.h.b16 %v660
        %v2598 = vunpack.c.l.b16 %v661
        %v2599 = vunpack.c.h.b16 %v661
        %v2600 = vunpack.c.l.b16 %v662
        %v2601 = vunpack.c.h.b16 %v662
        %v2602 = vunpack.c.l.b16 %v663
        %v2603 = vunpack.c.h.b16 %v663
        %v2604 = vunpack.c.l.b16 %v664
        %v2605 = vunpack.c.h.b16 %v664
        %v2606 = vunpack.c.l.b16 %v665
        %v2607 = vunpack.c.h.b16 %v665
        %v2608 = vunpack.c.l.b16 %v666
        %v2609 = vunpack.c.h.b16 %v666
        %v2610 = vunpack.c.l.b16 %v667
        %v2611 = vunpack.c.h.b16 %v667
        %v2612 = vunpack.c.l.b16 %v668
        %v2613 = vunpack.c.h.b16 %v668
        %v2614 = vunpack.c.l.b16 %v669
        %v2615 = vunpack.c.h.b16 %v669
        %v2616 = vunpack.c.l.b16 %v670
        %v2617 = vunpack.c.h.b16 %v670
        %v2618 = vunpack.c.l.b16 %v671
        %v2619 = vunpack.c.h.b16 %v671
        %v2620 = vunpack.c.l.b16 %v672
        %v2621 = vunpack.c.h.b16 %v672
        %v2622 = vunpack.c.l.b16 %v673
        %v2623 = vunpack.c.h.b16 %v673
        %v2624 = vunpack.c.l.b16 %v674
        %v2625 = vunpack.c.h.b16 %v674
        %v2626 = vunpack.c.l.b16 %v675
        %v2627 = vunpack.c.h.b16 %v675
        %v2628 = vunpack.c.l.b16 %v676
        %v2629 = vunpack.c.h.b16 %v676
        %v2630 = vunpack.c.l.b16 %v677
        %v2631 = vunpack.c.h.b16 %v677
        %v2632 = vunpack.c.l.b16 %v678
        %v2633 = vunpack.c.h.b16 %v678
        %v2634 = vunpack.c.l.b16 %v679
        %v2635 = vunpack.c.h.b16 %v679
        %v2636 = vunpack.c.l.b16 %v680
        %v2637 = vunpack.c.h.b16 %v680
        %v2638 = vunpack.c.l.b16 %v681
        %v2639 = vunpack.c.h.b16 %v681
        %v2640 = vunpack.c.l.b16 %v682
        %v2641 = vunpack.c.h.b16 %v682
        %v2642 = vunpack.c.l.b16 %v683
        %v2643 = vunpack.c.h.b16 %v683
        %v2644 = vunpack.c.l.b16 %v684
        %v2645 = vunpack.c.h.b16 %v684
        %v2646 = vunpack.c.l.b16 %v685
        %v2647 = vunpack.c.h.b16 %v685
        %v2648 = vunpack.c.l.b16 %v686
        %v2649 = vunpack.c.h.b16 %v686
        %v2650 = vunpack.c.l.b16 %v687
        %v2651 = vunpack.c.h.b16 %v687
        %v2652 = vunpack.c.l.b16 %v688
        %v2653 = vunpack.c.h.b16 %v688
        %v2654 = vunpack.c.l.b16 %v689
        %v2655 = vunpack.c.h.b16 %v689
        %v2656 = vunpack.c.l.b16 %v690
        %v2657 = vunpack.c.h.b16 %v690
        %v2658 = vunpack.c.l.b16 %v691
        %v2659 = vunpack.c.h.b16 %v691
        %v2660 = vunpack.c.l.b16 %v692
        %v2661 = vunpack.c.h.b16 %v692
        %v2662 = vunpack.c.l.b16 %v693
        %v2663 = vunpack.c.h.b16 %v693
        %v2664 = vunpack.c.l.b16 %v694
        %v2665 = vunpack.c.h.b16 %v694
        %v2666 = vunpack.c.l.b16 %v695
        %v2667 = vunpack.c.h.b16 %v695
        %v2668 = vunpack.c.l.b16 %v696
        %v2669 = vunpack.c.h.b16 %v696
        %v2670 = vunpack.c.l.b16 %v697
        %v2671 = vunpack.c.h.b16 %v697
        %v2672 = vunpack.c.l.b16 %v698
        %v2673 = vunpack.c.h.b16 %v698
        %v2674 = vunpack.c.l.b16 %v699
        %v2675 = vunpack.c.h.b16 %v699
        %v2676 = vunpack.c.l.b16 %v700
        %v2677 = vunpack.c.h.b16 %v700
        %v2678 = vunpack.c.l.b16 %v701
        %v2679 = vunpack.c.h.b16 %v701
        %v2680 = vunpack.c.l.b16 %v702
        %v2681 = vunpack.c.h.b16 %v702
        %v2682 = vunpack.c.l.b16 %v703
        %v2683 = vunpack.c.h.b16 %v703
        %v2684 = vunpack.c.l.b16 %v704
        %v2685 = vunpack.c.h.b16 %v704
        %v2686 = vunpack.c.l.b16 %v705
        %v2687 = vunpack.c.h.b16 %v705
        %v2688 = vunpack.c.l.b16 %v706
        %v2689 = vunpack.c.h.b16 %v706
        %v2690 = vunpack.c.l.b16 %v707
        %v2691 = vunpack.c.h.b16 %v707
        %v2692 = vunpack.c.l.b16 %v708
        %v2693 = vunpack.c.h.b16 %v708
        %v2694 = vunpack.c.l.b16 %v709
        %v2695 = vunpack.c.h.b16 %v709
        %v2696 = vunpack.c.l.b16 %v710
        %v2697 = vunpack.c.h.b16 %v710
        %v2698 = vunpack.c.l.b16 %v711
        %v2699 = vunpack.c.h.b16 %v711
        %v2700 = vunpack.c.l.b16 %v712
        %v2701 = vunpack.c.h.b16 %v712
        %v2702 = vunpack.c.l.b16 %v713
        %v2703 = vunpack.c.h.b16 %v713
        %v2704 = vunpack.c.l.b16 %v714
        %v2705 = vunpack.c.h.b16 %v714
        %v2706 = vunpack.c.l.b16 %v715
        %v2707 = vunpack.c.h.b16 %v715
        %v2708 = vunpack.c.l.b16 %v716
        %v2709 = vunpack.c.h.b16 %v716
        %v2710 = vunpack.c.l.b16 %v717
        %v2711 = vunpack.c.h.b16 %v717
        %v2712 = vunpack.c.l.b16 %v718
        %v2713 = vunpack.c.h.b16 %v718
        %v2714 = vunpack.c.l.b16 %v719
        %v2715 = vunpack.c.h.b16 %v719
        %v2716 = vunpack.c.l.b16 %v720
        %v2717 = vunpack.c.h.b16 %v720
        %v2718 = vunpack.c.l.b16 %v721
        %v2719 = vunpack.c.h.b16 %v721
        %v2720 = vunpack.c.l.b16 %v722
        %v2721 = vunpack.c.h.b16 %v722
        %v2722 = vunpack.c.l.b16 %v723
        %v2723 = vunpack.c.h.b16 %v723
        %v2724 = vunpack.c.l.b16 %v724
        %v2725 = vunpack.c.h.b16 %v724
        %v2726 = vunpack.c.l.b16 %v725
        %v2727 = vunpack.c.h.b16 %v725
        %v2728 = vunpack.c.l.b16 %v726
        %v2729 = vunpack.c.h.b16 %v726
        %v2730 = vunpack.c.l.b16 %v727
        %v2731 = vunpack.c.h.b16 %v727
        %v2732 = vunpack.c.l.b16 %v728
        %v2733 = vunpack.c.h.b16 %v728
        %v2734 = vunpack.c.l.b16 %v729
        %v2735 = vunpack.c.h.b16 %v729
        %v2736 = vunpack.c.l.b16 %v730
        %v2737 = vunpack.c.h.b16 %v730
        %v2738 = vunpack.c.l.b16 %v731
        %v2739 = vunpack.c.h.b16 %v731
        %v2740 = vunpack.c.l.b16 %v732
        %v2741 = vunpack.c.h.b16 %v732
        %v2742 = vunpack.c.l.b16 %v733
        %v2743 = vunpack.c.h.b16 %v733
        %v2744 = vunpack.c.l.b16 %v734
        %v2745 = vunpack.c.h.b16 %v734
        %v2746 = vunpack.c.l.b16 %v735
        %v2747 = vunpack.c.h.b16 %v735
        %v2748 = vunpack.c.l.b16 %v736
        %v2749 = vunpack.c.h.b16 %v736
        %v2750 = vunpack.c.l.b16 %v737
        %v2751 = vunpack.c.h.b16 %v737
        %v2752 = vunpack.c.l.b16 %v738
        %v2753 = vunpack.c.h.b16 %v738
        %v2754 = vunpack.c.l.b16 %v739
        %v2755 = vunpack.c.h.b16 %v739
        %v2756 = vunpack.c.l.b16 %v740
        %v2757 = vunpack.c.h.b16 %v740
        %v2758 = vunpack.c.l.b16 %v741
        %v2759 = vunpack.c.h.b16 %v741
        %v2760 = vunpack.c.l.b16 %v742
        %v2761 = vunpack.c.h.b16 %v742
        %v2762 = vunpack.c.l.b16 %v743
        %v2763 = vunpack.c.h.b16 %v743
        %v2764 = vunpack.c.l.b16 %v744
        %v2765 = vunpack.c.h.b16 %v744
        %v2766 = vunpack.c.l.b16 %v745
        %v2767 = vunpack.c.h.b16 %v745
        %v2768 = vunpack.c.l.b16 %v746
        %v2769 = vunpack.c.h.b16 %v746
        %v2770 = vunpack.c.l.b16 %v747
        %v2771 = vunpack.c.h.b16 %v747
        %v2772 = vunpack.c.l.b16 %v748
        %v2773 = vunpack.c.h.b16 %v748
        %v2774 = vunpack.c.l.b16 %v749
        %v2775 = vunpack.c.h.b16 %v749
        %v2776 = vunpack.c.l.b16 %v750
        %v2777 = vunpack.c.h.b16 %v750
        %v2778 = vunpack.c.l.b16 %v751
        %v2779 = vunpack.c.h.b16 %v751
        %v2780 = vunpack.c.l.b16 %v752
        %v2781 = vunpack.c.h.b16 %v752
        %v2782 = vunpack.c.l.b16 %v753
        %v2783 = vunpack.c.h.b16 %v753
        %v2784 = vunpack.c.l.b16 %v754
        %v2785 = vunpack.c.h.b16 %v754
        %v2786 = vunpack.c.l.b16 %v755
        %v2787 = vunpack.c.h.b16 %v755
        %v2788 = vunpack.c.l.b16 %v756
        %v2789 = vunpack.c.h.b16 %v756
        %v2790 = vunpack.c.l.b16 %v757
        %v2791 = vunpack.c.h.b16 %v757
        %v2792 = vunpack.c.l.b16 %v758
        %v2793 = vunpack.c.h.b16 %v758
        %v2794 = vunpack.c.l.b16 %v759
        %v2795 = vunpack.c.h.b16 %v759
        %v2796 = vunpack.c.l.b16 %v760
        %v2797 = vunpack.c.h.b16 %v760
        %v2798 = vunpack.c.l.b16 %v761
        %v2799 = vunpack.c.h.b16 %v761
        %v2800 = vunpack.c.l.b16 %v762
        %v2801 = vunpack.c.h.b16 %v762
        %v2802 = vunpack.c.l.b16 %v763
        %v2803 = vunpack.c.h.b16 %v763
        %v2804 = vunpack.c.l.b16 %v764
        %v2805 = vunpack.c.h.b16 %v764
        %v2806 = vunpack.c.l.b16 %v765
        %v2807 = vunpack.c.h.b16 %v765
        %v2808 = vunpack.c.l.b16 %v766
        %v2809 = vunpack.c.h.b16 %v766
        %v2810 = vunpack.c.l.b16 %v767
        %v2811 = vunpack.c.h.b16 %v767
        %v2812 = vunpack.c.l.b16 %v768
        %v2813 = vunpack.c.h.b16 %v768
        %v2814 = vunpack.c.l.b16 %v769
        %v2815 = vunpack.c.h.b16 %v769
        %v2816 = vunpack.c.l.b16 %v770
        %v2817 = vunpack.c.h.b16 %v770
        %v2818 = vunpack.c.l.b16 %v771
        %v2819 = vunpack.c.h.b16 %v771
        %v2820 = vunpack.c.l.b16 %v772
        %v2821 = vunpack.c.h.b16 %v772
        %v2822 = vunpack.c.l.b16 %v773
        %v2823 = vunpack.c.h.b16 %v773
        %v2824 = vunpack.c.l.b16 %v774
        %v2825 = vunpack.c.h.b16 %v774
        %v2826 = vunpack.c.l.b16 %v775
        %v2827 = vunpack.c.h.b16 %v775
        %v2828 = vunpack.c.l.b16 %v776
        %v2829 = vunpack.c.h.b16 %v776
        %v2830 = vunpack.c.l.b16 %v777
        %v2831 = vunpack.c.h.b16 %v777
        %v2832 = vunpack.c.l.b16 %v778
        %v2833 = vunpack.c.h.b16 %v778
        %v2834 = vunpack.c.l.b16 %v779
        %v2835 = vunpack.c.h.b16 %v779
        %v2836 = vunpack.c.l.b16 %v780
        %v2837 = vunpack.c.h.b16 %v780
        %v2838 = vunpack.c.l.b16 %v781
        %v2839 = vunpack.c.h.b16 %v781
        %v2840 = vunpack.c.l.b16 %v782
        %v2841 = vunpack.c.h.b16 %v782
        %v2842 = vunpack.c.l.b16 %v783
        %v2843 = vunpack.c.h.b16 %v783
        %v2844 = vunpack.c.l.b16 %v784
        %v2845 = vunpack.c.h.b16 %v784
        %v2846 = vunpack.c.l.b16 %v785
        %v2847 = vunpack.c.h.b16 %v785
        %v2848 = vunpack.c.l.b16 %v786
        %v2849 = vunpack.c.h.b16 %v786
        %v2850 = vunpack.c.l.b16 %v787
        %v2851 = vunpack.c.h.b16 %v787
        %v2852 = vunpack.c.l.b16 %v788
        %v2853 = vunpack.c.h.b16 %v788
        %v2854 = vunpack.c.l.b16 %v789
        %v2855 = vunpack.c.h.b16 %v789
        %v2856 = vunpack.c.l.b16 %v790
        %v2857 = vunpack.c.h.b16 %v790
        %v2858 = vunpack.c.l.b16 %v791
        %v2859 = vunpack.c.h.b16 %v791
        %v2860 = vunpack.c.l.b16 %v792
        %v2861 = vunpack.c.h.b16 %v792
        %v2862 = vunpack.c.l.b16 %v793
        %v2863 = vunpack.c.h.b16 %v793
        %v2864 = vunpack.c.l.b16 %v794
        %v2865 = vunpack.c.h.b16 %v794
        %v2866 = vunpack.c.l.b16 %v795
        %v2867 = vunpack.c.h.b16 %v795
        %v2868 = vunpack.c.l.b16 %v796
        %v2869 = vunpack.c.h.b16 %v796
        %v2870 = vunpack.c.l.b16 %v797
        %v2871 = vunpack.c.h.b16 %v797
        %v2872 = vunpack.c.l.b16 %v798
        %v2873 = vunpack.c.h.b16 %v798
        %v2874 = vunpack.c.l.b16 %v799
        %v2875 = vunpack.c.h.b16 %v799
        %v2876 = vunpack.c.l.b16 %v800
        %v2877 = vunpack.c.h.b16 %v800
        %v2878 = vunpack.c.l.b16 %v801
        %v2879 = vunpack.c.h.b16 %v801
        %v2880 = vunpack.c.l.b16 %v802
        %v2881 = vunpack.c.h.b16 %v802
        %v2882 = vunpack.c.l.b16 %v803
        %v2883 = vunpack.c.h.b16 %v803
        %v2884 = vunpack.c.l.b16 %v804
        %v2885 = vunpack.c.h.b16 %v804
        %v2886 = vunpack.c.l.b16 %v805
        %v2887 = vunpack.c.h.b16 %v805
        %v2888 = vunpack.c.l.b16 %v806
        %v2889 = vunpack.c.h.b16 %v806
        %v2890 = vunpack.c.l.b16 %v807
        %v2891 = vunpack.c.h.b16 %v807
        %v2892 = vunpack.c.l.b16 %v808
        %v2893 = vunpack.c.h.b16 %v808
        %v2894 = vunpack.c.l.b16 %v809
        %v2895 = vunpack.c.h.b16 %v809
        %v2896 = vunpack.c.l.b16 %v810
        %v2897 = vunpack.c.h.b16 %v810
        %v2898 = vunpack.c.l.b16 %v811
        %v2899 = vunpack.c.h.b16 %v811
        %v2900 = vunpack.c.l.b16 %v812
        %v2901 = vunpack.c.h.b16 %v812
        %v2902 = vunpack.c.l.b16 %v813
        %v2903 = vunpack.c.h.b16 %v813
        %v2904 = vunpack.c.l.b16 %v814
        %v2905 = vunpack.c.h.b16 %v814
        %v2906 = vunpack.c.l.b16 %v815
        %v2907 = vunpack.c.h.b16 %v815
        %v2908 = vunpack.c.l.b16 %v816
        %v2909 = vunpack.c.h.b16 %v816
        %v2910 = vunpack.c.l.b16 %v817
        %v2911 = vunpack.c.h.b16 %v817
        %v2912 = vunpack.c.l.b16 %v818
        %v2913 = vunpack.c.h.b16 %v818
        %v2914 = vunpack.c.l.b16 %v819
        %v2915 = vunpack.c.h.b16 %v819
        %v2916 = vunpack.c.l.b16 %v820
        %v2917 = vunpack.c.h.b16 %v820
        %v2918 = vunpack.c.l.b16 %v821
        %v2919 = vunpack.c.h.b16 %v821
        %v2920 = vunpack.c.l.b16 %v822
        %v2921 = vunpack.c.h.b16 %v822
        %v2922 = vunpack.c.l.b16 %v823
        %v2923 = vunpack.c.h.b16 %v823
        %v2924 = vunpack.c.l.b16 %v824
        %v2925 = vunpack.c.h.b16 %v824
        %v2926 = vunpack.c.l.b16 %v825
        %v2927 = vunpack.c.h.b16 %v825
        %v2928 = vunpack.c.l.b16 %v826
        %v2929 = vunpack.c.h.b16 %v826
        %v2930 = vunpack.c.l.b16 %v827
        %v2931 = vunpack.c.h.b16 %v827
        %v2932 = vunpack.c.l.b16 %v828
        %v2933 = vunpack.c.h.b16 %v828
        %v2934 = vunpack.c.l.b16 %v829
        %v2935 = vunpack.c.h.b16 %v829
        %v2936 = vunpack.c.l.b16 %v830
        %v2937 = vunpack.c.h.b16 %v830
        %v2938 = vunpack.c.l.b16 %v831
        %v2939 = vunpack.c.h.b16 %v831
        %v2940 = vunpack.c.l.b16 %v832
        %v2941 = vunpack.c.h.b16 %v832
        %v2942 = vunpack.c.l.b16 %v833
        %v2943 = vunpack.c.h.b16 %v833
        %v2944 = vunpack.c.l.b16 %v834
        %v2945 = vunpack.c.h.b16 %v834
        %v2946 = vunpack.c.l.b16 %v835
        %v2947 = vunpack.c.h.b16 %v835
        %v2948 = vunpack.c.l.b16 %v836
        %v2949 = vunpack.c.h.b16 %v836
        %v2950 = vunpack.c.l.b16 %v837
        %v2951 = vunpack.c.h.b16 %v837
        %v2952 = vunpack.c.l.b16 %v838
        %v2953 = vunpack.c.h.b16 %v838
        %v2954 = vunpack.c.l.b16 %v839
        %v2955 = vunpack.c.h.b16 %v839
        %v2956 = vunpack.c.l.b16 %v840
        %v2957 = vunpack.c.h.b16 %v840
        %v2958 = vunpack.c.l.b16 %v841
        %v2959 = vunpack.c.h.b16 %v841
        %v2960 = vunpack.c.l.b16 %v842
        %v2961 = vunpack.c.h.b16 %v842
        %v2962 = vunpack.c.l.b16 %v843
        %v2963 = vunpack.c.h.b16 %v843
        %v2964 = vunpack.c.l.b16 %v844
        %v2965 = vunpack.c.h.b16 %v844
        %v2966 = vunpack.c.l.b16 %v845
        %v2967 = vunpack.c.h.b16 %v845
        %v2968 = vunpack.c.l.b16 %v846
        %v2969 = vunpack.c.h.b16 %v846
        %v2970 = vunpack.c.l.b16 %v847
        %v2971 = vunpack.c.h.b16 %v847
        %v2972 = vunpack.c.l.b16 %v848
        %v2973 = vunpack.c.h.b16 %v848
        %v2974 = vunpack.c.l.b16 %v849
        %v2975 = vunpack.c.h.b16 %v849
        %v2976 = vunpack.c.l.b16 %v850
        %v2977 = vunpack.c.h.b16 %v850
        %v2978 = vunpack.c.l.b16 %v851
        %v2979 = vunpack.c.h.b16 %v851
        %v2980 = vunpack.c.l.b16 %v852
        %v2981 = vunpack.c.h.b16 %v852
        %v2982 = vunpack.c.l.b16 %v853
        %v2983 = vunpack.c.h.b16 %v853
        %v2984 = vunpack.c.l.b16 %v854
        %v2985 = vunpack.c.h.b16 %v854
        %v2986 = vunpack.c.l.b16 %v855
        %v2987 = vunpack.c.h.b16 %v855
        %v2988 = vunpack.c.l.b16 %v856
        %v2989 = vunpack.c.h.b16 %v856
        %v2990 = vunpack.c.l.b16 %v857
        %v2991 = vunpack.c.h.b16 %v857
        %v2992 = vunpack.c.l.b16 %v858
        %v2993 = vunpack.c.h.b16 %v858
        %v2994 = vunpack.c.l.b16 %v859
        %v2995 = vunpack.c.h.b16 %v859
        %v2996 = vunpack.c.l.b16 %v860
        %v2997 = vunpack.c.h.b16 %v860
        %v2998 = vunpack.c.l.b16 %v861
        %v2999 = vunpack.c.h.b16 %v861
        %v3000 = vunpack.c.l.b16 %v862
        %v3001 = vunpack.c.h.b16 %v862
        %v3002 = vunpack.c.l.b16 %v863
        %v3003 = vunpack.c.h.b16 %v863
        %v3004 = vunpack.c.l.b16 %v864
        %v3005 = vunpack.c.h.b16 %v864
        %v3006 = vunpack.c.l.b16 %v865
        %v3007 = vunpack.c.h.b16 %v865
        %v3008 = vunpack.c.l.b16 %v866
        %v3009 = vunpack.c.h.b16 %v866
        %v3010 = vunpack.c.l.b16 %v867
        %v3011 = vunpack.c.h.b16 %v867
        %v3012 = vunpack.c.l.b16 %v868
        %v3013 = vunpack.c.h.b16 %v868
        %v3014 = vunpack.c.l.b16 %v869
        %v3015 = vunpack.c.h.b16 %v869
        %v3016 = vunpack.c.l.b16 %v870
        %v3017 = vunpack.c.h.b16 %v870
        %v3018 = vunpack.c.l.b16 %v871
        %v3019 = vunpack.c.h.b16 %v871
        %v3020 = vunpack.c.l.b16 %v872
        %v3021 = vunpack.c.h.b16 %v872
        %v3022 = vunpack.c.l.b16 %v873
        %v3023 = vunpack.c.h.b16 %v873
        %v3024 = vunpack.c.l.b16 %v874
        %v3025 = vunpack.c.h.b16 %v874
        %v3026 = vunpack.c.l.b16 %v875
        %v3027 = vunpack.c.h.b16 %v875
        %v3028 = vunpack.c.l.b16 %v876
        %v3029 = vunpack.c.h.b16 %v876
        %v3030 = vunpack.c.l.b16 %v877
        %v3031 = vunpack.c.h.b16 %v877
        %v3032 = vunpack.c.l.b16 %v878
        %v3033 = vunpack.c.h.b16 %v878
        %v3034 = vunpack.c.l.b16 %v879
        %v3035 = vunpack.c.h.b16 %v879
        %v3036 = vunpack.c.l.b16 %v880
        %v3037 = vunpack.c.h.b16 %v880
        %v3038 = vunpack.c.l.b16 %v881
        %v3039 = vunpack.c.h.b16 %v881
        %v3040 = vunpack.c.l.b16 %v882
        %v3041 = vunpack.c.h.b16 %v882
        %v3042 = vunpack.c.l.b16 %v883
        %v3043 = vunpack.c.h.b16 %v883
        %v3044 = vunpack.c.l.b16 %v884
        %v3045 = vunpack.c.h.b16 %v884
        %v3046 = vunpack.c.l.b16 %v885
        %v3047 = vunpack.c.h.b16 %v885
        %v3048 = vunpack.c.l.b16 %v886
        %v3049 = vunpack.c.h.b16 %v886
        %v3050 = vunpack.c.l.b16 %v887
        %v3051 = vunpack.c.h.b16 %v887
        %v3052 = vunpack.c.l.b16 %v888
        %v3053 = vunpack.c.h.b16 %v888
        %v3054 = vunpack.c.l.b16 %v889
        %v3055 = vunpack.c.h.b16 %v889
        %v3056 = vunpack.c.l.b16 %v890
        %v3057 = vunpack.c.h.b16 %v890
        %v3058 = vunpack.c.l.b16 %v891
        %v3059 = vunpack.c.h.b16 %v891
        %v3060 = vunpack.c.l.b16 %v892
        %v3061 = vunpack.c.h.b16 %v892
        %v3062 = vunpack.c.l.b16 %v893
        %v3063 = vunpack.c.h.b16 %v893
        %v3064 = vunpack.c.l.b16 %v894
        %v3065 = vunpack.c.h.b16 %v894
        %v3066 = vunpack.c.l.b16 %v895
        %v3067 = vunpack.c.h.b16 %v895
        %v3068 = vunpack.c.l.b16 %v896
        %v3069 = vunpack.c.h.b16 %v896
        %v3070 = vunpack.c.l.b16 %v897
        %v3071 = vunpack.c.h.b16 %v897
        %v3072 = vunpack.c.l.b16 %v898
        %v3073 = vunpack.c.h.b16 %v898
        %v3074 = vunpack.c.l.b16 %v899
        %v3075 = vunpack.c.h.b16 %v899
        %v3076 = vunpack.c.l.b16 %v900
        %v3077 = vunpack.c.h.b16 %v900
        %v3078 = vunpack.c.l.b16 %v901
        %v3079 = vunpack.c.h.b16 %v901
        %v3080 = vunpack.c.l.b16 %v902
        %v3081 = vunpack.c.h.b16 %v902
        %v3082 = vunpack.c.l.b16 %v903
        %v3083 = vunpack.c.h.b16 %v903
        %v3084 = vunpack.c.l.b16 %v904
        %v3085 = vunpack.c.h.b16 %v904
        %v3086 = vunpack.c.l.b16 %v905
        %v3087 = vunpack.c.h.b16 %v905
        %v3088 = vunpack.c.l.b16 %v906
        %v3089 = vunpack.c.h.b16 %v906
        %v3090 = vunpack.c.l.b16 %v907
        %v3091 = vunpack.c.h.b16 %v907
        %v3092 = vunpack.c.l.b16 %v908
        %v3093 = vunpack.c.h.b16 %v908
        %v3094 = vunpack.c.l.b16 %v909
        %v3095 = vunpack.c.h.b16 %v909
        %v3096 = vunpack.c.l.b16 %v910
        %v3097 = vunpack.c.h.b16 %v910
        %v3098 = vunpack.c.l.b16 %v911
        %v3099 = vunpack.c.h.b16 %v911
        %v3100 = vunpack.c.l.b16 %v912
        %v3101 = vunpack.c.h.b16 %v912
        %v3102 = vunpack.c.l.b16 %v913
        %v3103 = vunpack.c.h.b16 %v913
        %v3104 = vunpack.c.l.b16 %v914
        %v3105 = vunpack.c.h.b16 %v914
        %v3106 = vunpack.c.l.b16 %v915
        %v3107 = vunpack.c.h.b16 %v915
        %v3108 = vunpack.c.l.b16 %v916
        %v3109 = vunpack.c.h.b16 %v916
        %v3110 = vunpack.c.l.b16 %v917
        %v3111 = vunpack.c.h.b16 %v917
        %v3112 = vunpack.c.l.b16 %v918
        %v3113 = vunpack.c.h.b16 %v918
        %v3114 = vunpack.c.l.b16 %v919
        %v3115 = vunpack.c.h.b16 %v919
        %v3116 = vunpack.c.l.b16 %v920
        %v3117 = vunpack.c.h.b16 %v920
        %v3118 = vunpack.c.l.b16 %v921
        %v3119 = vunpack.c.h.b16 %v921
        %v3120 = vunpack.c.l.b16 %v922
        %v3121 = vunpack.c.h.b16 %v922
        %v3122 = vunpack.c.l.b16 %v923
        %v3123 = vunpack.c.h.b16 %v923
        %v3124 = vunpack.c.l.b16 %v924
        %v3125 = vunpack.c.h.b16 %v924
        %v3126 = vunpack.c.l.b16 %v925
        %v3127 = vunpack.c.h.b16 %v925
        %v3128 = vunpack.c.l.b16 %v926
        %v3129 = vunpack.c.h.b16 %v926
        %v3130 = vunpack.c.l.b16 %v927
        %v3131 = vunpack.c.h.b16 %v927
        %v3132 = vunpack.c.l.b16 %v928
        %v3133 = vunpack.c.h.b16 %v928
        %v3134 = vunpack.c.l.b16 %v929
        %v3135 = vunpack.c.h.b16 %v929
        %v3136 = vunpack.c.l.b16 %v930
        %v3137 = vunpack.c.h.b16 %v930
        %v3138 = vunpack.c.l.b16 %v931
        %v3139 = vunpack.c.h.b16 %v931
        %v3140 = vunpack.c.l.b16 %v932
        %v3141 = vunpack.c.h.b16 %v932
        %v3142 = vunpack.c.l.b16 %v933
        %v3143 = vunpack.c.h.b16 %v933
        %v3144 = vunpack.c.l.b16 %v934
        %v3145 = vunpack.c.h.b16 %v934
        %v3146 = vunpack.c.l.b16 %v935
        %v3147 = vunpack.c.h.b16 %v935
        %v3148 = vunpack.c.l.b16 %v936
        %v3149 = vunpack.c.h.b16 %v936
        %v3150 = vunpack.c.l.b16 %v937
        %v3151 = vunpack.c.h.b16 %v937
        %v3152 = vunpack.c.l.b16 %v938
        %v3153 = vunpack.c.h.b16 %v938
        %v3154 = vunpack.c.l.b16 %v939
        %v3155 = vunpack.c.h.b16 %v939
        %v3156 = vunpack.c.l.b16 %v940
        %v3157 = vunpack.c.h.b16 %v940
        %v3158 = vunpack.c.l.b16 %v941
        %v3159 = vunpack.c.h.b16 %v941
        %v3160 = vunpack.c.l.b16 %v942
        %v3161 = vunpack.c.h.b16 %v942
        %v3162 = vunpack.c.l.b16 %v943
        %v3163 = vunpack.c.h.b16 %v943
        %v3164 = vunpack.c.l.b16 %v944
        %v3165 = vunpack.c.h.b16 %v944
        %v3166 = vunpack.c.l.b16 %v945
        %v3167 = vunpack.c.h.b16 %v945
        %v3168 = vunpack.c.l.b16 %v946
        %v3169 = vunpack.c.h.b16 %v946
        %v3170 = vunpack.c.l.b16 %v947
        %v3171 = vunpack.c.h.b16 %v947
        %v3172 = vunpack.c.l.b16 %v948
        %v3173 = vunpack.c.h.b16 %v948
        %v3174 = vunpack.c.l.b16 %v949
        %v3175 = vunpack.c.h.b16 %v949
        %v3176 = vunpack.c.l.b16 %v950
        %v3177 = vunpack.c.h.b16 %v950
        %v3178 = vunpack.c.l.b16 %v951
        %v3179 = vunpack.c.h.b16 %v951
        %v3180 = vunpack.c.l.b16 %v952
        %v3181 = vunpack.c.h.b16 %v952
        %v3182 = vunpack.c.l.b16 %v953
        %v3183 = vunpack.c.h.b16 %v953
        %v3184 = vunpack.c.l.b16 %v954
        %v3185 = vunpack.c.h.b16 %v954
        %v3186 = vunpack.c.l.b16 %v955
        %v3187 = vunpack.c.h.b16 %v955
        %v3188 = vunpack.c.l.b16 %v956
        %v3189 = vunpack.c.h.b16 %v956
        %v3190 = vunpack.c.l.b16 %v957
        %v3191 = vunpack.c.h.b16 %v957
        %v3192 = vunpack.c.l.b16 %v958
        %v3193 = vunpack.c.h.b16 %v958
        %v3194 = vunpack.c.l.b16 %v959
        %v3195 = vunpack.c.h.b16 %v959
        %v3196 = vunpack.c.l.b16 %v960
        %v3197 = vunpack.c.h.b16 %v960
        %v3198 = vunpack.c.l.b16 %v961
        %v3199 = vunpack.c.h.b16 %v961
        %v3200 = vunpack.c.l.b16 %v962
        %v3201 = vunpack.c.h.b16 %v962
        %v3202 = vunpack.c.l.b16 %v963
        %v3203 = vunpack.c.h.b16 %v963
        %v3204 = vunpack.c.l.b16 %v964
        %v3205 = vunpack.c.h.b16 %v964
        %v3206 = vunpack.c.l.b16 %v965
        %v3207 = vunpack.c.h.b16 %v965
        %v3208 = vunpack.c.l.b16 %v966
        %v3209 = vunpack.c.h.b16 %v966
        %v3210 = vunpack.c.l.b16 %v967
        %v3211 = vunpack.c.h.b16 %v967
        %v3212 = vpack.c.b16 %v1808, %v1804
        %v3213 = vpack.c.b16 %v1809, %v1805
        %v3214 = vpack.c.b16 %v1810, %v1806
        %v3215 = vpack.c.b16 %v1811, %v1807
        %v3216 = vpack.c.b16 %v1816, %v1812
        %v3217 = vpack.c.b16 %v1817, %v1813
        %v3218 = vpack.c.b16 %v1818, %v1814
        %v3219 = vpack.c.b16 %v1819, %v1815
        %v3220 = vpack.c.b16 %v1824, %v1820
        %v3221 = vpack.c.b16 %v1825, %v1821
        %v3222 = vpack.c.b16 %v1826, %v1822
        %v3223 = vpack.c.b16 %v1827, %v1823
        %v3224 = vpack.c.b16 %v1832, %v1828
        %v3225 = vpack.c.b16 %v1833, %v1829
        %v3226 = vpack.c.b16 %v1834, %v1830
        %v3227 = vpack.c.b16 %v1835, %v1831
        %v3228 = vpack.c.b16 %v1840, %v1836
        %v3229 = vpack.c.b16 %v1841, %v1837
        %v3230 = vpack.c.b16 %v1842, %v1838
        %v3231 = vpack.c.b16 %v1843, %v1839
        %v3232 = vpack.c.b16 %v1848, %v1844
        %v3233 = vpack.c.b16 %v1849, %v1845
        %v3234 = vpack.c.b16 %v1850, %v1846
        %v3235 = vpack.c.b16 %v1851, %v1847
        %v3236 = vpack.c.b16 %v1856, %v1852
        %v3237 = vpack.c.b16 %v1857, %v1853
        %v3238 = vpack.c.b16 %v1858, %v1854
        %v3239 = vpack.c.b16 %v1859, %v1855
        %v3240 = vpack.c.b16 %v1864, %v1860
        %v3241 = vpack.c.b16 %v1865, %v1861
        %v3242 = vpack.c.b16 %v1866, %v1862
        %v3243 = vpack.c.b16 %v1867, %v1863
        %v3244 = vpack.c.b16 %v1872, %v1868
        %v3245 = vpack.c.b16 %v1873, %v1869
        %v3246 = vpack.c.b16 %v1874, %v1870
        %v3247 = vpack.c.b16 %v1875, %v1871
        %v3248 = vpack.c.b16 %v1880, %v1876
        %v3249 = vpack.c.b16 %v1881, %v1877
        %v3250 = vpack.c.b16 %v1882, %v1878
        %v3251 = vpack.c.b16 %v1883, %v1879
        %v3252 = vpack.c.b16 %v1888, %v1884
        %v3253 = vpack.c.b16 %v1889, %v1885
        %v3254 = vpack.c.b16 %v1890, %v1886
        %v3255 = vpack.c.b16 %v1891, %v1887
        %v3256 = vpack.c.b16 %v1896, %v1892
        %v3257 = vpack.c.b16 %v1897, %v1893
        %v3258 = vpack.c.b16 %v1898, %v1894
        %v3259 = vpack.c.b16 %v1899, %v1895
        %v3260 = vpack.c.b16 %v1904, %v1900
        %v3261 = vpack.c.b16 %v1905, %v1901
        %v3262 = vpack.c.b16 %v1906, %v1902
        %v3263 = vpack.c.b16 %v1907, %v1903
        %v3264 = vpack.c.b16 %v1912, %v1908
        %v3265 = vpack.c.b16 %v1913, %v1909
        %v3266 = vpack.c.b16 %v1914, %v1910
        %v3267 = vpack.c.b16 %v1915, %v1911
        %v3268 = vpack.c.b16 %v1920, %v1916
        %v3269 = vpack.c.b16 %v1921, %v1917
        %v3270 = vpack.c.b16 %v1922, %v1918
        %v3271 = vpack.c.b16 %v1923, %v1919
        %v3272 = vpack.c.b16 %v1928, %v1924
        %v3273 = vpack.c.b16 %v1929, %v1925
        %v3274 = vpack.c.b16 %v1930, %v1926
        %v3275 = vpack.c.b16 %v1931, %v1927
        %v3276 = vpack.c.b16 %v1936, %v1932
        %v3277 = vpack.c.b16 %v1937, %v1933
        %v3278 = vpack.c.b16 %v1938, %v1934
        %v3279 = vpack.c.b16 %v1939, %v1935
        %v3280 = vpack.c.b16 %v1944, %v1940
        %v3281 = vpack.c.b16 %v1945, %v1941
        %v3282 = vpack.c.b16 %v1946, %v1942
        %v3283 = vpack.c.b16 %v1947, %v1943
        %v3284 = vpack.c.b16 %v1952, %v1948
        %v3285 = vpack.c.b16 %v1953, %v1949
        %v3286 = vpack.c.b16 %v1954, %v1950
        %v3287 = vpack.c.b16 %v1955, %v1951
        %v3288 = vpack.c.b16 %v1960, %v1956
        %v3289 = vpack.c.b16 %v1961, %v1957
        %v3290 = vpack.c.b16 %v1962, %v1958
        %v3291 = vpack.c.b16 %v1963, %v1959
        %v3292 = vpack.c.b16 %v1968, %v1964
        %v3293 = vpack.c.b16 %v1969, %v1965
        %v3294 = vpack.c.b16 %v1970, %v1966
        %v3295 = vpack.c.b16 %v1971, %v1967
        %v3296 = vpack.c.b16 %v1976, %v1972
        %v3297 = vpack.c.b16 %v1977, %v1973
        %v3298 = vpack.c.b16 %v1978, %v1974
        %v3299 = vpack.c.b16 %v1979, %v1975
        %v3300 = vpack.c.b16 %v1984, %v1980
        %v3301 = vpack.c.b16 %v1985, %v1981
        %v3302 = vpack.c.b16 %v1986, %v1982
        %v3303 = vpack.c.b16 %v1987, %v1983
        %v3304 = vpack.c.b16 %v1992, %v1988
        %v3305 = vpack.c.b16 %v1993, %v1989
        %v3306 = vpack.c.b16 %v1994, %v1990
        %v3307 = vpack.c.b16 %v1995, %v1991
        %v3308 = vpack.c.b16 %v2000, %v1996
        %v3309 = vpack.c.b16 %v2001, %v1997
        %v3310 = vpack.c.b16 %v2002, %v1998
        %v3311 = vpack.c.b16 %v2003, %v1999
        %v3312 = vpack.c.b16 %v2008, %v2004
        %v3313 = vpack.c.b16 %v2009, %v2005
        %v3314 = vpack.c.b16 %v2010, %v2006
        %v3315 = vpack.c.b16 %v2011, %v2007
        %v3316 = vpack.c.b16 %v2016, %v2012
        %v3317 = vpack.c.b16 %v2017, %v2013
        %v3318 = vpack.c.b16 %v2018, %v2014
        %v3319 = vpack.c.b16 %v2019, %v2015
        %v3320 = vpack.c.b16 %v2024, %v2020
        %v3321 = vpack.c.b16 %v2025, %v2021
        %v3322 = vpack.c.b16 %v2026, %v2022
        %v3323 = vpack.c.b16 %v2027, %v2023
        %v3324 = vpack.c.b16 %v2032, %v2028
        %v3325 = vpack.c.b16 %v2033, %v2029
        %v3326 = vpack.c.b16 %v2034, %v2030
        %v3327 = vpack.c.b16 %v2035, %v2031
        %v3328 = vpack.c.b16 %v2040, %v2036
        %v3329 = vpack.c.b16 %v2041, %v2037
        %v3330 = vpack.c.b16 %v2042, %v2038
        %v3331 = vpack.c.b16 %v2043, %v2039
        %v3332 = vpack.c.b16 %v2048, %v2044
        %v3333 = vpack.c.b16 %v2049, %v2045
        %v3334 = vpack.c.b16 %v2050, %v2046
        %v3335 = vpack.c.b16 %v2051, %v2047
        %v3336 = vpack.c.b16 %v2056, %v2052
        %v3337 = vpack.c.b16 %v2057, %v2053
        %v3338 = vpack.c.b16 %v2058, %v2054
        %v3339 = vpack.c.b16 %v2059, %v2055
        %v3340 = vpack.c.b16 %v2064, %v2060
        %v3341 = vpack.c.b16 %v2065, %v2061
        %v3342 = vpack.c.b16 %v2066, %v2062
        %v3343 = vpack.c.b16 %v2067, %v2063
        %v3344 = vpack.c.b16 %v2072, %v2068
        %v3345 = vpack.c.b16 %v2073, %v2069
        %v3346 = vpack.c.b16 %v2074, %v2070
        %v3347 = vpack.c.b16 %v2075, %v2071
        %v3348 = vpack.c.b16 %v2080, %v2076
        %v3349 = vpack.c.b16 %v2081, %v2077
        %v3350 = vpack.c.b16 %v2082, %v2078
        %v3351 = vpack.c.b16 %v2083, %v2079
        %v3352 = vpack.c.b16 %v2088, %v2084
        %v3353 = vpack.c.b16 %v2089, %v2085
        %v3354 = vpack.c.b16 %v2090, %v2086
        %v3355 = vpack.c.b16 %v2091, %v2087
        %v3356 = vpack.c.b16 %v2096, %v2092
        %v3357 = vpack.c.b16 %v2097, %v2093
        %v3358 = vpack.c.b16 %v2098, %v2094
        %v3359 = vpack.c.b16 %v2099, %v2095
        %v3360 = vpack.c.b16 %v2104, %v2100
        %v3361 = vpack.c.b16 %v2105, %v2101
        %v3362 = vpack.c.b16 %v2106, %v2102
        %v3363 = vpack.c.b16 %v2107, %v2103
        %v3364 = vpack.c.b16 %v2112, %v2108
        %v3365 = vpack.c.b16 %v2113, %v2109
        %v3366 = vpack.c.b16 %v2114, %v2110
        %v3367 = vpack.c.b16 %v2115, %v2111
        %v3368 = vpack.c.b16 %v2120, %v2116
        %v3369 = vpack.c.b16 %v2121, %v2117
        %v3370 = vpack.c.b16 %v2122, %v2118
        %v3371 = vpack.c.b16 %v2123, %v2119
        %v3372 = vpack.c.b16 %v2128, %v2124
        %v3373 = vpack.c.b16 %v2129, %v2125
        %v3374 = vpack.c.b16 %v2130, %v2126
        %v3375 = vpack.c.b16 %v2131, %v2127
        %v3376 = vpack.c.b16 %v2136, %v2132
        %v3377 = vpack.c.b16 %v2137, %v2133
        %v3378 = vpack.c.b16 %v2138, %v2134
        %v3379 = vpack.c.b16 %v2139, %v2135
        %v3380 = vpack.c.b16 %v2144, %v2140
        %v3381 = vpack.c.b16 %v2145, %v2141
        %v3382 = vpack.c.b16 %v2146, %v2142
        %v3383 = vpack.c.b16 %v2147, %v2143
        %v3384 = vpack.c.b16 %v2152, %v2148
        %v3385 = vpack.c.b16 %v2153, %v2149
        %v3386 = vpack.c.b16 %v2154, %v2150
        %v3387 = vpack.c.b16 %v2155, %v2151
        %v3388 = vpack.c.b16 %v2160, %v2156
        %v3389 = vpack.c.b16 %v2161, %v2157
        %v3390 = vpack.c.b16 %v2162, %v2158
        %v3391 = vpack.c.b16 %v2163, %v2159
        %v3392 = vpack.c.b16 %v2168, %v2164
        %v3393 = vpack.c.b16 %v2169, %v2165
        %v3394 = vpack.c.b16 %v2170, %v2166
        %v3395 = vpack.c.b16 %v2171, %v2167
        %v3396 = vpack.c.b16 %v2176, %v2172
        %v3397 = vpack.c.b16 %v2177, %v2173
        %v3398 = vpack.c.b16 %v2178, %v2174
        %v3399 = vpack.c.b16 %v2179, %v2175
        %v3400 = vpack.c.b16 %v2184, %v2180
        %v3401 = vpack.c.b16 %v2185, %v2181
        %v3402 = vpack.c.b16 %v2186, %v2182
        %v3403 = vpack.c.b16 %v2187, %v2183
        %v3404 = vpack.c.b16 %v2192, %v2188
        %v3405 = vpack.c.b16 %v2193, %v2189
        %v3406 = vpack.c.b16 %v2194, %v2190
        %v3407 = vpack.c.b16 %v2195, %v2191
        %v3408 = vpack.c.b16 %v2200, %v2196
        %v3409 = vpack.c.b16 %v2201, %v2197
        %v3410 = vpack.c.b16 %v2202, %v2198
        %v3411 = vpack.c.b16 %v2203, %v2199
        %v3412 = vpack.c.b16 %v2208, %v2204
        %v3413 = vpack.c.b16 %v2209, %v2205
        %v3414 = vpack.c.b16 %v2210, %v2206
        %v3415 = vpack.c.b16 %v2211, %v2207
        %v3416 = vpack.c.b16 %v2216, %v2212
        %v3417 = vpack.c.b16 %v2217, %v2213
        %v3418 = vpack.c.b16 %v2218, %v2214
        %v3419 = vpack.c.b16 %v2219, %v2215
        %v3420 = vpack.c.b16 %v2224, %v2220
        %v3421 = vpack.c.b16 %v2225, %v2221
        %v3422 = vpack.c.b16 %v2226, %v2222
        %v3423 = vpack.c.b16 %v2227, %v2223
        %v3424 = vpack.c.b16 %v2232, %v2228
        %v3425 = vpack.c.b16 %v2233, %v2229
        %v3426 = vpack.c.b16 %v2234, %v2230
        %v3427 = vpack.c.b16 %v2235, %v2231
        %v3428 = vpack.c.b16 %v2240, %v2236
        %v3429 = vpack.c.b16 %v2241, %v2237
        %v3430 = vpack.c.b16 %v2242, %v2238
        %v3431 = vpack.c.b16 %v2243, %v2239
        %v3432 = vpack.c.b16 %v2248, %v2244
        %v3433 = vpack.c.b16 %v2249, %v2245
        %v3434 = vpack.c.b16 %v2250, %v2246
        %v3435 = vpack.c.b16 %v2251, %v2247
        %v3436 = vpack.c.b16 %v2256, %v2252
        %v3437 = vpack.c.b16 %v2257, %v2253
        %v3438 = vpack.c.b16 %v2258, %v2254
        %v3439 = vpack.c.b16 %v2259, %v2255
        %v3440 = vpack.c.b16 %v2264, %v2260
        %v3441 = vpack.c.b16 %v2265, %v2261
        %v3442 = vpack.c.b16 %v2266, %v2262
        %v3443 = vpack.c.b16 %v2267, %v2263
        %v3444 = vpack.c.b16 %v2272, %v2268
        %v3445 = vpack.c.b16 %v2273, %v2269
        %v3446 = vpack.c.b16 %v2274, %v2270
        %v3447 = vpack.c.b16 %v2275, %v2271
        %v3448 = vpack.c.b16 %v2280, %v2276
        %v3449 = vpack.c.b16 %v2281, %v2277
        %v3450 = vpack.c.b16 %v2282, %v2278
        %v3451 = vpack.c.b16 %v2283, %v2279
        %v3452 = vpack.c.b16 %v2288, %v2284
        %v3453 = vpack.c.b16 %v2289, %v2285
        %v3454 = vpack.c.b16 %v2290, %v2286
        %v3455 = vpack.c.b16 %v2291, %v2287
        %v3456 = vpack.c.b16 %v2296, %v2292
        %v3457 = vpack.c.b16 %v2297, %v2293
        %v3458 = vpack.c.b16 %v2298, %v2294
        %v3459 = vpack.c.b16 %v2299, %v2295
        %v3460 = vpack.c.b16 %v2304, %v2300
        %v3461 = vpack.c.b16 %v2305, %v2301
        %v3462 = vpack.c.b16 %v2306, %v2302
        %v3463 = vpack.c.b16 %v2307, %v2303
        %v3464 = vpack.c.b16 %v2312, %v2308
        %v3465 = vpack.c.b16 %v2313, %v2309
        %v3466 = vpack.c.b16 %v2314, %v2310
        %v3467 = vpack.c.b16 %v2315, %v2311
        %v3468 = vpack.c.b16 %v2320, %v2316
        %v3469 = vpack.c.b16 %v2321, %v2317
        %v3470 = vpack.c.b16 %v2322, %v2318
        %v3471 = vpack.c.b16 %v2323, %v2319
        %v3472 = vpack.c.b16 %v2328, %v2324
        %v3473 = vpack.c.b16 %v2329, %v2325
        %v3474 = vpack.c.b16 %v2330, %v2326
        %v3475 = vpack.c.b16 %v2331, %v2327
        %v3476 = vpack.c.b16 %v2336, %v2332
        %v3477 = vpack.c.b16 %v2337, %v2333
        %v3478 = vpack.c.b16 %v2338, %v2334
        %v3479 = vpack.c.b16 %v2339, %v2335
        %v3480 = vpack.c.b16 %v2344, %v2340
        %v3481 = vpack.c.b16 %v2345, %v2341
        %v3482 = vpack.c.b16 %v2346, %v2342
        %v3483 = vpack.c.b16 %v2347, %v2343
        %v3484 = vpack.c.b16 %v2352, %v2348
        %v3485 = vpack.c.b16 %v2353, %v2349
        %v3486 = vpack.c.b16 %v2354, %v2350
        %v3487 = vpack.c.b16 %v2355, %v2351
        %v3488 = vpack.c.b16 %v2360, %v2356
        %v3489 = vpack.c.b16 %v2361, %v2357
        %v3490 = vpack.c.b16 %v2362, %v2358
        %v3491 = vpack.c.b16 %v2363, %v2359
        %v3492 = vpack.c.b16 %v2368, %v2364
        %v3493 = vpack.c.b16 %v2369, %v2365
        %v3494 = vpack.c.b16 %v2370, %v2366
        %v3495 = vpack.c.b16 %v2371, %v2367
        %v3496 = vpack.c.b16 %v2376, %v2372
        %v3497 = vpack.c.b16 %v2377, %v2373
        %v3498 = vpack.c.b16 %v2378, %v2374
        %v3499 = vpack.c.b16 %v2379, %v2375
        %v3500 = vpack.c.b16 %v2384, %v2380
        %v3501 = vpack.c.b16 %v2385, %v2381
        %v3502 = vpack.c.b16 %v2386, %v2382
        %v3503 = vpack.c.b16 %v2387, %v2383
        %v3504 = vpack.c.b16 %v2392, %v2388
        %v3505 = vpack.c.b16 %v2393, %v2389
        %v3506 = vpack.c.b16 %v2394, %v2390
        %v3507 = vpack.c.b16 %v2395, %v2391
        %v3508 = vpack.c.b16 %v2400, %v2396
        %v3509 = vpack.c.b16 %v2401, %v2397
        %v3510 = vpack.c.b16 %v2402, %v2398
        %v3511 = vpack.c.b16 %v2403, %v2399
        %v3512 = vpack.c.b16 %v2408, %v2404
        %v3513 = vpack.c.b16 %v2409, %v2405
        %v3514 = vpack.c.b16 %v2410, %v2406
        %v3515 = vpack.c.b16 %v2411, %v2407
        %v3516 = vpack.c.b16 %v2416, %v2412
        %v3517 = vpack.c.b16 %v2417, %v2413
        %v3518 = vpack.c.b16 %v2418, %v2414
        %v3519 = vpack.c.b16 %v2419, %v2415
        %v3520 = vpack.c.b16 %v2424, %v2420
        %v3521 = vpack.c.b16 %v2425, %v2421
        %v3522 = vpack.c.b16 %v2426, %v2422
        %v3523 = vpack.c.b16 %v2427, %v2423
        %v3524 = vpack.c.b16 %v2432, %v2428
        %v3525 = vpack.c.b16 %v2433, %v2429
        %v3526 = vpack.c.b16 %v2434, %v2430
        %v3527 = vpack.c.b16 %v2435, %v2431
        %v3528 = vpack.c.b16 %v2440, %v2436
        %v3529 = vpack.c.b16 %v2441, %v2437
        %v3530 = vpack.c.b16 %v2442, %v2438
        %v3531 = vpack.c.b16 %v2443, %v2439
        %v3532 = vpack.c.b16 %v2448, %v2444
        %v3533 = vpack.c.b16 %v2449, %v2445
        %v3534 = vpack.c.b16 %v2450, %v2446
        %v3535 = vpack.c.b16 %v2451, %v2447
        %v3536 = vpack.c.b16 %v2456, %v2452
        %v3537 = vpack.c.b16 %v2457, %v2453
        %v3538 = vpack.c.b16 %v2458, %v2454
        %v3539 = vpack.c.b16 %v2459, %v2455
        %v3540 = vpack.c.b16 %v2464, %v2460
        %v3541 = vpack.c.b16 %v2465, %v2461
        %v3542 = vpack.c.b16 %v2466, %v2462
        %v3543 = vpack.c.b16 %v2467, %v2463
        %v3544 = vpack.c.b16 %v2472, %v2468
        %v3545 = vpack.c.b16 %v2473, %v2469
        %v3546 = vpack.c.b16 %v2474, %v2470
        %v3547 = vpack.c.b16 %v2475, %v2471
        %v3548 = vpack.c.b16 %v2480, %v2476
        %v3549 = vpack.c.b16 %v2481, %v2477
        %v3550 = vpack.c.b16 %v2482, %v2478
        %v3551 = vpack.c.b16 %v2483, %v2479
        %v3552 = vpack.c.b16 %v2488, %v2484
        %v3553 = vpack.c.b16 %v2489, %v2485
        %v3554 = vpack.c.b16 %v2490, %v2486
        %v3555 = vpack.c.b16 %v2491, %v2487
        %v3556 = vpack.c.b16 %v2496, %v2492
        %v3557 = vpack.c.b16 %v2497, %v2493
        %v3558 = vpack.c.b16 %v2498, %v2494
        %v3559 = vpack.c.b16 %v2499, %v2495
        %v3560 = vpack.c.b16 %v2504, %v2500
        %v3561 = vpack.c.b16 %v2505, %v2501
        %v3562 = vpack.c.b16 %v2506, %v2502
        %v3563 = vpack.c.b16 %v2507, %v2503
        %v3564 = vpack.c.b16 %v2512, %v2508
        %v3565 = vpack.c.b16 %v2513, %v2509
        %v3566 = vpack.c.b16 %v2514, %v2510
        %v3567 = vpack.c.b16 %v2515, %v2511
        %v3568 = vpack.c.b16 %v2520, %v2516
        %v3569 = vpack.c.b16 %v2521, %v2517
        %v3570 = vpack.c.b16 %v2522, %v2518
        %v3571 = vpack.c.b16 %v2523, %v2519
        %v3572 = vpack.c.b16 %v2528, %v2524
        %v3573 = vpack.c.b16 %v2529, %v2525
        %v3574 = vpack.c.b16 %v2530, %v2526
        %v3575 = vpack.c.b16 %v2531, %v2527
        %v3576 = vpack.c.b16 %v2536, %v2532
        %v3577 = vpack.c.b16 %v2537, %v2533
        %v3578 = vpack.c.b16 %v2538, %v2534
        %v3579 = vpack.c.b16 %v2539, %v2535
        %v3580 = vpack.c.b16 %v2544, %v2540
        %v3581 = vpack.c.b16 %v2545, %v2541
        %v3582 = vpack.c.b16 %v2546, %v2542
        %v3583 = vpack.c.b16 %v2547, %v2543
        %v3584 = vpack.c.b16 %v2552, %v2548
        %v3585 = vpack.c.b16 %v2553, %v2549
        %v3586 = vpack.c.b16 %v2554, %v2550
        %v3587 = vpack.c.b16 %v2555, %v2551
        %v3588 = vpack.c.b16 %v2560, %v2556
        %v3589 = vpack.c.b16 %v2561, %v2557
        %v3590 = vpack.c.b16 %v2562, %v2558
        %v3591 = vpack.c.b16 %v2563, %v2559
        %v3592 = vpack.c.b16 %v2568, %v2564
        %v3593 = vpack.c.b16 %v2569, %v2565
        %v3594 = vpack.c.b16 %v2570, %v2566
        %v3595 = vpack.c.b16 %v2571, %v2567
        %v3596 = vpack.c.b16 %v2576, %v2572
        %v3597 = vpack.c.b16 %v2577, %v2573
        %v3598 = vpack.c.b16 %v2578, %v2574
        %v3599 = vpack.c.b16 %v2579, %v2575
        %v3600 = vpack.c.b16 %v2584, %v2580
        %v3601 = vpack.c.b16 %v2585, %v2581
        %v3602 = vpack.c.b16 %v2586, %v2582
        %v3603 = vpack.c.b16 %v2587, %v2583
        %v3604 = vpack.c.b16 %v2592, %v2588
        %v3605 = vpack.c.b16 %v2593, %v2589
        %v3606 = vpack.c.b16 %v2594, %v2590
        %v3607 = vpack.c.b16 %v2595, %v2591
        %v3608 = vpack.c.b16 %v2600, %v2596
        %v3609 = vpack.c.b16 %v2601, %v2597
        %v3610 = vpack.c.b16 %v2602, %v2598
        %v3611 = vpack.c.b16 %v2603, %v2599
        %v3612 = vpack.c.b16 %v2608, %v2604
        %v3613 = vpack.c.b16 %v2609, %v2605
        %v3614 = vpack.c.b16 %v2610, %v2606
        %v3615 = vpack.c.b16 %v2611, %v2607
        %v3616 = vpack.c.b16 %v2616, %v2612
        %v3617 = vpack.c.b16 %v2617, %v2613
        %v3618 = vpack.c.b16 %v2618, %v2614
        %v3619 = vpack.c.b16 %v2619, %v2615
        %v3620 = vpack.c.b16 %v2624, %v2620
        %v3621 = vpack.c.b16 %v2625, %v2621
        %v3622 = vpack.c.b16 %v2626, %v2622
        %v3623 = vpack.c.b16 %v2627, %v2623
        %v3624 = vpack.c.b16 %v2632, %v2628
        %v3625 = vpack.c.b16 %v2633, %v2629
        %v3626 = vpack.c.b16 %v2634, %v2630
        %v3627 = vpack.c.b16 %v2635, %v2631
        %v3628 = vpack.c.b16 %v2640, %v2636
        %v3629 = vpack.c.b16 %v2641, %v2637
        %v3630 = vpack.c.b16 %v2642, %v2638
        %v3631 = vpack.c.b16 %v2643, %v2639
        %v3632 = vpack.c.b16 %v2648, %v2644
        %v3633 = vpack.c.b16 %v2649, %v2645
        %v3634 = vpack.c.b16 %v2650, %v2646
        %v3635 = vpack.c.b16 %v2651, %v2647
        %v3636 = vpack.c.b16 %v2656, %v2652
        %v3637 = vpack.c.b16 %v2657, %v2653
        %v3638 = vpack.c.b16 %v2658, %v2654
        %v3639 = vpack.c.b16 %v2659, %v2655
        %v3640 = vpack.c.b16 %v2664, %v2660
        %v3641 = vpack.c.b16 %v2665, %v2661
        %v3642 = vpack.c.b16 %v2666, %v2662
        %v3643 = vpack.c.b16 %v2667, %v2663
        %v3644 = vpack.c.b16 %v2672, %v2668
        %v3645 = vpack.c.b16 %v2673, %v2669
        %v3646 = vpack.c.b16 %v2674, %v2670
        %v3647 = vpack.c.b16 %v2675, %v2671
        %v3648 = vpack.c.b16 %v2680, %v2676
        %v3649 = vpack.c.b16 %v2681, %v2677
        %v3650 = vpack.c.b16 %v2682, %v2678
        %v3651 = vpack.c.b16 %v2683, %v2679
        %v3652 = vpack.c.b16 %v2688, %v2684
        %v3653 = vpack.c.b16 %v2689, %v2685
        %v3654 = vpack.c.b16 %v2690, %v2686
        %v3655 = vpack.c.b16 %v2691, %v2687
        %v3656 = vpack.c.b16 %v2696, %v2692
        %v3657 = vpack.c.b16 %v2697, %v2693
        %v3658 = vpack.c.b16 %v2698, %v2694
        %v3659 = vpack.c.b16 %v2699, %v2695
        %v3660 = vpack.c.b16 %v2704, %v2700
        %v3661 = vpack.c.b16 %v2705, %v2701
        %v3662 = vpack.c.b16 %v2706, %v2702
        %v3663 = vpack.c.b16 %v2707, %v2703
        %v3664 = vpack.c.b16 %v2712, %v2708
        %v3665 = vpack.c.b16 %v2713, %v2709
        %v3666 = vpack.c.b16 %v2714, %v2710
        %v3667 = vpack.c.b16 %v2715, %v2711
        %v3668 = vpack.c.b16 %v2720, %v2716
        %v3669 = vpack.c.b16 %v2721, %v2717
        %v3670 = vpack.c.b16 %v2722, %v2718
        %v3671 = vpack.c.b16 %v2723, %v2719
        %v3672 = vpack.c.b16 %v2728, %v2724
        %v3673 = vpack.c.b16 %v2729, %v2725
        %v3674 = vpack.c.b16 %v2730, %v2726
        %v3675 = vpack.c.b16 %v2731, %v2727
        %v3676 = vpack.c.b16 %v2736, %v2732
        %v3677 = vpack.c.b16 %v2737, %v2733
        %v3678 = vpack.c.b16 %v2738, %v2734
        %v3679 = vpack.c.b16 %v2739, %v2735
        %v3680 = vpack.c.b16 %v2744, %v2740
        %v3681 = vpack.c.b16 %v2745, %v2741
        %v3682 = vpack.c.b16 %v2746, %v2742
        %v3683 = vpack.c.b16 %v2747, %v2743
        %v3684 = vpack.c.b16 %v2752, %v2748
        %v3685 = vpack.c.b16 %v2753, %v2749
        %v3686 = vpack.c.b16 %v2754, %v2750
        %v3687 = vpack.c.b16 %v2755, %v2751
        %v3688 = vpack.c.b16 %v2760, %v2756
        %v3689 = vpack.c.b16 %v2761, %v2757
        %v3690 = vpack.c.b16 %v2762, %v2758
        %v3691 = vpack.c.b16 %v2763, %v2759
        %v3692 = vpack.c.b16 %v2768, %v2764
        %v3693 = vpack.c.b16 %v2769, %v2765
        %v3694 = vpack.c.b16 %v2770, %v2766
        %v3695 = vpack.c.b16 %v2771, %v2767
        %v3696 = vpack.c.b16 %v2776, %v2772
        %v3697 = vpack.c.b16 %v2777, %v2773
        %v3698 = vpack.c.b16 %v2778, %v2774
        %v3699 = vpack.c.b16 %v2779, %v2775
        %v3700 = vpack.c.b16 %v2784, %v2780
        %v3701 = vpack.c.b16 %v2785, %v2781
        %v3702 = vpack.c.b16 %v2786, %v2782
        %v3703 = vpack.c.b16 %v2787, %v2783
        %v3704 = vpack.c.b16 %v2792, %v2788
        %v3705 = vpack.c.b16 %v2793, %v2789
        %v3706 = vpack.c.b16 %v2794, %v2790
        %v3707 = vpack.c.b16 %v2795, %v2791
        %v3708 = vpack.c.b16 %v2800, %v2796
        %v3709 = vpack.c.b16 %v2801, %v2797
        %v3710 = vpack.c.b16 %v2802, %v2798
        %v3711 = vpack.c.b16 %v2803, %v2799
        %v3712 = vpack.c.b16 %v2808, %v2804
        %v3713 = vpack.c.b16 %v2809, %v2805
        %v3714 = vpack.c.b16 %v2810, %v2806
        %v3715 = vpack.c.b16 %v2811, %v2807
        %v3716 = vpack.c.b16 %v2816, %v2812
        %v3717 = vpack.c.b16 %v2817, %v2813
        %v3718 = vpack.c.b16 %v2818, %v2814
        %v3719 = vpack.c.b16 %v2819, %v2815
        %v3720 = vpack.c.b16 %v2824, %v2820
        %v3721 = vpack.c.b16 %v2825, %v2821
        %v3722 = vpack.c.b16 %v2826, %v2822
        %v3723 = vpack.c.b16 %v2827, %v2823
        %v3724 = vpack.c.b16 %v2832, %v2828
        %v3725 = vpack.c.b16 %v2833, %v2829
        %v3726 = vpack.c.b16 %v2834, %v2830
        %v3727 = vpack.c.b16 %v2835, %v2831
        %v3728 = vpack.c.b16 %v2840, %v2836
        %v3729 = vpack.c.b16 %v2841, %v2837
        %v3730 = vpack.c.b16 %v2842, %v2838
        %v3731 = vpack.c.b16 %v2843, %v2839
        %v3732 = vpack.c.b16 %v2848, %v2844
        %v3733 = vpack.c.b16 %v2849, %v2845
        %v3734 = vpack.c.b16 %v2850, %v2846
        %v3735 = vpack.c.b16 %v2851, %v2847
        %v3736 = vpack.c.b16 %v2856, %v2852
        %v3737 = vpack.c.b16 %v2857, %v2853
        %v3738 = vpack.c.b16 %v2858, %v2854
        %v3739 = vpack.c.b16 %v2859, %v2855
        %v3740 = vpack.c.b16 %v2864, %v2860
        %v3741 = vpack.c.b16 %v2865, %v2861
        %v3742 = vpack.c.b16 %v2866, %v2862
        %v3743 = vpack.c.b16 %v2867, %v2863
        %v3744 = vpack.c.b16 %v2872, %v2868
        %v3745 = vpack.c.b16 %v2873, %v2869
        %v3746 = vpack.c.b16 %v2874, %v2870
        %v3747 = vpack.c.b16 %v2875, %v2871
        %v3748 = vpack.c.b16 %v2880, %v2876
        %v3749 = vpack.c.b16 %v2881, %v2877
        %v3750 = vpack.c.b16 %v2882, %v2878
        %v3751 = vpack.c.b16 %v2883, %v2879
        %v3752 = vpack.c.b16 %v2888, %v2884
        %v3753 = vpack.c.b16 %v2889, %v2885
        %v3754 = vpack.c.b16 %v2890, %v2886
        %v3755 = vpack.c.b16 %v2891, %v2887
        %v3756 = vpack.c.b16 %v2896, %v2892
        %v3757 = vpack.c.b16 %v2897, %v2893
        %v3758 = vpack.c.b16 %v2898, %v2894
        %v3759 = vpack.c.b16 %v2899, %v2895
        %v3760 = vpack.c.b16 %v2904, %v2900
        %v3761 = vpack.c.b16 %v2905, %v2901
        %v3762 = vpack.c.b16 %v2906, %v2902
        %v3763 = vpack.c.b16 %v2907, %v2903
        %v3764 = vpack.c.b16 %v2912, %v2908
        %v3765 = vpack.c.b16 %v2913, %v2909
        %v3766 = vpack.c.b16 %v2914, %v2910
        %v3767 = vpack.c.b16 %v2915, %v2911
        %v3768 = vpack.c.b16 %v2920, %v2916
        %v3769 = vpack.c.b16 %v2921, %v2917
        %v3770 = vpack.c.b16 %v2922, %v2918
        %v3771 = vpack.c.b16 %v2923, %v2919
        %v3772 = vpack.c.b16 %v2928, %v2924
        %v3773 = vpack.c.b16 %v2929, %v2925
        %v3774 = vpack.c.b16 %v2930, %v2926
        %v3775 = vpack.c.b16 %v2931, %v2927
        %v3776 = vpack.c.b16 %v2936, %v2932
        %v3777 = vpack.c.b16 %v2937, %v2933
        %v3778 = vpack.c.b16 %v2938, %v2934
        %v3779 = vpack.c.b16 %v2939, %v2935
        %v3780 = vpack.c.b16 %v2944, %v2940
        %v3781 = vpack.c.b16 %v2945, %v2941
        %v3782 = vpack.c.b16 %v2946, %v2942
        %v3783 = vpack.c.b16 %v2947, %v2943
        %v3784 = vpack.c.b16 %v2952, %v2948
        %v3785 = vpack.c.b16 %v2953, %v2949
        %v3786 = vpack.c.b16 %v2954, %v2950
        %v3787 = vpack.c.b16 %v2955, %v2951
        %v3788 = vpack.c.b16 %v2960, %v2956
        %v3789 = vpack.c.b16 %v2961, %v2957
        %v3790 = vpack.c.b16 %v2962, %v2958
        %v3791 = vpack.c.b16 %v2963, %v2959
        %v3792 = vpack.c.b16 %v2968, %v2964
        %v3793 = vpack.c.b16 %v2969, %v2965
        %v3794 = vpack.c.b16 %v2970, %v2966
        %v3795 = vpack.c.b16 %v2971, %v2967
        %v3796 = vpack.c.b16 %v2976, %v2972
        %v3797 = vpack.c.b16 %v2977, %v2973
        %v3798 = vpack.c.b16 %v2978, %v2974
        %v3799 = vpack.c.b16 %v2979, %v2975
        %v3800 = vpack.c.b16 %v2984, %v2980
        %v3801 = vpack.c.b16 %v2985, %v2981
        %v3802 = vpack.c.b16 %v2986, %v2982
        %v3803 = vpack.c.b16 %v2987, %v2983
        %v3804 = vpack.c.b16 %v2992, %v2988
        %v3805 = vpack.c.b16 %v2993, %v2989
        %v3806 = vpack.c.b16 %v2994, %v2990
        %v3807 = vpack.c.b16 %v2995, %v2991
        %v3808 = vpack.c.b16 %v3000, %v2996
        %v3809 = vpack.c.b16 %v3001, %v2997
        %v3810 = vpack.c.b16 %v3002, %v2998
        %v3811 = vpack.c.b16 %v3003, %v2999
        %v3812 = vpack.c.b16 %v3008, %v3004
        %v3813 = vpack.c.b16 %v3009, %v3005
        %v3814 = vpack.c.b16 %v3010, %v3006
        %v3815 = vpack.c.b16 %v3011, %v3007
        %v3816 = vpack.c.b16 %v3016, %v3012
        %v3817 = vpack.c.b16 %v3017, %v3013
        %v3818 = vpack.c.b16 %v3018, %v3014
        %v3819 = vpack.c.b16 %v3019, %v3015
        %v3820 = vpack.c.b16 %v3024, %v3020
        %v3821 = vpack.c.b16 %v3025, %v3021
        %v3822 = vpack.c.b16 %v3026, %v3022
        %v3823 = vpack.c.b16 %v3027, %v3023
        %v3824 = vpack.c.b16 %v3032, %v3028
        %v3825 = vpack.c.b16 %v3033, %v3029
        %v3826 = vpack.c.b16 %v3034, %v3030
        %v3827 = vpack.c.b16 %v3035, %v3031
        %v3828 = vpack.c.b16 %v3040, %v3036
        %v3829 = vpack.c.b16 %v3041, %v3037
        %v3830 = vpack.c.b16 %v3042, %v3038
        %v3831 = vpack.c.b16 %v3043, %v3039
        %v3832 = vpack.c.b16 %v3048, %v3044
        %v3833 = vpack.c.b16 %v3049, %v3045
        %v3834 = vpack.c.b16 %v3050, %v3046
        %v3835 = vpack.c.b16 %v3051, %v3047
        %v3836 = vpack.c.b16 %v3056, %v3052
        %v3837 = vpack.c.b16 %v3057, %v3053
        %v3838 = vpack.c.b16 %v3058, %v3054
        %v3839 = vpack.c.b16 %v3059, %v3055
        %v3840 = vpack.c.b16 %v3064, %v3060
        %v3841 = vpack.c.b16 %v3065, %v3061
        %v3842 = vpack.c.b16 %v3066, %v3062
        %v3843 = vpack.c.b16 %v3067, %v3063
        %v3844 = vpack.c.b16 %v3072, %v3068
        %v3845 = vpack.c.b16 %v3073, %v3069
        %v3846 = vpack.c.b16 %v3074, %v3070
        %v3847 = vpack.c.b16 %v3075, %v3071
        %v3848 = vpack.c.b16 %v3080, %v3076
        %v3849 = vpack.c.b16 %v3081, %v3077
        %v3850 = vpack.c.b16 %v3082, %v3078
        %v3851 = vpack.c.b16 %v3083, %v3079
        %v3852 = vpack.c.b16 %v3088, %v3084
        %v3853 = vpack.c.b16 %v3089, %v3085
        %v3854 = vpack.c.b16 %v3090, %v3086
        %v3855 = vpack.c.b16 %v3091, %v3087
        %v3856 = vpack.c.b16 %v3096, %v3092
        %v3857 = vpack.c.b16 %v3097, %v3093
        %v3858 = vpack.c.b16 %v3098, %v3094
        %v3859 = vpack.c.b16 %v3099, %v3095
        %v3860 = vpack.c.b16 %v3104, %v3100
        %v3861 = vpack.c.b16 %v3105, %v3101
        %v3862 = vpack.c.b16 %v3106, %v3102
        %v3863 = vpack.c.b16 %v3107, %v3103
        %v3864 = vpack.c.b16 %v3112, %v3108
        %v3865 = vpack.c.b16 %v3113, %v3109
        %v3866 = vpack.c.b16 %v3114, %v3110
        %v3867 = vpack.c.b16 %v3115, %v3111
        %v3868 = vpack.c.b16 %v3120, %v3116
        %v3869 = vpack.c.b16 %v3121, %v3117
        %v3870 = vpack.c.b16 %v3122, %v3118
        %v3871 = vpack.c.b16 %v3123, %v3119
        %v3872 = vpack.c.b16 %v3128, %v3124
        %v3873 = vpack.c.b16 %v3129, %v3125
        %v3874 = vpack.c.b16 %v3130, %v3126
        %v3875 = vpack.c.b16 %v3131, %v3127
        %v3876 = vpack.c.b16 %v3136, %v3132
        %v3877 = vpack.c.b16 %v3137, %v3133
        %v3878 = vpack.c.b16 %v3138, %v3134
        %v3879 = vpack.c.b16 %v3139, %v3135
        %v3880 = vpack.c.b16 %v3144, %v3140
        %v3881 = vpack.c.b16 %v3145, %v3141
        %v3882 = vpack.c.b16 %v3146, %v3142
        %v3883 = vpack.c.b16 %v3147, %v3143
        %v3884 = vpack.c.b16 %v3152, %v3148
        %v3885 = vpack.c.b16 %v3153, %v3149
        %v3886 = vpack.c.b16 %v3154, %v3150
        %v3887 = vpack.c.b16 %v3155, %v3151
        %v3888 = vpack.c.b16 %v3160, %v3156
        %v3889 = vpack.c.b16 %v3161, %v3157
        %v3890 = vpack.c.b16 %v3162, %v3158
        %v3891 = vpack.c.b16 %v3163, %v3159
        %v3892 = vpack.c.b16 %v3168, %v3164
        %v3893 = vpack.c.b16 %v3169, %v3165
        %v3894 = vpack.c.b16 %v3170, %v3166
        %v3895 = vpack.c.b16 %v3171, %v3167
        %v3896 = vpack.c.b16 %v3176, %v3172
        %v3897 = vpack.c.b16 %v3177, %v3173
        %v3898 = vpack.c.b16 %v3178, %v3174
        %v3899 = vpack.c.b16 %v3179, %v3175
        %v3900 = vpack.c.b16 %v3184, %v3180
        %v3901 = vpack.c.b16 %v3185, %v3181
        %v3902 = vpack.c.b16 %v3186, %v3182
        %v3903 = vpack.c.b16 %v3187, %v3183
        %v3904 = vpack.c.b16 %v3192, %v3188
        %v3905 = vpack.c.b16 %v3193, %v3189
        %v3906 = vpack.c.b16 %v3194, %v3190
        %v3907 = vpack.c.b16 %v3195, %v3191
        %v3908 = vpack.c.b16 %v3200, %v3196
        %v3909 = vpack.c.b16 %v3201, %v3197
        %v3910 = vpack.c.b16 %v3202, %v3198
        %v3911 = vpack.c.b16 %v3203, %v3199
        %v3912 = vpack.c.b16 %v3208, %v3204
        %v3913 = vpack.c.b16 %v3209, %v3205
        %v3914 = vpack.c.b16 %v3210, %v3206
        %v3915 = vpack.c.b16 %v3211, %v3207
        %4620 = vmatprep.subr.bf16.mxu0 %v3213
        %4621 = vmatpush1.bf16.msra.mxu0 %v3212
        %4622 = vmatprep.subr.bf16.mxu0 %v3217
        %4623 = vmatpush1.bf16.msra.mxu0 %v3216
        %4624 = vmatprep.subr.bf16.mxu0 %v3221
        %4625 = vmatpush1.bf16.msra.mxu0 %v3220
        %4626 = vmatprep.subr.bf16.mxu0 %v3225
        %4627 = vmatpush1.bf16.msra.mxu0 %v3224
        %4628 = vmatprep.subr.bf16.mxu0 %v3229
        %4629 = vmatpush1.bf16.msra.mxu0 %v3228
        %4630 = vmatprep.subr.bf16.mxu0 %v3233
        %4631 = vmatpush1.bf16.msra.mxu0 %v3232
        %4632 = vmatprep.subr.bf16.mxu0 %v3237
        %4633 = vmatpush1.bf16.msra.mxu0 %v3236
        %4634 = vmatprep.subr.bf16.mxu0 %v3241
        %4635 = vmatpush1.bf16.msra.mxu0 %v3240
        %4636 = vmatprep.subr.bf16.mxu0 %v3245
        %4637 = vmatpush1.bf16.msra.mxu0 %v3244
        %4638 = vmatprep.subr.bf16.mxu0 %v3249
        %4639 = vmatpush1.bf16.msra.mxu0 %v3248
        %4640 = vmatprep.subr.bf16.mxu0 %v3253
        %4641 = vmatpush1.bf16.msra.mxu0 %v3252
        %4642 = vmatprep.subr.bf16.mxu0 %v3257
        %4643 = vmatpush1.bf16.msra.mxu0 %v3256
        %4644 = vmatprep.subr.bf16.mxu0 %v3261
        %4645 = vmatpush1.bf16.msra.mxu0 %v3260
        %4646 = vmatprep.subr.bf16.mxu0 %v3265
        %4647 = vmatpush1.bf16.msra.mxu0 %v3264
        %4648 = vmatprep.subr.bf16.mxu0 %v3269
        %4649 = vmatpush1.bf16.msra.mxu0 %v3268
        %4650 = vmatprep.subr.bf16.mxu0 %v3273
        %4651 = vmatpush1.bf16.msra.mxu0 %v3272
        %4652 = vmatprep.mubr.bf16.mxu0 %v1057
        %4653 = vmatmul.mubr.bf16.gmra.mrb[0].mxu0 %v1056
        %v4654 = vpop.f32.mrb[0].mxu0
        %v4655 = vadd.f32 %v973, %v4654
        %v4656 = vpop.f32.mrb[0].mxu0
        %v4657 = vadd.f32 %v977, %v4656
        %v4658 = vpop.f32.mrb[0].mxu0
        %v4659 = vadd.f32 %v973, %v4658
        %v4660 = vpop.f32.mrb[0].mxu0
        %v4661 = vadd.f32 %v977, %v4660
        %4662 = vdwg.mxu0
        %4663 = vmatprep.subr.bf16.mxu0 %v3277
        %4664 = vmatpush1.bf16.msra.mxu0 %v3276
        %4665 = vmatprep.subr.bf16.mxu0 %v3281
        %4666 = vmatpush1.bf16.msra.mxu0 %v3280
        %4667 = vmatprep.subr.bf16.mxu0 %v3285
        %4668 = vmatpush1.bf16.msra.mxu0 %v3284
        %4669 = vmatprep.subr.bf16.mxu0 %v3289
        %4670 = vmatpush1.bf16.msra.mxu0 %v3288
        %4671 = vmatprep.subr.bf16.mxu0 %v3293
        %4672 = vmatpush1.bf16.msra.mxu0 %v3292
        %4673 = vmatprep.subr.bf16.mxu0 %v3297
        %4674 = vmatpush1.bf16.msra.mxu0 %v3296
        %4675 = vmatprep.subr.bf16.mxu0 %v3301
        %4676 = vmatpush1.bf16.msra.mxu0 %v3300
        %4677 = vmatprep.subr.bf16.mxu0 %v3305
        %4678 = vmatpush1.bf16.msra.mxu0 %v3304
        %4679 = vmatprep.subr.bf16.mxu0 %v3309
        %4680 = vmatpush1.bf16.msra.mxu0 %v3308
        %4681 = vmatprep.subr.bf16.mxu0 %v3313
        %4682 = vmatpush1.bf16.msra.mxu0 %v3312
        %4683 = vmatprep.subr.bf16.mxu0 %v3317
        %4684 = vmatpush1.bf16.msra.mxu0 %v3316
        %4685 = vmatprep.subr.bf16.mxu0 %v3321
        %4686 = vmatpush1.bf16.msra.mxu0 %v3320
        %4687 = vmatprep.subr.bf16.mxu0 %v3325
        %4688 = vmatpush1.bf16.msra.mxu0 %v3324
        %4689 = vmatprep.subr.bf16.mxu0 %v3329
        %4690 = vmatpush1.bf16.msra.mxu0 %v3328
        %4691 = vmatprep.subr.bf16.mxu0 %v3333
        %4692 = vmatpush1.bf16.msra.mxu0 %v3332
        %4693 = vmatprep.subr.bf16.mxu0 %v3337
        %4694 = vmatpush1.bf16.msra.mxu0 %v3336
        %4695 = vmatprep.mubr.bf16.mxu0 %v1059
        %4696 = vmatmul.mubr.bf16.gmra.mrb[0].mxu0 %v1058
        %v4697 = vpop.f32.mrb[0].mxu0
        %v4698 = vadd.f32 %v4655, %v4697
        %v4699 = vpop.f32.mrb[0].mxu0
        %v4700 = vadd.f32 %v4657, %v4699
        %v4701 = vpop.f32.mrb[0].mxu0
        %v4702 = vadd.f32 %v4659, %v4701
        %v4703 = vpop.f32.mrb[0].mxu0
        %v4704 = vadd.f32 %v4661, %v4703
        %4705 = vdwg.mxu0
        %4706 = vmatprep.subr.bf16.mxu0 %v3341
        %4707 = vmatpush1.bf16.msra.mxu0 %v3340
        %4708 = vmatprep.subr.bf16.mxu0 %v3345
        %4709 = vmatpush1.bf16.msra.mxu0 %v3344
        %4710 = vmatprep.subr.bf16.mxu0 %v3349
        %4711 = vmatpush1.bf16.msra.mxu0 %v3348
        %4712 = vmatprep.subr.bf16.mxu0 %v3353
        %4713 = vmatpush1.bf16.msra.mxu0 %v3352
        %4714 = vmatprep.subr.bf16.mxu0 %v3357
        %4715 = vmatpush1.bf16.msra.mxu0 %v3356
        %4716 = vmatprep.subr.bf16.mxu0 %v3361
        %4717 = vmatpush1.bf16.msra.mxu0 %v3360
        %4718 = vmatprep.subr.bf16.mxu0 %v3365
        %4719 = vmatpush1.bf16.msra.mxu0 %v3364
        %4720 = vmatprep.subr.bf16.mxu0 %v3369
        %4721 = vmatpush1.bf16.msra.mxu0 %v3368
        %4722 = vmatprep.subr.bf16.mxu0 %v3373
        %4723 = vmatpush1.bf16.msra.mxu0 %v3372
        %4724 = vmatprep.subr.bf16.mxu0 %v3377
        %4725 = vmatpush1.bf16.msra.mxu0 %v3376
        %4726 = vmatprep.subr.bf16.mxu0 %v3381
        %4727 = vmatpush1.bf16.msra.mxu0 %v3380
        %4728 = vmatprep.subr.bf16.mxu0 %v3385
        %4729 = vmatpush1.bf16.msra.mxu0 %v3384
        %4730 = vmatprep.subr.bf16.mxu0 %v3389
        %4731 = vmatpush1.bf16.msra.mxu0 %v3388
        %4732 = vmatprep.subr.bf16.mxu0 %v3393
        %4733 = vmatpush1.bf16.msra.mxu0 %v3392
        %4734 = vmatprep.subr.bf16.mxu0 %v3397
        %4735 = vmatpush1.bf16.msra.mxu0 %v3396
        %4736 = vmatprep.subr.bf16.mxu0 %v3401
        %4737 = vmatpush1.bf16.msra.mxu0 %v3400
        %4738 = vmatprep.mubr.bf16.mxu0 %v1061
        %4739 = vmatmul.mubr.bf16.gmra.mrb[0].mxu0 %v1060
        %v4740 = vpop.f32.mrb[0].mxu0
        %v4741 = vadd.f32 %v4698, %v4740
        %v4742 = vpop.f32.mrb[0].mxu0
        %v4743 = vadd.f32 %v4700, %v4742
        %v4744 = vpop.f32.mrb[0].mxu0
        %v4745 = vadd.f32 %v4702, %v4744
        %v4746 = vpop.f32.mrb[0].mxu0
        %v4747 = vadd.f32 %v4704, %v4746
        %4748 = vdwg.mxu0
        %4749 = vmatprep.subr.bf16.mxu0 %v3405
        %4750 = vmatpush1.bf16.msra.mxu0 %v3404
        %4751 = vmatprep.subr.bf16.mxu0 %v3409
        %4752 = vmatpush1.bf16.msra.mxu0 %v3408
        %4753 = vmatprep.subr.bf16.mxu0 %v3413
        %4754 = vmatpush1.bf16.msra.mxu0 %v3412
        %4755 = vmatprep.subr.bf16.mxu0 %v3417
        %4756 = vmatpush1.bf16.msra.mxu0 %v3416
        %4757 = vmatprep.subr.bf16.mxu0 %v3421
        %4758 = vmatpush1.bf16.msra.mxu0 %v3420
        %4759 = vmatprep.subr.bf16.mxu0 %v3425
        %4760 = vmatpush1.bf16.msra.mxu0 %v3424
        %4761 = vmatprep.subr.bf16.mxu0 %v3429
        %4762 = vmatpush1.bf16.msra.mxu0 %v3428
        %4763 = vmatprep.subr.bf16.mxu0 %v3433
        %4764 = vmatpush1.bf16.msra.mxu0 %v3432
        %4765 = vmatprep.subr.bf16.mxu0 %v3437
        %4766 = vmatpush1.bf16.msra.mxu0 %v3436
        %4767 = vmatprep.subr.bf16.mxu0 %v3441
        %4768 = vmatpush1.bf16.msra.mxu0 %v3440
        %4769 = vmatprep.subr.bf16.mxu0 %v3445
        %4770 = vmatpush1.bf16.msra.mxu0 %v3444
        %4771 = vmatprep.subr.bf16.mxu0 %v3449
        %4772 = vmatpush1.bf16.msra.mxu0 %v3448
        %4773 = vmatprep.subr.bf16.mxu0 %v3453
        %4774 = vmatpush1.bf16.msra.mxu0 %v3452
        %4775 = vmatprep.subr.bf16.mxu0 %v3457
        %4776 = vmatpush1.bf16.msra.mxu0 %v3456
        %4777 = vmatprep.subr.bf16.mxu0 %v3461
        %4778 = vmatpush1.bf16.msra.mxu0 %v3460
        %4779 = vmatprep.subr.bf16.mxu0 %v3465
        %4780 = vmatpush1.bf16.msra.mxu0 %v3464
        %4781 = vmatprep.mubr.bf16.mxu0 %v1063
        %4782 = vmatmul.mubr.bf16.gmra.mrb[0].mxu0 %v1062
        %v4783 = vpop.f32.mrb[0].mxu0
        %v4784 = vadd.f32 %v4741, %v4783
        %v4785 = vpop.f32.mrb[0].mxu0
        %v4786 = vadd.f32 %v4743, %v4785
        %v4787 = vpop.f32.mrb[0].mxu0
        %v4788 = vadd.f32 %v4745, %v4787
        %v4789 = vpop.f32.mrb[0].mxu0
        %v4790 = vadd.f32 %v4747, %v4789
        %4791 = vdwg.mxu0
        %4792 = vmatprep.subr.bf16.mxu0 %v3469
        %4793 = vmatpush1.bf16.msra.mxu0 %v3468
        %4794 = vmatprep.subr.bf16.mxu0 %v3473
        %4795 = vmatpush1.bf16.msra.mxu0 %v3472
        %4796 = vmatprep.subr.bf16.mxu0 %v3477
        %4797 = vmatpush1.bf16.msra.mxu0 %v3476
        %4798 = vmatprep.subr.bf16.mxu0 %v3481
        %4799 = vmatpush1.bf16.msra.mxu0 %v3480
        %4800 = vmatprep.subr.bf16.mxu0 %v3485
        %4801 = vmatpush1.bf16.msra.mxu0 %v3484
        %4802 = vmatprep.subr.bf16.mxu0 %v3489
        %4803 = vmatpush1.bf16.msra.mxu0 %v3488
        %4804 = vmatprep.subr.bf16.mxu0 %v3493
        %4805 = vmatpush1.bf16.msra.mxu0 %v3492
        %4806 = vmatprep.subr.bf16.mxu0 %v3497
        %4807 = vmatpush1.bf16.msra.mxu0 %v3496
        %4808 = vmatprep.subr.bf16.mxu0 %v3501
        %4809 = vmatpush1.bf16.msra.mxu0 %v3500
        %4810 = vmatprep.subr.bf16.mxu0 %v3505
        %4811 = vmatpush1.bf16.msra.mxu0 %v3504
        %4812 = vmatprep.subr.bf16.mxu0 %v3509
        %4813 = vmatpush1.bf16.msra.mxu0 %v3508
        %4814 = vmatprep.subr.bf16.mxu0 %v3513
        %4815 = vmatpush1.bf16.msra.mxu0 %v3512
        %4816 = vmatprep.subr.bf16.mxu0 %v3517
        %4817 = vmatpush1.bf16.msra.mxu0 %v3516
        %4818 = vmatprep.subr.bf16.mxu0 %v3521
        %4819 = vmatpush1.bf16.msra.mxu0 %v3520
        %4820 = vmatprep.subr.bf16.mxu0 %v3525
        %4821 = vmatpush1.bf16.msra.mxu0 %v3524
        %4822 = vmatprep.subr.bf16.mxu0 %v3529
        %4823 = vmatpush1.bf16.msra.mxu0 %v3528
        %4824 = vmatprep.mubr.bf16.mxu0 %v1065
        %4825 = vmatmul.mubr.bf16.gmra.mrb[0].mxu0 %v1064
        %v4826 = vpop.f32.mrb[0].mxu0
        %v4827 = vadd.f32 %v4784, %v4826
        %v4828 = vpop.f32.mrb[0].mxu0
        %v4829 = vadd.f32 %v4786, %v4828
        %v4830 = vpop.f32.mrb[0].mxu0
        %v4831 = vadd.f32 %v4788, %v4830
        %v4832 = vpop.f32.mrb[0].mxu0
        %v4833 = vadd.f32 %v4790, %v4832
        %4834 = vdwg.mxu0
        %4835 = vmatprep.subr.bf16.mxu0 %v3533
        %4836 = vmatpush1.bf16.msra.mxu0 %v3532
        %4837 = vmatprep.subr.bf16.mxu0 %v3537
        %4838 = vmatpush1.bf16.msra.mxu0 %v3536
        %4839 = vmatprep.subr.bf16.mxu0 %v3541
        %4840 = vmatpush1.bf16.msra.mxu0 %v3540
        %4841 = vmatprep.subr.bf16.mxu0 %v3545
        %4842 = vmatpush1.bf16.msra.mxu0 %v3544
        %4843 = vmatprep.subr.bf16.mxu0 %v3549
        %4844 = vmatpush1.bf16.msra.mxu0 %v3548
        %4845 = vmatprep.subr.bf16.mxu0 %v3553
        %4846 = vmatpush1.bf16.msra.mxu0 %v3552
        %4847 = vmatprep.subr.bf16.mxu0 %v3557
        %4848 = vmatpush1.bf16.msra.mxu0 %v3556
        %4849 = vmatprep.subr.bf16.mxu0 %v3561
        %4850 = vmatpush1.bf16.msra.mxu0 %v3560
        %4851 = vmatprep.subr.bf16.mxu0 %v3565
        %4852 = vmatpush1.bf16.msra.mxu0 %v3564
        %4853 = vmatprep.subr.bf16.mxu0 %v3569
        %4854 = vmatpush1.bf16.msra.mxu0 %v3568
        %4855 = vmatprep.subr.bf16.mxu0 %v3573
        %4856 = vmatpush1.bf16.msra.mxu0 %v3572
        %4857 = vmatprep.subr.bf16.mxu0 %v3577
        %4858 = vmatpush1.bf16.msra.mxu0 %v3576
        %4859 = vmatprep.subr.bf16.mxu0 %v3581
        %4860 = vmatpush1.bf16.msra.mxu0 %v3580
        %4861 = vmatprep.subr.bf16.mxu0 %v3585
        %4862 = vmatpush1.bf16.msra.mxu0 %v3584
        %4863 = vmatprep.subr.bf16.mxu0 %v3589
        %4864 = vmatpush1.bf16.msra.mxu0 %v3588
        %4865 = vmatprep.subr.bf16.mxu0 %v3593
        %4866 = vmatpush1.bf16.msra.mxu0 %v3592
        %4867 = vmatprep.mubr.bf16.mxu0 %v1067
        %4868 = vmatmul.mubr.bf16.gmra.mrb[0].mxu0 %v1066
        %v4869 = vpop.f32.mrb[0].mxu0
        %v4870 = vadd.f32 %v4827, %v4869
        %v4871 = vpop.f32.mrb[0].mxu0
        %v4872 = vadd.f32 %v4829, %v4871
        %v4873 = vpop.f32.mrb[0].mxu0
        %v4874 = vadd.f32 %v4831, %v4873
        %v4875 = vpop.f32.mrb[0].mxu0
        %v4876 = vadd.f32 %v4833, %v4875
        %4877 = vdwg.mxu0
        %4878 = vmatprep.subr.bf16.mxu0 %v3597
        %4879 = vmatpush1.bf16.msra.mxu0 %v3596
        %4880 = vmatprep.subr.bf16.mxu0 %v3601
        %4881 = vmatpush1.bf16.msra.mxu0 %v3600
        %4882 = vmatprep.subr.bf16.mxu0 %v3605
        %4883 = vmatpush1.bf16.msra.mxu0 %v3604
        %4884 = vmatprep.subr.bf16.mxu0 %v3609
        %4885 = vmatpush1.bf16.msra.mxu0 %v3608
        %4886 = vmatprep.subr.bf16.mxu0 %v3613
        %4887 = vmatpush1.bf16.msra.mxu0 %v3612
        %4888 = vmatprep.subr.bf16.mxu0 %v3617
        %4889 = vmatpush1.bf16.msra.mxu0 %v3616
        %4890 = vmatprep.subr.bf16.mxu0 %v3621
        %4891 = vmatpush1.bf16.msra.mxu0 %v3620
        %4892 = vmatprep.subr.bf16.mxu0 %v3625
        %4893 = vmatpush1.bf16.msra.mxu0 %v3624
        %4894 = vmatprep.subr.bf16.mxu0 %v3629
        %4895 = vmatpush1.bf16.msra.mxu0 %v3628
        %4896 = vmatprep.subr.bf16.mxu0 %v3633
        %4897 = vmatpush1.bf16.msra.mxu0 %v3632
        %4898 = vmatprep.subr.bf16.mxu0 %v3637
        %4899 = vmatpush1.bf16.msra.mxu0 %v3636
        %4900 = vmatprep.subr.bf16.mxu0 %v3641
        %4901 = vmatpush1.bf16.msra.mxu0 %v3640
        %4902 = vmatprep.subr.bf16.mxu0 %v3645
        %4903 = vmatpush1.bf16.msra.mxu0 %v3644
        %4904 = vmatprep.subr.bf16.mxu0 %v3649
        %4905 = vmatpush1.bf16.msra.mxu0 %v3648
        %4906 = vmatprep.subr.bf16.mxu0 %v3653
        %4907 = vmatpush1.bf16.msra.mxu0 %v3652
        %4908 = vmatprep.subr.bf16.mxu0 %v3657
        %4909 = vmatpush1.bf16.msra.mxu0 %v3656
        %4910 = vmatprep.mubr.bf16.mxu0 %v1069
        %4911 = vmatmul.mubr.bf16.gmra.mrb[0].mxu0 %v1068
        %v4912 = vpop.f32.mrb[0].mxu0
        %v4913 = vadd.f32 %v4870, %v4912
        %v4914 = vpop.f32.mrb[0].mxu0
        %v4915 = vadd.f32 %v4872, %v4914
        %v4916 = vpop.f32.mrb[0].mxu0
        %v4917 = vadd.f32 %v4874, %v4916
        %v4918 = vpop.f32.mrb[0].mxu0
        %v4919 = vadd.f32 %v4876, %v4918
        %4920 = vdwg.mxu0
        %4921 = vmatprep.subr.bf16.mxu0 %v3661
        %4922 = vmatpush1.bf16.msra.mxu0 %v3660
        %4923 = vmatprep.subr.bf16.mxu0 %v3665
        %4924 = vmatpush1.bf16.msra.mxu0 %v3664
        %4925 = vmatprep.subr.bf16.mxu0 %v3669
        %4926 = vmatpush1.bf16.msra.mxu0 %v3668
        %4927 = vmatprep.subr.bf16.mxu0 %v3673
        %4928 = vmatpush1.bf16.msra.mxu0 %v3672
        %4929 = vmatprep.subr.bf16.mxu0 %v3677
        %4930 = vmatpush1.bf16.msra.mxu0 %v3676
        %4931 = vmatprep.subr.bf16.mxu0 %v3681
        %4932 = vmatpush1.bf16.msra.mxu0 %v3680
        %4933 = vmatprep.subr.bf16.mxu0 %v3685
        %4934 = vmatpush1.bf16.msra.mxu0 %v3684
        %4935 = vmatprep.subr.bf16.mxu0 %v3689
        %4936 = vmatpush1.bf16.msra.mxu0 %v3688
        %4937 = vmatprep.subr.bf16.mxu0 %v3693
        %4938 = vmatpush1.bf16.msra.mxu0 %v3692
        %4939 = vmatprep.subr.bf16.mxu0 %v3697
        %4940 = vmatpush1.bf16.msra.mxu0 %v3696
        %4941 = vmatprep.subr.bf16.mxu0 %v3701
        %4942 = vmatpush1.bf16.msra.mxu0 %v3700
        %4943 = vmatprep.subr.bf16.mxu0 %v3705
        %4944 = vmatpush1.bf16.msra.mxu0 %v3704
        %4945 = vmatprep.subr.bf16.mxu0 %v3709
        %4946 = vmatpush1.bf16.msra.mxu0 %v3708
        %4947 = vmatprep.subr.bf16.mxu0 %v3713
        %4948 = vmatpush1.bf16.msra.mxu0 %v3712
        %4949 = vmatprep.subr.bf16.mxu0 %v3717
        %4950 = vmatpush1.bf16.msra.mxu0 %v3716
        %4951 = vmatprep.subr.bf16.mxu0 %v3721
        %4952 = vmatpush1.bf16.msra.mxu0 %v3720
        %4953 = vmatprep.mubr.bf16.mxu0 %v1071
        %4954 = vmatmul.mubr.bf16.gmra.mrb[0].mxu0 %v1070
        %v4955 = vpop.f32.mrb[0].mxu0
        %v4956 = vadd.f32 %v4913, %v4955
        %v4957 = vpop.f32.mrb[0].mxu0
        %v4958 = vadd.f32 %v4915, %v4957
        %v4959 = vpop.f32.mrb[0].mxu0
        %v4960 = vadd.f32 %v4917, %v4959
        %v4961 = vpop.f32.mrb[0].mxu0
        %v4962 = vadd.f32 %v4919, %v4961
        %4963 = vdwg.mxu0
        %4964 = vmatprep.subr.bf16.mxu0 %v3725
        %4965 = vmatpush1.bf16.msra.mxu0 %v3724
        %4966 = vmatprep.subr.bf16.mxu0 %v3729
        %4967 = vmatpush1.bf16.msra.mxu0 %v3728
        %4968 = vmatprep.subr.bf16.mxu0 %v3733
        %4969 = vmatpush1.bf16.msra.mxu0 %v3732
        %4970 = vmatprep.subr.bf16.mxu0 %v3737
        %4971 = vmatpush1.bf16.msra.mxu0 %v3736
        %4972 = vmatprep.subr.bf16.mxu0 %v3741
        %4973 = vmatpush1.bf16.msra.mxu0 %v3740
        %4974 = vmatprep.subr.bf16.mxu0 %v3745
        %4975 = vmatpush1.bf16.msra.mxu0 %v3744
        %4976 = vmatprep.subr.bf16.mxu0 %v3749
        %4977 = vmatpush1.bf16.msra.mxu0 %v3748
        %4978 = vmatprep.subr.bf16.mxu0 %v3753
        %4979 = vmatpush1.bf16.msra.mxu0 %v3752
        %4980 = vmatprep.subr.bf16.mxu0 %v3757
        %4981 = vmatpush1.bf16.msra.mxu0 %v3756
        %4982 = vmatprep.subr.bf16.mxu0 %v3761
        %4983 = vmatpush1.bf16.msra.mxu0 %v3760
        %4984 = vmatprep.subr.bf16.mxu0 %v3765
        %4985 = vmatpush1.bf16.msra.mxu0 %v3764
        %4986 = vmatprep.subr.bf16.mxu0 %v3769
        %4987 = vmatpush1.bf16.msra.mxu0 %v3768
        %4988 = vmatprep.subr.bf16.mxu0 %v3773
        %4989 = vmatpush1.bf16.msra.mxu0 %v3772
        %4990 = vmatprep.subr.bf16.mxu0 %v3777
        %4991 = vmatpush1.bf16.msra.mxu0 %v3776
        %4992 = vmatprep.subr.bf16.mxu0 %v3781
        %4993 = vmatpush1.bf16.msra.mxu0 %v3780
        %4994 = vmatprep.subr.bf16.mxu0 %v3785
        %4995 = vmatpush1.bf16.msra.mxu0 %v3784
        %4996 = vmatprep.mubr.bf16.mxu0 %v1073
        %4997 = vmatmul.mubr.bf16.gmra.mrb[0].mxu0 %v1072
        %v4998 = vpop.f32.mrb[0].mxu0
        %v4999 = vadd.f32 %v4956, %v4998
        %v5000 = vpop.f32.mrb[0].mxu0
        %v5001 = vadd.f32 %v4958, %v5000
        %v5002 = vpop.f32.mrb[0].mxu0
        %v5003 = vadd.f32 %v4960, %v5002
        %v5004 = vpop.f32.mrb[0].mxu0
        %v5005 = vadd.f32 %v4962, %v5004
        %5006 = vdwg.mxu0
        %5007 = vmatprep.subr.bf16.mxu0 %v3789
        %5008 = vmatpush1.bf16.msra.mxu0 %v3788
        %5009 = vmatprep.subr.bf16.mxu0 %v3793
        %5010 = vmatpush1.bf16.msra.mxu0 %v3792
        %5011 = vmatprep.subr.bf16.mxu0 %v3797
        %5012 = vmatpush1.bf16.msra.mxu0 %v3796
        %5013 = vmatprep.subr.bf16.mxu0 %v3801
        %5014 = vmatpush1.bf16.msra.mxu0 %v3800
        %5015 = vmatprep.subr.bf16.mxu0 %v3805
        %5016 = vmatpush1.bf16.msra.mxu0 %v3804
        %5017 = vmatprep.subr.bf16.mxu0 %v3809
        %5018 = vmatpush1.bf16.msra.mxu0 %v3808
        %5019 = vmatprep.subr.bf16.mxu0 %v3813
        %5020 = vmatpush1.bf16.msra.mxu0 %v3812
        %5021 = vmatprep.subr.bf16.mxu0 %v3817
        %5022 = vmatpush1.bf16.msra.mxu0 %v3816
        %5023 = vmatprep.subr.bf16.mxu0 %v3821
        %5024 = vmatpush1.bf16.msra.mxu0 %v3820
        %5025 = vmatprep.subr.bf16.mxu0 %v3825
        %5026 = vmatpush1.bf16.msra.mxu0 %v3824
        %5027 = vmatprep.subr.bf16.mxu0 %v3829
        %5028 = vmatpush1.bf16.msra.mxu0 %v3828
        %5029 = vmatprep.subr.bf16.mxu0 %v3833
        %5030 = vmatpush1.bf16.msra.mxu0 %v3832
        %5031 = vmatprep.subr.bf16.mxu0 %v3837
        %5032 = vmatpush1.bf16.msra.mxu0 %v3836
        %5033 = vmatprep.subr.bf16.mxu0 %v3841
        %5034 = vmatpush1.bf16.msra.mxu0 %v3840
        %5035 = vmatprep.subr.bf16.mxu0 %v3845
        %5036 = vmatpush1.bf16.msra.mxu0 %v3844
        %5037 = vmatprep.subr.bf16.mxu0 %v3849
        %5038 = vmatpush1.bf16.msra.mxu0 %v3848
        %5039 = vmatprep.mubr.bf16.mxu0 %v1075
        %5040 = vmatmul.mubr.bf16.gmra.mrb[0].mxu0 %v1074
        %v5041 = vpop.f32.mrb[0].mxu0
        %v5042 = vadd.f32 %v4999, %v5041
        %v5043 = vpop.f32.mrb[0].mxu0
        %v5044 = vadd.f32 %v5001, %v5043
        %v5045 = vpop.f32.mrb[0].mxu0
        %v5046 = vadd.f32 %v5003, %v5045
        %v5047 = vpop.f32.mrb[0].mxu0
        %v5048 = vadd.f32 %v5005, %v5047
        %5049 = vdwg.mxu0
        %5050 = vmatprep.subr.bf16.mxu0 %v3853
        %5051 = vmatpush1.bf16.msra.mxu0 %v3852
        %5052 = vmatprep.subr.bf16.mxu0 %v3857
        %5053 = vmatpush1.bf16.msra.mxu0 %v3856
        %5054 = vmatprep.subr.bf16.mxu0 %v3861
        %5055 = vmatpush1.bf16.msra.mxu0 %v3860
        %5056 = vmatprep.subr.bf16.mxu0 %v3865
        %5057 = vmatpush1.bf16.msra.mxu0 %v3864
        %5058 = vmatprep.subr.bf16.mxu0 %v3869
        %5059 = vmatpush1.bf16.msra.mxu0 %v3868
        %5060 = vmatprep.subr.bf16.mxu0 %v3873
        %5061 = vmatpush1.bf16.msra.mxu0 %v3872
        %5062 = vmatprep.subr.bf16.mxu0 %v3877
        %5063 = vmatpush1.bf16.msra.mxu0 %v3876
        %5064 = vmatprep.subr.bf16.mxu0 %v3881
        %5065 = vmatpush1.bf16.msra.mxu0 %v3880
        %5066 = vmatprep.subr.bf16.mxu0 %v3885
        %5067 = vmatpush1.bf16.msra.mxu0 %v3884
        %5068 = vmatprep.subr.bf16.mxu0 %v3889
        %5069 = vmatpush1.bf16.msra.mxu0 %v3888
        %5070 = vmatprep.subr.bf16.mxu0 %v3893
        %5071 = vmatpush1.bf16.msra.mxu0 %v3892
        %5072 = vmatprep.subr.bf16.mxu0 %v3897
        %5073 = vmatpush1.bf16.msra.mxu0 %v3896
        %5074 = vmatprep.subr.bf16.mxu0 %v3901
        %5075 = vmatpush1.bf16.msra.mxu0 %v3900
        %5076 = vmatprep.subr.bf16.mxu0 %v3905
        %5077 = vmatpush1.bf16.msra.mxu0 %v3904
        %5078 = vmatprep.subr.bf16.mxu0 %v3909
        %5079 = vmatpush1.bf16.msra.mxu0 %v3908
        %5080 = vmatprep.subr.bf16.mxu0 %v3913
        %5081 = vmatpush1.bf16.msra.mxu0 %v3912
        %5082 = vmatprep.mubr.bf16.mxu0 %v1077
        %5083 = vmatmul.mubr.bf16.gmra.mrb[0].mxu0 %v1076
        %v5084 = vpop.f32.mrb[0].mxu0
        %v5085 = vadd.f32 %v5042, %v5084
        %v5086 = vpop.f32.mrb[0].mxu0
        %v5087 = vadd.f32 %v5044, %v5086
        %v5088 = vpop.f32.mrb[0].mxu0
        %v5089 = vadd.f32 %v5046, %v5088
        %v5090 = vpop.f32.mrb[0].mxu0
        %v5091 = vadd.f32 %v5048, %v5090
        %5092 = vdwg.mxu0
        %5093 = vmatprep.subr.bf16.mxu0 %v3215
        %5094 = vmatpush1.bf16.msra.mxu0 %v3214
        %5095 = vmatprep.subr.bf16.mxu0 %v3219
        %5096 = vmatpush1.bf16.msra.mxu0 %v3218
        %5097 = vmatprep.subr.bf16.mxu0 %v3223
        %5098 = vmatpush1.bf16.msra.mxu0 %v3222
        %5099 = vmatprep.subr.bf16.mxu0 %v3227
        %5100 = vmatpush1.bf16.msra.mxu0 %v3226
        %5101 = vmatprep.subr.bf16.mxu0 %v3231
        %5102 = vmatpush1.bf16.msra.mxu0 %v3230
        %5103 = vmatprep.subr.bf16.mxu0 %v3235
        %5104 = vmatpush1.bf16.msra.mxu0 %v3234
        %5105 = vmatprep.subr.bf16.mxu0 %v3239
        %5106 = vmatpush1.bf16.msra.mxu0 %v3238
        %5107 = vmatprep.subr.bf16.mxu0 %v3243
        %5108 = vmatpush1.bf16.msra.mxu0 %v3242
        %5109 = vmatprep.subr.bf16.mxu0 %v3247
        %5110 = vmatpush1.bf16.msra.mxu0 %v3246
        %5111 = vmatprep.subr.bf16.mxu0 %v3251
        %5112 = vmatpush1.bf16.msra.mxu0 %v3250
        %5113 = vmatprep.subr.bf16.mxu0 %v3255
        %5114 = vmatpush1.bf16.msra.mxu0 %v3254
        %5115 = vmatprep.subr.bf16.mxu0 %v3259
        %5116 = vmatpush1.bf16.msra.mxu0 %v3258
        %5117 = vmatprep.subr.bf16.mxu0 %v3263
        %5118 = vmatpush1.bf16.msra.mxu0 %v3262
        %5119 = vmatprep.subr.bf16.mxu0 %v3267
        %5120 = vmatpush1.bf16.msra.mxu0 %v3266
        %5121 = vmatprep.subr.bf16.mxu0 %v3271
        %5122 = vmatpush1.bf16.msra.mxu0 %v3270
        %5123 = vmatprep.subr.bf16.mxu0 %v3275
        %5124 = vmatpush1.bf16.msra.mxu0 %v3274
        %5125 = vmatprep.mubr.bf16.mxu0 %v1057
        %5126 = vmatmul.mubr.bf16.gmra.mrb[0].mxu0 %v1056
        %v5127 = vpop.f32.mrb[0].mxu0
        %v5128 = vadd.f32 %v981, %v5127
        %v5129 = vpop.f32.mrb[0].mxu0
        %v5130 = vadd.f32 %v985, %v5129
        %v5131 = vpop.f32.mrb[0].mxu0
        %v5132 = vadd.f32 %v981, %v5131
        %v5133 = vpop.f32.mrb[0].mxu0
        %v5134 = vadd.f32 %v985, %v5133
        %5135 = vdwg.mxu0
        %5136 = vmatprep.subr.bf16.mxu0 %v3279
        %5137 = vmatpush1.bf16.msra.mxu0 %v3278
        %5138 = vmatprep.subr.bf16.mxu0 %v3283
        %5139 = vmatpush1.bf16.msra.mxu0 %v3282
        %5140 = vmatprep.subr.bf16.mxu0 %v3287
        %5141 = vmatpush1.bf16.msra.mxu0 %v3286
        %5142 = vmatprep.subr.bf16.mxu0 %v3291
        %5143 = vmatpush1.bf16.msra.mxu0 %v3290
        %5144 = vmatprep.subr.bf16.mxu0 %v3295
        %5145 = vmatpush1.bf16.msra.mxu0 %v3294
        %5146 = vmatprep.subr.bf16.mxu0 %v3299
        %5147 = vmatpush1.bf16.msra.mxu0 %v3298
        %5148 = vmatprep.subr.bf16.mxu0 %v3303
        %5149 = vmatpush1.bf16.msra.mxu0 %v3302
        %5150 = vmatprep.subr.bf16.mxu0 %v3307
        %5151 = vmatpush1.bf16.msra.mxu0 %v3306
        %5152 = vmatprep.subr.bf16.mxu0 %v3311
        %5153 = vmatpush1.bf16.msra.mxu0 %v3310
        %5154 = vmatprep.subr.bf16.mxu0 %v3315
        %5155 = vmatpush1.bf16.msra.mxu0 %v3314
        %5156 = vmatprep.subr.bf16.mxu0 %v3319
        %5157 = vmatpush1.bf16.msra.mxu0 %v3318
        %5158 = vmatprep.subr.bf16.mxu0 %v3323
        %5159 = vmatpush1.bf16.msra.mxu0 %v3322
        %5160 = vmatprep.subr.bf16.mxu0 %v3327
        %5161 = vmatpush1.bf16.msra.mxu0 %v3326
        %5162 = vmatprep.subr.bf16.mxu0 %v3331
        %5163 = vmatpush1.bf16.msra.mxu0 %v3330
        %5164 = vmatprep.subr.bf16.mxu0 %v3335
        %5165 = vmatpush1.bf16.msra.mxu0 %v3334
        %5166 = vmatprep.subr.bf16.mxu0 %v3339
        %5167 = vmatpush1.bf16.msra.mxu0 %v3338
        %5168 = vmatprep.mubr.bf16.mxu0 %v1059
        %5169 = vmatmul.mubr.bf16.gmra.mrb[0].mxu0 %v1058
        %v5170 = vpop.f32.mrb[0].mxu0
        %v5171 = vadd.f32 %v5128, %v5170
        %v5172 = vpop.f32.mrb[0].mxu0
        %v5173 = vadd.f32 %v5130, %v5172
        %v5174 = vpop.f32.mrb[0].mxu0
        %v5175 = vadd.f32 %v5132, %v5174
        %v5176 = vpop.f32.mrb[0].mxu0
        %v5177 = vadd.f32 %v5134, %v5176
        %5178 = vdwg.mxu0
        %5179 = vmatprep.subr.bf16.mxu0 %v3343
        %5180 = vmatpush1.bf16.msra.mxu0 %v3342
        %5181 = vmatprep.subr.bf16.mxu0 %v3347
        %5182 = vmatpush1.bf16.msra.mxu0 %v3346
        %5183 = vmatprep.subr.bf16.mxu0 %v3351
        %5184 = vmatpush1.bf16.msra.mxu0 %v3350
        %5185 = vmatprep.subr.bf16.mxu0 %v3355
        %5186 = vmatpush1.bf16.msra.mxu0 %v3354
        %5187 = vmatprep.subr.bf16.mxu0 %v3359
        %5188 = vmatpush1.bf16.msra.mxu0 %v3358
        %5189 = vmatprep.subr.bf16.mxu0 %v3363
        %5190 = vmatpush1.bf16.msra.mxu0 %v3362
        %5191 = vmatprep.subr.bf16.mxu0 %v3367
        %5192 = vmatpush1.bf16.msra.mxu0 %v3366
        %5193 = vmatprep.subr.bf16.mxu0 %v3371
        %5194 = vmatpush1.bf16.msra.mxu0 %v3370
        %5195 = vmatprep.subr.bf16.mxu0 %v3375
        %5196 = vmatpush1.bf16.msra.mxu0 %v3374
        %5197 = vmatprep.subr.bf16.mxu0 %v3379
        %5198 = vmatpush1.bf16.msra.mxu0 %v3378
        %5199 = vmatprep.subr.bf16.mxu0 %v3383
        %5200 = vmatpush1.bf16.msra.mxu0 %v3382
        %5201 = vmatprep.subr.bf16.mxu0 %v3387
        %5202 = vmatpush1.bf16.msra.mxu0 %v3386
        %5203 = vmatprep.subr.bf16.mxu0 %v3391
        %5204 = vmatpush1.bf16.msra.mxu0 %v3390
        %5205 = vmatprep.subr.bf16.mxu0 %v3395
        %5206 = vmatpush1.bf16.msra.mxu0 %v3394
        %5207 = vmatprep.subr.bf16.mxu0 %v3399
        %5208 = vmatpush1.bf16.msra.mxu0 %v3398
        %5209 = vmatprep.subr.bf16.mxu0 %v3403
        %5210 = vmatpush1.bf16.msra.mxu0 %v3402
        %5211 = vmatprep.mubr.bf16.mxu0 %v1061
        %5212 = vmatmul.mubr.bf16.gmra.mrb[0].mxu0 %v1060
        %v5213 = vpop.f32.mrb[0].mxu0
        %v5214 = vadd.f32 %v5171, %v5213
        %v5215 = vpop.f32.mrb[0].mxu0
        %v5216 = vadd.f32 %v5173, %v5215
        %v5217 = vpop.f32.mrb[0].mxu0
        %v5218 = vadd.f32 %v5175, %v5217
        %v5219 = vpop.f32.mrb[0].mxu0
        %v5220 = vadd.f32 %v5177, %v5219
        %5221 = vdwg.mxu0
        %5222 = vmatprep.subr.bf16.mxu0 %v3407
        %5223 = vmatpush1.bf16.msra.mxu0 %v3406
        %5224 = vmatprep.subr.bf16.mxu0 %v3411
        %5225 = vmatpush1.bf16.msra.mxu0 %v3410
        %5226 = vmatprep.subr.bf16.mxu0 %v3415
        %5227 = vmatpush1.bf16.msra.mxu0 %v3414
        %5228 = vmatprep.subr.bf16.mxu0 %v3419
        %5229 = vmatpush1.bf16.msra.mxu0 %v3418
        %5230 = vmatprep.subr.bf16.mxu0 %v3423
        %5231 = vmatpush1.bf16.msra.mxu0 %v3422
        %5232 = vmatprep.subr.bf16.mxu0 %v3427
        %5233 = vmatpush1.bf16.msra.mxu0 %v3426
        %5234 = vmatprep.subr.bf16.mxu0 %v3431
        %5235 = vmatpush1.bf16.msra.mxu0 %v3430
        %5236 = vmatprep.subr.bf16.mxu0 %v3435
        %5237 = vmatpush1.bf16.msra.mxu0 %v3434
        %5238 = vmatprep.subr.bf16.mxu0 %v3439
        %5239 = vmatpush1.bf16.msra.mxu0 %v3438
        %5240 = vmatprep.subr.bf16.mxu0 %v3443
        %5241 = vmatpush1.bf16.msra.mxu0 %v3442
        %5242 = vmatprep.subr.bf16.mxu0 %v3447
        %5243 = vmatpush1.bf16.msra.mxu0 %v3446
        %5244 = vmatprep.subr.bf16.mxu0 %v3451
        %5245 = vmatpush1.bf16.msra.mxu0 %v3450
        %5246 = vmatprep.subr.bf16.mxu0 %v3455
        %5247 = vmatpush1.bf16.msra.mxu0 %v3454
        %5248 = vmatprep.subr.bf16.mxu0 %v3459
        %5249 = vmatpush1.bf16.msra.mxu0 %v3458
        %5250 = vmatprep.subr.bf16.mxu0 %v3463
        %5251 = vmatpush1.bf16.msra.mxu0 %v3462
        %5252 = vmatprep.subr.bf16.mxu0 %v3467
        %5253 = vmatpush1.bf16.msra.mxu0 %v3466
        %5254 = vmatprep.mubr.bf16.mxu0 %v1063
        %5255 = vmatmul.mubr.bf16.gmra.mrb[0].mxu0 %v1062
        %v5256 = vpop.f32.mrb[0].mxu0
        %v5257 = vadd.f32 %v5214, %v5256
        %v5258 = vpop.f32.mrb[0].mxu0
        %v5259 = vadd.f32 %v5216, %v5258
        %v5260 = vpop.f32.mrb[0].mxu0
        %v5261 = vadd.f32 %v5218, %v5260
        %v5262 = vpop.f32.mrb[0].mxu0
        %v5263 = vadd.f32 %v5220, %v5262
        %5264 = vdwg.mxu0
        %5265 = vmatprep.subr.bf16.mxu0 %v3471
        %5266 = vmatpush1.bf16.msra.mxu0 %v3470
        %5267 = vmatprep.subr.bf16.mxu0 %v3475
        %5268 = vmatpush1.bf16.msra.mxu0 %v3474
        %5269 = vmatprep.subr.bf16.mxu0 %v3479
        %5270 = vmatpush1.bf16.msra.mxu0 %v3478
        %5271 = vmatprep.subr.bf16.mxu0 %v3483
        %5272 = vmatpush1.bf16.msra.mxu0 %v3482
        %5273 = vmatprep.subr.bf16.mxu0 %v3487
        %5274 = vmatpush1.bf16.msra.mxu0 %v3486
        %5275 = vmatprep.subr.bf16.mxu0 %v3491
        %5276 = vmatpush1.bf16.msra.mxu0 %v3490
        %5277 = vmatprep.subr.bf16.mxu0 %v3495
        %5278 = vmatpush1.bf16.msra.mxu0 %v3494
        %5279 = vmatprep.subr.bf16.mxu0 %v3499
        %5280 = vmatpush1.bf16.msra.mxu0 %v3498
        %5281 = vmatprep.subr.bf16.mxu0 %v3503
        %5282 = vmatpush1.bf16.msra.mxu0 %v3502
        %5283 = vmatprep.subr.bf16.mxu0 %v3507
        %5284 = vmatpush1.bf16.msra.mxu0 %v3506
        %5285 = vmatprep.subr.bf16.mxu0 %v3511
        %5286 = vmatpush1.bf16.msra.mxu0 %v3510
        %5287 = vmatprep.subr.bf16.mxu0 %v3515
        %5288 = vmatpush1.bf16.msra.mxu0 %v3514
        %5289 = vmatprep.subr.bf16.mxu0 %v3519
        %5290 = vmatpush1.bf16.msra.mxu0 %v3518
        %5291 = vmatprep.subr.bf16.mxu0 %v3523
        %5292 = vmatpush1.bf16.msra.mxu0 %v3522
        %5293 = vmatprep.subr.bf16.mxu0 %v3527
        %5294 = vmatpush1.bf16.msra.mxu0 %v3526
        %5295 = vmatprep.subr.bf16.mxu0 %v3531
        %5296 = vmatpush1.bf16.msra.mxu0 %v3530
        %5297 = vmatprep.mubr.bf16.mxu0 %v1065
        %5298 = vmatmul.mubr.bf16.gmra.mrb[0].mxu0 %v1064
        %v5299 = vpop.f32.mrb[0].mxu0
        %v5300 = vadd.f32 %v5257, %v5299
        %v5301 = vpop.f32.mrb[0].mxu0
        %v5302 = vadd.f32 %v5259, %v5301
        %v5303 = vpop.f32.mrb[0].mxu0
        %v5304 = vadd.f32 %v5261, %v5303
        %v5305 = vpop.f32.mrb[0].mxu0
        %v5306 = vadd.f32 %v5263, %v5305
        %5307 = vdwg.mxu0
        %5308 = vmatprep.subr.bf16.mxu0 %v3535
        %5309 = vmatpush1.bf16.msra.mxu0 %v3534
        %5310 = vmatprep.subr.bf16.mxu0 %v3539
        %5311 = vmatpush1.bf16.msra.mxu0 %v3538
        %5312 = vmatprep.subr.bf16.mxu0 %v3543
        %5313 = vmatpush1.bf16.msra.mxu0 %v3542
        %5314 = vmatprep.subr.bf16.mxu0 %v3547
        %5315 = vmatpush1.bf16.msra.mxu0 %v3546
        %5316 = vmatprep.subr.bf16.mxu0 %v3551
        %5317 = vmatpush1.bf16.msra.mxu0 %v3550
        %5318 = vmatprep.subr.bf16.mxu0 %v3555
        %5319 = vmatpush1.bf16.msra.mxu0 %v3554
        %5320 = vmatprep.subr.bf16.mxu0 %v3559
        %5321 = vmatpush1.bf16.msra.mxu0 %v3558
        %5322 = vmatprep.subr.bf16.mxu0 %v3563
        %5323 = vmatpush1.bf16.msra.mxu0 %v3562
        %5324 = vmatprep.subr.bf16.mxu0 %v3567
        %5325 = vmatpush1.bf16.msra.mxu0 %v3566
        %5326 = vmatprep.subr.bf16.mxu0 %v3571
        %5327 = vmatpush1.bf16.msra.mxu0 %v3570
        %5328 = vmatprep.subr.bf16.mxu0 %v3575
        %5329 = vmatpush1.bf16.msra.mxu0 %v3574
        %5330 = vmatprep.subr.bf16.mxu0 %v3579
        %5331 = vmatpush1.bf16.msra.mxu0 %v3578
        %5332 = vmatprep.subr.bf16.mxu0 %v3583
        %5333 = vmatpush1.bf16.msra.mxu0 %v3582
        %5334 = vmatprep.subr.bf16.mxu0 %v3587
        %5335 = vmatpush1.bf16.msra.mxu0 %v3586
        %5336 = vmatprep.subr.bf16.mxu0 %v3591
        %5337 = vmatpush1.bf16.msra.mxu0 %v3590
        %5338 = vmatprep.subr.bf16.mxu0 %v3595
        %5339 = vmatpush1.bf16.msra.mxu0 %v3594
        %5340 = vmatprep.mubr.bf16.mxu0 %v1067
        %5341 = vmatmul.mubr.bf16.gmra.mrb[0].mxu0 %v1066
        %v5342 = vpop.f32.mrb[0].mxu0
        %v5343 = vadd.f32 %v5300, %v5342
        %v5344 = vpop.f32.mrb[0].mxu0
        %v5345 = vadd.f32 %v5302, %v5344
        %v5346 = vpop.f32.mrb[0].mxu0
        %v5347 = vadd.f32 %v5304, %v5346
        %v5348 = vpop.f32.mrb[0].mxu0
        %v5349 = vadd.f32 %v5306, %v5348
        %5350 = vdwg.mxu0
        %5351 = vmatprep.subr.bf16.mxu0 %v3599
        %5352 = vmatpush1.bf16.msra.mxu0 %v3598
        %5353 = vmatprep.subr.bf16.mxu0 %v3603
        %5354 = vmatpush1.bf16.msra.mxu0 %v3602
        %5355 = vmatprep.subr.bf16.mxu0 %v3607
        %5356 = vmatpush1.bf16.msra.mxu0 %v3606
        %5357 = vmatprep.subr.bf16.mxu0 %v3611
        %5358 = vmatpush1.bf16.msra.mxu0 %v3610
        %5359 = vmatprep.subr.bf16.mxu0 %v3615
        %5360 = vmatpush1.bf16.msra.mxu0 %v3614
        %5361 = vmatprep.subr.bf16.mxu0 %v3619
        %5362 = vmatpush1.bf16.msra.mxu0 %v3618
        %5363 = vmatprep.subr.bf16.mxu0 %v3623
        %5364 = vmatpush1.bf16.msra.mxu0 %v3622
        %5365 = vmatprep.subr.bf16.mxu0 %v3627
        %5366 = vmatpush1.bf16.msra.mxu0 %v3626
        %5367 = vmatprep.subr.bf16.mxu0 %v3631
        %5368 = vmatpush1.bf16.msra.mxu0 %v3630
        %5369 = vmatprep.subr.bf16.mxu0 %v3635
        %5370 = vmatpush1.bf16.msra.mxu0 %v3634
        %5371 = vmatprep.subr.bf16.mxu0 %v3639
        %5372 = vmatpush1.bf16.msra.mxu0 %v3638
        %5373 = vmatprep.subr.bf16.mxu0 %v3643
        %5374 = vmatpush1.bf16.msra.mxu0 %v3642
        %5375 = vmatprep.subr.bf16.mxu0 %v3647
        %5376 = vmatpush1.bf16.msra.mxu0 %v3646
        %5377 = vmatprep.subr.bf16.mxu0 %v3651
        %5378 = vmatpush1.bf16.msra.mxu0 %v3650
        %5379 = vmatprep.subr.bf16.mxu0 %v3655
        %5380 = vmatpush1.bf16.msra.mxu0 %v3654
        %5381 = vmatprep.subr.bf16.mxu0 %v3659
        %5382 = vmatpush1.bf16.msra.mxu0 %v3658
        %5383 = vmatprep.mubr.bf16.mxu0 %v1069
        %5384 = vmatmul.mubr.bf16.gmra.mrb[0].mxu0 %v1068
        %v5385 = vpop.f32.mrb[0].mxu0
        %v5386 = vadd.f32 %v5343, %v5385
        %v5387 = vpop.f32.mrb[0].mxu0
        %v5388 = vadd.f32 %v5345, %v5387
        %v5389 = vpop.f32.mrb[0].mxu0
        %v5390 = vadd.f32 %v5347, %v5389
        %v5391 = vpop.f32.mrb[0].mxu0
        %v5392 = vadd.f32 %v5349, %v5391
        %5393 = vdwg.mxu0
        %5394 = vmatprep.subr.bf16.mxu0 %v3663
        %5395 = vmatpush1.bf16.msra.mxu0 %v3662
        %5396 = vmatprep.subr.bf16.mxu0 %v3667
        %5397 = vmatpush1.bf16.msra.mxu0 %v3666
        %5398 = vmatprep.subr.bf16.mxu0 %v3671
        %5399 = vmatpush1.bf16.msra.mxu0 %v3670
        %5400 = vmatprep.subr.bf16.mxu0 %v3675
        %5401 = vmatpush1.bf16.msra.mxu0 %v3674
        %5402 = vmatprep.subr.bf16.mxu0 %v3679
        %5403 = vmatpush1.bf16.msra.mxu0 %v3678
        %5404 = vmatprep.subr.bf16.mxu0 %v3683
        %5405 = vmatpush1.bf16.msra.mxu0 %v3682
        %5406 = vmatprep.subr.bf16.mxu0 %v3687
        %5407 = vmatpush1.bf16.msra.mxu0 %v3686
        %5408 = vmatprep.subr.bf16.mxu0 %v3691
        %5409 = vmatpush1.bf16.msra.mxu0 %v3690
        %5410 = vmatprep.subr.bf16.mxu0 %v3695
        %5411 = vmatpush1.bf16.msra.mxu0 %v3694
        %5412 = vmatprep.subr.bf16.mxu0 %v3699
        %5413 = vmatpush1.bf16.msra.mxu0 %v3698
        %5414 = vmatprep.subr.bf16.mxu0 %v3703
        %5415 = vmatpush1.bf16.msra.mxu0 %v3702
        %5416 = vmatprep.subr.bf16.mxu0 %v3707
        %5417 = vmatpush1.bf16.msra.mxu0 %v3706
        %5418 = vmatprep.subr.bf16.mxu0 %v3711
        %5419 = vmatpush1.bf16.msra.mxu0 %v3710
        %5420 = vmatprep.subr.bf16.mxu0 %v3715
        %5421 = vmatpush1.bf16.msra.mxu0 %v3714
        %5422 = vmatprep.subr.bf16.mxu0 %v3719
        %5423 = vmatpush1.bf16.msra.mxu0 %v3718
        %5424 = vmatprep.subr.bf16.mxu0 %v3723
        %5425 = vmatpush1.bf16.msra.mxu0 %v3722
        %5426 = vmatprep.mubr.bf16.mxu0 %v1071
        %5427 = vmatmul.mubr.bf16.gmra.mrb[0].mxu0 %v1070
        %v5428 = vpop.f32.mrb[0].mxu0
        %v5429 = vadd.f32 %v5386, %v5428
        %v5430 = vpop.f32.mrb[0].mxu0
        %v5431 = vadd.f32 %v5388, %v5430
        %v5432 = vpop.f32.mrb[0].mxu0
        %v5433 = vadd.f32 %v5390, %v5432
        %v5434 = vpop.f32.mrb[0].mxu0
        %v5435 = vadd.f32 %v5392, %v5434
        %5436 = vdwg.mxu0
        %5437 = vmatprep.subr.bf16.mxu0 %v3727
        %5438 = vmatpush1.bf16.msra.mxu0 %v3726
        %5439 = vmatprep.subr.bf16.mxu0 %v3731
        %5440 = vmatpush1.bf16.msra.mxu0 %v3730
        %5441 = vmatprep.subr.bf16.mxu0 %v3735
        %5442 = vmatpush1.bf16.msra.mxu0 %v3734
        %5443 = vmatprep.subr.bf16.mxu0 %v3739
        %5444 = vmatpush1.bf16.msra.mxu0 %v3738
        %5445 = vmatprep.subr.bf16.mxu0 %v3743
        %5446 = vmatpush1.bf16.msra.mxu0 %v3742
        %5447 = vmatprep.subr.bf16.mxu0 %v3747
        %5448 = vmatpush1.bf16.msra.mxu0 %v3746
        %5449 = vmatprep.subr.bf16.mxu0 %v3751
        %5450 = vmatpush1.bf16.msra.mxu0 %v3750
        %5451 = vmatprep.subr.bf16.mxu0 %v3755
        %5452 = vmatpush1.bf16.msra.mxu0 %v3754
        %5453 = vmatprep.subr.bf16.mxu0 %v3759
        %5454 = vmatpush1.bf16.msra.mxu0 %v3758
        %5455 = vmatprep.subr.bf16.mxu0 %v3763
        %5456 = vmatpush1.bf16.msra.mxu0 %v3762
        %5457 = vmatprep.subr.bf16.mxu0 %v3767
        %5458 = vmatpush1.bf16.msra.mxu0 %v3766
        %5459 = vmatprep.subr.bf16.mxu0 %v3771
        %5460 = vmatpush1.bf16.msra.mxu0 %v3770
        %5461 = vmatprep.subr.bf16.mxu0 %v3775
        %5462 = vmatpush1.bf16.msra.mxu0 %v3774
        %5463 = vmatprep.subr.bf16.mxu0 %v3779
        %5464 = vmatpush1.bf16.msra.mxu0 %v3778
        %5465 = vmatprep.subr.bf16.mxu0 %v3783
        %5466 = vmatpush1.bf16.msra.mxu0 %v3782
        %5467 = vmatprep.subr.bf16.mxu0 %v3787
        %5468 = vmatpush1.bf16.msra.mxu0 %v3786
        %5469 = vmatprep.mubr.bf16.mxu0 %v1073
        %5470 = vmatmul.mubr.bf16.gmra.mrb[0].mxu0 %v1072
        %v5471 = vpop.f32.mrb[0].mxu0
        %v5472 = vadd.f32 %v5429, %v5471
        %v5473 = vpop.f32.mrb[0].mxu0
        %v5474 = vadd.f32 %v5431, %v5473
        %v5475 = vpop.f32.mrb[0].mxu0
        %v5476 = vadd.f32 %v5433, %v5475
        %v5477 = vpop.f32.mrb[0].mxu0
        %v5478 = vadd.f32 %v5435, %v5477
        %5479 = vdwg.mxu0
        %5480 = vmatprep.subr.bf16.mxu0 %v3791
        %5481 = vmatpush1.bf16.msra.mxu0 %v3790
        %5482 = vmatprep.subr.bf16.mxu0 %v3795
        %5483 = vmatpush1.bf16.msra.mxu0 %v3794
        %5484 = vmatprep.subr.bf16.mxu0 %v3799
        %5485 = vmatpush1.bf16.msra.mxu0 %v3798
        %5486 = vmatprep.subr.bf16.mxu0 %v3803
        %5487 = vmatpush1.bf16.msra.mxu0 %v3802
        %5488 = vmatprep.subr.bf16.mxu0 %v3807
        %5489 = vmatpush1.bf16.msra.mxu0 %v3806
        %5490 = vmatprep.subr.bf16.mxu0 %v3811
        %5491 = vmatpush1.bf16.msra.mxu0 %v3810
        %5492 = vmatprep.subr.bf16.mxu0 %v3815
        %5493 = vmatpush1.bf16.msra.mxu0 %v3814
        %5494 = vmatprep.subr.bf16.mxu0 %v3819
        %5495 = vmatpush1.bf16.msra.mxu0 %v3818
        %5496 = vmatprep.subr.bf16.mxu0 %v3823
        %5497 = vmatpush1.bf16.msra.mxu0 %v3822
        %5498 = vmatprep.subr.bf16.mxu0 %v3827
        %5499 = vmatpush1.bf16.msra.mxu0 %v3826
        %5500 = vmatprep.subr.bf16.mxu0 %v3831
        %5501 = vmatpush1.bf16.msra.mxu0 %v3830
        %5502 = vmatprep.subr.bf16.mxu0 %v3835
        %5503 = vmatpush1.bf16.msra.mxu0 %v3834
        %5504 = vmatprep.subr.bf16.mxu0 %v3839
        %5505 = vmatpush1.bf16.msra.mxu0 %v3838
        %5506 = vmatprep.subr.bf16.mxu0 %v3843
        %5507 = vmatpush1.bf16.msra.mxu0 %v3842
        %5508 = vmatprep.subr.bf16.mxu0 %v3847
        %5509 = vmatpush1.bf16.msra.mxu0 %v3846
        %5510 = vmatprep.subr.bf16.mxu0 %v3851
        %5511 = vmatpush1.bf16.msra.mxu0 %v3850
        %5512 = vmatprep.mubr.bf16.mxu0 %v1075
        %5513 = vmatmul.mubr.bf16.gmra.mrb[0].mxu0 %v1074
        %v5514 = vpop.f32.mrb[0].mxu0
        %v5515 = vadd.f32 %v5472, %v5514
        %v5516 = vpop.f32.mrb[0].mxu0
        %v5517 = vadd.f32 %v5474, %v5516
        %v5518 = vpop.f32.mrb[0].mxu0
        %v5519 = vadd.f32 %v5476, %v5518
        %v5520 = vpop.f32.mrb[0].mxu0
        %v5521 = vadd.f32 %v5478, %v5520
        %5522 = vdwg.mxu0
        %5523 = vmatprep.subr.bf16.mxu0 %v3855
        %5524 = vmatpush1.bf16.msra.mxu0 %v3854
        %5525 = vmatprep.subr.bf16.mxu0 %v3859
        %5526 = vmatpush1.bf16.msra.mxu0 %v3858
        %5527 = vmatprep.subr.bf16.mxu0 %v3863
        %5528 = vmatpush1.bf16.msra.mxu0 %v3862
        %5529 = vmatprep.subr.bf16.mxu0 %v3867
        %5530 = vmatpush1.bf16.msra.mxu0 %v3866
        %5531 = vmatprep.subr.bf16.mxu0 %v3871
        %5532 = vmatpush1.bf16.msra.mxu0 %v3870
        %5533 = vmatprep.subr.bf16.mxu0 %v3875
        %5534 = vmatpush1.bf16.msra.mxu0 %v3874
        %5535 = vmatprep.subr.bf16.mxu0 %v3879
        %5536 = vmatpush1.bf16.msra.mxu0 %v3878
        %5537 = vmatprep.subr.bf16.mxu0 %v3883
        %5538 = vmatpush1.bf16.msra.mxu0 %v3882
        %5539 = vmatprep.subr.bf16.mxu0 %v3887
        %5540 = vmatpush1.bf16.msra.mxu0 %v3886
        %5541 = vmatprep.subr.bf16.mxu0 %v3891
        %5542 = vmatpush1.bf16.msra.mxu0 %v3890
        %5543 = vmatprep.subr.bf16.mxu0 %v3895
        %5544 = vmatpush1.bf16.msra.mxu0 %v3894
        %5545 = vmatprep.subr.bf16.mxu0 %v3899
        %5546 = vmatpush1.bf16.msra.mxu0 %v3898
        %5547 = vmatprep.subr.bf16.mxu0 %v3903
        %5548 = vmatpush1.bf16.msra.mxu0 %v3902
        %5549 = vmatprep.subr.bf16.mxu0 %v3907
        %5550 = vmatpush1.bf16.msra.mxu0 %v3906
        %5551 = vmatprep.subr.bf16.mxu0 %v3911
        %5552 = vmatpush1.bf16.msra.mxu0 %v3910
        %5553 = vmatprep.subr.bf16.mxu0 %v3915
        %5554 = vmatpush1.bf16.msra.mxu0 %v3914
        %5555 = vmatprep.mubr.bf16.mxu0 %v1077
        %5556 = vmatmul.mubr.bf16.gmra.mrb[0].mxu0 %v1076
        %v5557 = vpop.f32.mrb[0].mxu0
        %v5558 = vadd.f32 %v5515, %v5557
        %v5559 = vpop.f32.mrb[0].mxu0
        %v5560 = vadd.f32 %v5517, %v5559
        %v5561 = vpop.f32.mrb[0].mxu0
        %v5562 = vadd.f32 %v5519, %v5561
        %v5563 = vpop.f32.mrb[0].mxu0
        %v5564 = vadd.f32 %v5521, %v5563
        %5565 = vdwg.mxu0
        %v5566 = vmax.f32 %v5085, 0.0
        %v5567 = vmax.f32 %v5087, 0.0
        %v5568 = vmax.f32 %v5558, 0.0
        %v5569 = vmax.f32 %v5560, 0.0
        %v5570 = vmax.f32 %v5089, 0.0
        %v5571 = vmax.f32 %v5091, 0.0
        %v5572 = vmax.f32 %v5562, 0.0
        %v5573 = vmax.f32 %v5564, 0.0
        %v5574 = vpack.c.bf16 %v5570, %v5566
        %v5575 = vpack.c.bf16 %v5571, %v5567
        %v5576 = vpack.c.bf16 %v5572, %v5568
        %v5577 = vpack.c.bf16 %v5573, %v5569
        %v5582 = vunpack.c.l.b16 %v5574
        %v5583 = vunpack.c.l.b16 %v5575
        %v5584 = vunpack.c.l.b16 %v5576
        %v5585 = vunpack.c.l.b16 %v5577
        %v5586 = vunpack.c.h.b16 %v5574
        %v5587 = vunpack.c.h.b16 %v5575
        %v5588 = vunpack.c.h.b16 %v5576
        %v5589 = vunpack.c.h.b16 %v5577
        %v5590 = vpack.c.b16 %v5583, %v5582
        %v5591 = vpack.c.b16 %v5585, %v5584
        %v5592 = vpack.c.b16 %v5587, %v5586
        %v5593 = vpack.c.b16 %v5589, %v5588
        %5598 = vst [vmem:[%s238] sm:$0xff] %v5590
        %5599 = vst [vmem:[%s238 + $0x8] sm:$0xff] %v5591
        %5600 = vst [vmem:[%s238 + $0x10] sm:$0xff] %v5592
        %5601 = vst [vmem:[%s238 + $0x18] sm:$0xff] %v5593
        %s5602 = sand.u32 %s102, 1
        %s5603 = scalar_lea.sflag [#allocation4], %s5602
        %s5604 = sand.u32 %s102, 1
        %s5605 = smul.addr %s5604, 32
        %s5606 = scalar_lea.vmem [#allocation8], %s5605
        // Predicated region
        $region45: #{tpu_custom_call.1} parent=31 // pred_check
          %p5607 = pneg %p112
        $region46: #{tpu_custom_call.1} parent=31 // pred_check_branch
          %5609 = sbr.rel (%p5607) target = $region48
        $region47: #{tpu_custom_call.1} parent=31 // pred_region
          %s5610 = smul.u32 4, %s21
          %s5612 = ssub.s32 512, 512
          %5613 = vsyncadd %s5603, %s5612
          %s5614 = smul.addr %s5610, 64
          %s5615 = scalar_lea.hbm %s3, %s5614
          %s5616 = sshll.u32 %s5606, 4
          %s5617 = int_to_ptr.vmem [resolvable:$true] %s5616
          %5622 = dma.vmem_to_hbm [thread:$0]  %s5617, 512, %s5615, %s5603, 256, 2560, 16
        $region48: #{tpu_custom_call.1} parent=31 // pred_fallthru
          _
      $region32: #{tpu_custom_call.1} parent=5 // pred_fallthru
        _
      %p5623 = scmp.le.s32.totalorder 2, %s16
      // Predicated region
      $region49: #{tpu_custom_call.1} parent=5 // pred_check
        %p5624 = pneg %p5623
      $region50: #{tpu_custom_call.1} parent=5 // pred_check_branch
        %5626 = sbr.rel (%p5624) target = $region52
      $region51: #{tpu_custom_call.1} parent=5 // pred_region
        %s5627 = ssub.s32 %s16, 2
        // Predicated region
        $region53: #{tpu_custom_call.1} parent=51 // pred_check
          %p5628 = pneg %p118
        $region54: #{tpu_custom_call.1} parent=51 // pred_check_branch
          %5630 = sbr.rel (%p5628) target = $region56
        $region55: #{tpu_custom_call.1} parent=51 // pred_region
          %s5631 = sand.u32 %s103, 1
          %s5632 = scalar_lea.sflag [#allocation4], %s5631
          %s5633 = sand.u32 %s103, 1
          %s5634 = smul.addr %s5633, 32
          %s5635 = scalar_lea.vmem [#allocation8], %s5634
          %5636 = dma.done %s5632, 512
        $region56: #{tpu_custom_call.1} parent=51 // pred_fallthru
          _
      $region52: #{tpu_custom_call.1} parent=5 // pred_fallthru
        _
    $region6: #{tpu_custom_call.1} parent=1 // loop_footer
      %s20 = sadd.s32 1, %s16
    $region7: #{tpu_custom_call.1} parent=1 // loop_footer_branch
      %15 = sbr.rel target = $region3
    $region8: #{tpu_custom_call.1} parent=1 // loop_exit
      _
    %5637 = vsyncpa [#allocation3], 1
    %s5638 = scalar_lea.sflag [#allocation3], 1
    %5639 = vsyncpa %s5638, 1
    %5640 = vsyncpa [#allocation6], 1
    %s5641 = scalar_lea.sflag [#allocation6], 1
    %5642 = vsyncpa %s5641, 1
    %5643 = vsyncpa [#allocation4], 1
    %s5644 = scalar_lea.sflag [#allocation4], 1
    %5645 = vsyncpa %s5644, 1

</llo_original>
